<compile_context>
chip_gen: v7x
topology: tpu7x:2x2x1
jax: 0.10.0
libtpu: 0.0.40
codegen_flags: <defaults>
</compile_context>

<pallas_src>
import functools

import jax
import jax.numpy as jnp
from jax.experimental import pallas as pl
from jax.experimental.pallas import tpu as pltpu


# ----------------------------------------------------------------------------
# Fused kernel: 2 LSTM layers + fc1 -> fc2 -> softmax head.
# ----------------------------------------------------------------------------
def _fused_lstm_head_kernel(
        x_ref,        # (T*Bp, Dp)  time-major flattened, zero-padded input
        wih0_ref,     # (Dp, 4H)
        whh0_ref,     # (H, 4H)
        b0_ref,       # (1, 4H)     combined b_ih + b_hh, layer 0
        wih1_ref,     # (H, 4H)
        whh1_ref,     # (H, 4H)
        b1_ref,       # (1, 4H)     combined bias, layer 1
        h0_ref,       # (2, Bp, H)  initial hidden state
        c0_ref,       # (2, Bp, H)  initial cell state
        w1_ref,       # (H, H)      fc1
        bfc1_ref,     # (1, H)
        w2_ref,       # (H, C)      fc2
        bfc2_ref,     # (1, C)
        probs_ref,    # (Bp, C)     softmax output
        hn_ref,       # (2, Bp, H)  final hidden states
        cn_ref,       # (2, Bp, H)  final cell states
        gin_sc,       # (T*Bp, 4H)  VMEM scratch: batched input projections
        y0_sc):       # (T*Bp, H)   VMEM scratch: layer-0 outputs per step
    Bp = probs_ref.shape[0]
    H = hn_ref.shape[2]
    T = x_ref.shape[0] // Bp

    def lstm_cell(gates, c):
        # gate order [i, f, g, o] (PyTorch convention)
        i_g = jax.nn.sigmoid(gates[:, 0 * H:1 * H])
        f_g = jax.nn.sigmoid(gates[:, 1 * H:2 * H])
        g_g = jnp.tanh(gates[:, 2 * H:3 * H])
        o_g = jax.nn.sigmoid(gates[:, 3 * H:4 * H])
        c_new = f_g * c + i_g * g_g
        h_new = o_g * jnp.tanh(c_new)
        return h_new, c_new

    # ---- Layer 0 -----------------------------------------------------------
    # Non-recurrent input projection for ALL timesteps in one batched matmul,
    # bias folded in; lives entirely in VMEM.
    gin_sc[...] = (jnp.dot(x_ref[...], wih0_ref[...],
                           preferred_element_type=jnp.float32)
                   + b0_ref[...])
    whh0 = whh0_ref[...]

    def step0(t, carry):
        h, c = carry
        row = pl.multiple_of(t * Bp, Bp)
        gates = gin_sc[pl.ds(row, Bp), :] + jnp.dot(
            h, whh0, preferred_element_type=jnp.float32)
        h_new, c_new = lstm_cell(gates, c)
        y0_sc[pl.ds(row, Bp), :] = h_new       # stays in VMEM, feeds layer 1
        return h_new, c_new

    h0_fin, c0_fin = jax.lax.fori_loop(
        0, T, step0, (h0_ref[0], c0_ref[0]), unroll=True)

    # ---- Layer 1 -----------------------------------------------------------
    # Batched input projection of layer-0 outputs (also non-recurrent).
    gin_sc[...] = (jnp.dot(y0_sc[...], wih1_ref[...],
                           preferred_element_type=jnp.float32)
                   + b1_ref[...])
    whh1 = whh1_ref[...]

    def step1(t, carry):
        h, c = carry
        row = pl.multiple_of(t * Bp, Bp)
        gates = gin_sc[pl.ds(row, Bp), :] + jnp.dot(
            h, whh1, preferred_element_type=jnp.float32)
        return lstm_cell(gates, c)

    h1_fin, c1_fin = jax.lax.fori_loop(
        0, T, step1, (h0_ref[1], c0_ref[1]), unroll=True)

    # ---- Head: fc1 -> fc2 -> softmax (self.act never used in forward) ------
    y1 = jnp.dot(h1_fin, w1_ref[...],
                 preferred_element_type=jnp.float32) + bfc1_ref[...]
    y2 = jnp.dot(y1, w2_ref[...],
                 preferred_element_type=jnp.float32) + bfc2_ref[...]
    m = jnp.max(y2, axis=-1, keepdims=True)
    e = jnp.exp(y2 - m)
    s = jnp.sum(e, axis=-1, keepdims=True)
    probs_ref[...] = (e * pl.reciprocal(s, approx=True)).astype(probs_ref.dtype)

    # ---- Final states ------------------------------------------------------
    hn_ref[0] = h0_fin.astype(hn_ref.dtype)
    hn_ref[1] = h1_fin.astype(hn_ref.dtype)
    cn_ref[0] = c0_fin.astype(cn_ref.dtype)
    cn_ref[1] = c1_fin.astype(cn_ref.dtype)


def _round_up(x, m):
    return ((x + m - 1) // m) * m


# ----------------------------------------------------------------------------
# Wrapper: pad to tile-friendly shapes, call the fused kernel, slice results.
# ----------------------------------------------------------------------------
@jax.jit
def my_lstm_forward(x, hidden, params):
    """x: (B, T, 167) batch-first; hidden: (h0, c0) each (num_layers, B, H)."""
    h0_all, c0_all = hidden
    B, T, D = x.shape
    L, _, H = h0_all.shape
    assert L == 2, "kernel is specialized for num_layers=2 (module default)"
    C = params["w2"].shape[-1]

    Bp = _round_up(max(B, 8), 8)     # sublane multiple
    Dp = _round_up(D, 128)           # lane multiple (167 -> 256)

    # Time-major, zero-pad batch and feature dims, flatten to (T*Bp, Dp).
    x_tm = jnp.transpose(x, (1, 0, 2))
    x_tm = jnp.pad(x_tm, ((0, 0), (0, Bp - B), (0, Dp - D)))
    x2d = x_tm.reshape(T * Bp, Dp)

    wih0 = jnp.pad(params["lstm"][0]["wih"], ((0, Dp - D), (0, 0)))
    whh0 = params["lstm"][0]["whh"]
    b0 = params["lstm"][0]["b"]
    wih1 = params["lstm"][1]["wih"]
    whh1 = params["lstm"][1]["whh"]
    b1 = params["lstm"][1]["b"]

    h0_p = jnp.pad(h0_all, ((0, 0), (0, Bp - B), (0, 0)))
    c0_p = jnp.pad(c0_all, ((0, 0), (0, Bp - B), (0, 0)))

    full2d = lambda shp: pl.BlockSpec(shp, lambda i: (0, 0))
    full3d = lambda shp: pl.BlockSpec(shp, lambda i: (0, 0, 0))

    grid_spec = pltpu.PrefetchScalarGridSpec(
        num_scalar_prefetch=0,
        grid=(1,),
        in_specs=[
            full2d((T * Bp, Dp)),      # x
            full2d((Dp, 4 * H)),       # W_ih layer 0
            full2d((H, 4 * H)),        # W_hh layer 0
            full2d((1, 4 * H)),        # bias layer 0
            full2d((H, 4 * H)),        # W_ih layer 1
            full2d((H, 4 * H)),        # W_hh layer 1
            full2d((1, 4 * H)),        # bias layer 1
            full3d((L, Bp, H)),        # h0
            full3d((L, Bp, H)),        # c0
            full2d((H, H)),            # fc1 weight
            full2d((1, H)),            # fc1 bias
            full2d((H, C)),            # fc2 weight
            full2d((1, C)),            # fc2 bias
        ],
        out_specs=[
            full2d((Bp, C)),           # softmax probs
            full3d((L, Bp, H)),        # h_n
            full3d((L, Bp, H)),        # c_n
        ],
        scratch_shapes=[
            pltpu.VMEM((T * Bp, 4 * H), jnp.float32),   # batched gate inputs
            pltpu.VMEM((T * Bp, H), jnp.float32),       # layer-0 outputs
        ],
    )

    probs_p, hn_p, cn_p = pl.pallas_call(
        _fused_lstm_head_kernel,
        grid_spec=grid_spec,
        out_shape=(
            jax.ShapeDtypeStruct((Bp, C), x.dtype),
            jax.ShapeDtypeStruct((L, Bp, H), x.dtype),
            jax.ShapeDtypeStruct((L, Bp, H), x.dtype),
        ),
        compiler_params=pltpu.CompilerParams(
            dimension_semantics=("arbitrary",)),   # recurrence -> sequential
    )(x2d, wih0, whh0, b0, wih1, whh1, b1, h0_p, c0_p,
      params["w1"], params["b1"], params["w2"], params["b2"])

    # Strip the batch padding.
    return probs_p[:B], (hn_p[:, :B, :], cn_p[:, :B, :])


# ----------------------------------------------------------------------------
# Pure-JAX reference for verification.
# ----------------------------------------------------------------------------
def reference_forward(x, hidden, params):
    h0_all, c0_all = hidden
    B, T, _ = x.shape
    cur = x
    h_fin, c_fin = [], []
    for layer, p in enumerate(params["lstm"]):
        h = h0_all[layer]
        c = c0_all[layer]
        H = h.shape[-1]
        ys = []
        for t in range(T):
            gates = cur[:, t, :] @ p["wih"] + h @ p["whh"] + p["b"]
            i_g = jax.nn.sigmoid(gates[:, 0 * H:1 * H])
            f_g = jax.nn.sigmoid(gates[:, 1 * H:2 * H])
            g_g = jnp.tanh(gates[:, 2 * H:3 * H])
            o_g = jax.nn.sigmoid(gates[:, 3 * H:4 * H])
            c = f_g * c + i_g * g_g
            h = o_g * jnp.tanh(c)
            ys.append(h)
        cur = jnp.stack(ys, axis=1)
        h_fin.append(h)
        c_fin.append(c)
    y = cur[:, -1, :]
    y = y @ params["w1"] + params["b1"]
    y = y @ params["w2"] + params["b2"]
    y = jax.nn.softmax(y, axis=1)
    return y, (jnp.stack(h_fin, 0), jnp.stack(c_fin, 0))


# ----------------------------------------------------------------------------
# Deterministic parameter construction (PyTorch-style uniform(-1/sqrt(H), 1/sqrt(H))).
# ----------------------------------------------------------------------------
def init_params(key, input_size, hidden, num_layers, num_classes=2):
    k = 1.0 / jnp.sqrt(hidden)
    params = {"lstm": []}
    keys = jax.random.split(key, 4 * num_layers + 4)
    ki = 0
    for layer in range(num_layers):
        d_in = input_size if layer == 0 else hidden
        wih = jax.random.uniform(keys[ki], (d_in, 4 * hidden), jnp.float32, -k, k); ki += 1
        whh = jax.random.uniform(keys[ki], (hidden, 4 * hidden), jnp.float32, -k, k); ki += 1
        bih = jax.random.uniform(keys[ki], (4 * hidden,), jnp.float32, -k, k); ki += 1
        bhh = jax.random.uniform(keys[ki], (4 * hidden,), jnp.float32, -k, k); ki += 1
        params["lstm"].append({"wih": wih, "whh": whh,
                               "b": (bih + bhh).reshape(1, 4 * hidden)})
    params["w1"] = jax.random.uniform(keys[ki], (hidden, hidden), jnp.float32, -k, k); ki += 1
    params["b1"] = jax.random.uniform(keys[ki], (1, hidden), jnp.float32, -k, k); ki += 1
    params["w2"] = jax.random.uniform(keys[ki], (hidden, num_classes), jnp.float32, -k, k); ki += 1
    params["b2"] = jax.random.uniform(keys[ki], (1, num_classes), jnp.float32, -k, k); ki += 1
    return params


if __name__ == "__main__":
    B, T, D = 2, 8, 167          # input feature dim 167 is fixed by the module
    H, NUM_LAYERS = 128, 2       # small hidden size for the example

    key = jax.random.PRNGKey(0)
    kx, kp = jax.random.split(key)
    x = jax.random.normal(kx, (B, T, D), jnp.float32)
    params = init_params(kp, D, H, NUM_LAYERS)

    # init_hidden: zeros of shape (num_layers, B, H)
    h0 = jnp.zeros((NUM_LAYERS, B, H), jnp.float32)
    c0 = jnp.zeros((NUM_LAYERS, B, H), jnp.float32)

    y, (h_n, c_n) = my_lstm_forward(x, (h0, c0), params)
    jax.block_until_ready((y, h_n, c_n))

    # Verify against a pure-JAX reference. Probabilities use a slightly looser
    # tolerance because the softmax denominator uses the EUP approximate
    # reciprocal (pl.reciprocal(approx=True)).
    y_ref, (h_ref, c_ref) = reference_forward(x, (h0, c0), params)
    assert jnp.allclose(y, y_ref, atol=1e-3), "output probs mismatch"
    assert jnp.allclose(h_n, h_ref, atol=1e-5), "h_n mismatch"
    assert jnp.allclose(c_n, c_ref, atol=1e-5), "c_n mismatch"
    assert y.shape == (B, 2) and h_n.shape == (NUM_LAYERS, B, H)

    print("KERNEL_OK")
</pallas_src>

<mosaic_0001>
module attributes {stable_mosaic.version = 11 : i64} {
  func.func @_fused_lstm_head_kernel(%arg0: i32, %arg1: memref<64x256xf32, #tpu.memory_space<vmem>>, %arg2: memref<256x512xf32, #tpu.memory_space<vmem>>, %arg3: memref<128x512xf32, #tpu.memory_space<vmem>>, %arg4: memref<1x512xf32, #tpu.memory_space<vmem>>, %arg5: memref<128x512xf32, #tpu.memory_space<vmem>>, %arg6: memref<128x512xf32, #tpu.memory_space<vmem>>, %arg7: memref<1x512xf32, #tpu.memory_space<vmem>>, %arg8: memref<2x8x128xf32, #tpu.memory_space<vmem>>, %arg9: memref<2x8x128xf32, #tpu.memory_space<vmem>>, %arg10: memref<128x128xf32, #tpu.memory_space<vmem>>, %arg11: memref<1x128xf32, #tpu.memory_space<vmem>>, %arg12: memref<128x2xf32, #tpu.memory_space<vmem>>, %arg13: memref<1x2xf32, #tpu.memory_space<vmem>>, %arg14: memref<8x2xf32, #tpu.memory_space<vmem>>, %arg15: memref<2x8x128xf32, #tpu.memory_space<vmem>>, %arg16: memref<2x8x128xf32, #tpu.memory_space<vmem>>, %arg17: memref<64x512xf32, #tpu.memory_space<vmem>>, %arg18: memref<64x128xf32, #tpu.memory_space<vmem>>) attributes {dimension_semantics = [#tpu.dimension_semantics<arbitrary>], iteration_bounds = array<i64: 1>, scalar_prefetch = 0 : i64, scratch_operands = 2 : i64, tpu.core_type = #tpu.core_type<tc>, window_params = [{pipeline_mode = #tpu.pipeline_mode<synchronous>, transform_indices = @transform_0, window_bounds = array<i64: 64, 256>}, {pipeline_mode = #tpu.pipeline_mode<synchronous>, transform_indices = @transform_1, window_bounds = array<i64: 256, 512>}, {pipeline_mode = #tpu.pipeline_mode<synchronous>, transform_indices = @transform_2, window_bounds = array<i64: 128, 512>}, {pipeline_mode = #tpu.pipeline_mode<synchronous>, transform_indices = @transform_3, window_bounds = array<i64: 1, 512>}, {pipeline_mode = #tpu.pipeline_mode<synchronous>, transform_indices = @transform_4, window_bounds = array<i64: 128, 512>}, {pipeline_mode = #tpu.pipeline_mode<synchronous>, transform_indices = @transform_5, window_bounds = array<i64: 128, 512>}, {pipeline_mode = #tpu.pipeline_mode<synchronous>, transform_indices = @transform_6, window_bounds = array<i64: 1, 512>}, {pipeline_mode = #tpu.pipeline_mode<synchronous>, transform_indices = @transform_7, window_bounds = array<i64: 2, 8, 128>}, {pipeline_mode = #tpu.pipeline_mode<synchronous>, transform_indices = @transform_8, window_bounds = array<i64: 2, 8, 128>}, {pipeline_mode = #tpu.pipeline_mode<synchronous>, transform_indices = @transform_9, window_bounds = array<i64: 128, 128>}, {pipeline_mode = #tpu.pipeline_mode<synchronous>, transform_indices = @transform_10, window_bounds = array<i64: 1, 128>}, {pipeline_mode = #tpu.pipeline_mode<synchronous>, transform_indices = @transform_11, window_bounds = array<i64: 128, 2>}, {pipeline_mode = #tpu.pipeline_mode<synchronous>, transform_indices = @transform_12, window_bounds = array<i64: 1, 2>}, {pipeline_mode = #tpu.pipeline_mode<synchronous>, transform_indices = @transform_13, window_bounds = array<i64: 8, 2>}, {pipeline_mode = #tpu.pipeline_mode<synchronous>, transform_indices = @transform_14, window_bounds = array<i64: 2, 8, 128>}, {pipeline_mode = #tpu.pipeline_mode<synchronous>, transform_indices = @transform_15, window_bounds = array<i64: 2, 8, 128>}]} {
    %c0 = arith.constant 0 : index
    %c0_0 = arith.constant 0 : index
    %0 = vector.load %arg1[%c0, %c0_0] : memref<64x256xf32, #tpu.memory_space<vmem>>, vector<64x256xf32>
    %c0_1 = arith.constant 0 : index
    %c0_2 = arith.constant 0 : index
    %1 = vector.load %arg2[%c0_1, %c0_2] : memref<256x512xf32, #tpu.memory_space<vmem>>, vector<256x512xf32>
    %cst = arith.constant dense<0.000000e+00> : vector<64x512xf32>
    %2 = tpu.matmul %0, %1, %cst {dimension_numbers = #tpu.dot_dimension_numbers<[1], [0], [0], [1], [0, 0, 1, 1], [], []>} : vector<64x256xf32>, vector<256x512xf32>, vector<64x512xf32> -> vector<64x512xf32>
    %c0_3 = arith.constant 0 : index
    %c0_4 = arith.constant 0 : index
    %3 = vector.load %arg4[%c0_3, %c0_4] : memref<1x512xf32, #tpu.memory_space<vmem>>, vector<1x512xf32>
    %4 = vector.broadcast %3 : vector<1x512xf32> to vector<64x512xf32>
    %5 = arith.addf %2, %4 : vector<64x512xf32>
    %c0_5 = arith.constant 0 : index
    %c0_6 = arith.constant 0 : index
    %6 = vector.load %arg17[%c0_5, %c0_6] : memref<64x512xf32, #tpu.memory_space<vmem>>, vector<64x512xf32>
    tpu.vector_store %arg17[%c0_5, %c0_6], %5 {strides = array<i32>} : memref<64x512xf32, #tpu.memory_space<vmem>>, vector<64x512xf32>,
    %c0_7 = arith.constant 0 : index
    %c0_8 = arith.constant 0 : index
    %7 = vector.load %arg3[%c0_7, %c0_8] : memref<128x512xf32, #tpu.memory_space<vmem>>, vector<128x512xf32>
    %c0_9 = arith.constant 0 : index
    %c0_10 = arith.constant 0 : index
    %c0_11 = arith.constant 0 : index
    %8 = vector.load %arg8[%c0_9, %c0_10, %c0_11] : memref<2x8x128xf32, #tpu.memory_space<vmem>>, vector<1x8x128xf32>
    %9 = vector.shape_cast %8 : vector<1x8x128xf32> to vector<8x128xf32>
    %c0_12 = arith.constant 0 : index
    %c0_13 = arith.constant 0 : index
    %c0_14 = arith.constant 0 : index
    %10 = vector.load %arg9[%c0_12, %c0_13, %c0_14] : memref<2x8x128xf32, #tpu.memory_space<vmem>>, vector<1x8x128xf32>
    %11 = vector.shape_cast %10 : vector<1x8x128xf32> to vector<8x128xf32>
    %c0_i32 = arith.constant 0 : i32
    %c8_i32 = arith.constant 8 : i32
    %12 = arith.muli %c0_i32, %c8_i32 : i32
    %13 = tpu.assume_multiple %12, 8 : i32
    %14 = arith.index_cast %13 : i32 to index
    %c0_15 = arith.constant 0 : index
    %15 = vector.load %arg17[%14, %c0_15] : memref<64x512xf32, #tpu.memory_space<vmem>>, vector<8x512xf32>
    %cst_16 = arith.constant dense<0.000000e+00> : vector<8x512xf32>
    %16 = tpu.matmul %9, %7, %cst_16 {dimension_numbers = #tpu.dot_dimension_numbers<[1], [0], [0], [1], [0, 0, 1, 1], [], []>} : vector<8x128xf32>, vector<128x512xf32>, vector<8x512xf32> -> vector<8x512xf32>
    %17 = arith.addf %15, %16 : vector<8x512xf32>
    %18 = vector.extract_strided_slice %17 {offsets = [0, 0], sizes = [8, 128], strides = [1, 1]} : vector<8x512xf32> to vector<8x128xf32>
    %19 = arith.negf %18 : vector<8x128xf32>
    %20 = math.exp %19 : vector<8x128xf32>
    %cst_17 = arith.constant 1.000000e+00 : f32
    %21 = vector.broadcast %cst_17 : f32 to vector<8x128xf32>
    %22 = arith.addf %21, %20 : vector<8x128xf32>
    %23 = arith.divf %21, %22 : vector<8x128xf32>
    %24 = vector.extract_strided_slice %17 {offsets = [0, 128], sizes = [8, 128], strides = [1, 1]} : vector<8x512xf32> to vector<8x128xf32>
    %25 = arith.negf %24 : vector<8x128xf32>
    %26 = math.exp %25 : vector<8x128xf32>
    %cst_18 = arith.constant 1.000000e+00 : f32
    %27 = vector.broadcast %cst_18 : f32 to vector<8x128xf32>
    %28 = arith.addf %27, %26 : vector<8x128xf32>
    %29 = arith.divf %27, %28 : vector<8x128xf32>
    %30 = vector.extract_strided_slice %17 {offsets = [0, 256], sizes = [8, 128], strides = [1, 1]} : vector<8x512xf32> to vector<8x128xf32>
    %31 = math.tanh %30 : vector<8x128xf32>
    %32 = vector.extract_strided_slice %17 {offsets = [0, 384], sizes = [8, 128], strides = [1, 1]} : vector<8x512xf32> to vector<8x128xf32>
    %33 = arith.negf %32 : vector<8x128xf32>
    %34 = math.exp %33 : vector<8x128xf32>
    %cst_19 = arith.constant 1.000000e+00 : f32
    %35 = vector.broadcast %cst_19 : f32 to vector<8x128xf32>
    %36 = arith.addf %35, %34 : vector<8x128xf32>
    %37 = arith.divf %35, %36 : vector<8x128xf32>
    %38 = arith.mulf %29, %11 : vector<8x128xf32>
    %39 = arith.mulf %23, %31 : vector<8x128xf32>
    %40 = arith.addf %38, %39 : vector<8x128xf32>
    %41 = math.tanh %40 : vector<8x128xf32>
    %42 = arith.mulf %37, %41 : vector<8x128xf32>
    %43 = arith.index_cast %13 : i32 to index
    %c0_20 = arith.constant 0 : index
    %44 = vector.load %arg18[%43, %c0_20] : memref<64x128xf32, #tpu.memory_space<vmem>>, vector<8x128xf32>
    tpu.vector_store %arg18[%43, %c0_20], %42 {strides = array<i32>} : memref<64x128xf32, #tpu.memory_space<vmem>>, vector<8x128xf32>,
    %c1_i32 = arith.constant 1 : i32
    %c8_i32_21 = arith.constant 8 : i32
    %45 = arith.muli %c1_i32, %c8_i32_21 : i32
    %46 = tpu.assume_multiple %45, 8 : i32
    %47 = arith.index_cast %46 : i32 to index
    %c0_22 = arith.constant 0 : index
    %48 = vector.load %arg17[%47, %c0_22] : memref<64x512xf32, #tpu.memory_space<vmem>>, vector<8x512xf32>
    %cst_23 = arith.constant dense<0.000000e+00> : vector<8x512xf32>
    %49 = tpu.matmul %42, %7, %cst_23 {dimension_numbers = #tpu.dot_dimension_numbers<[1], [0], [0], [1], [0, 0, 1, 1], [], []>} : vector<8x128xf32>, vector<128x512xf32>, vector<8x512xf32> -> vector<8x512xf32>
    %50 = arith.addf %48, %49 : vector<8x512xf32>
    %51 = vector.extract_strided_slice %50 {offsets = [0, 0], sizes = [8, 128], strides = [1, 1]} : vector<8x512xf32> to vector<8x128xf32>
    %52 = arith.negf %51 : vector<8x128xf32>
    %53 = math.exp %52 : vector<8x128xf32>
    %cst_24 = arith.constant 1.000000e+00 : f32
    %54 = vector.broadcast %cst_24 : f32 to vector<8x128xf32>
    %55 = arith.addf %54, %53 : vector<8x128xf32>
    %56 = arith.divf %54, %55 : vector<8x128xf32>
    %57 = vector.extract_strided_slice %50 {offsets = [0, 128], sizes = [8, 128], strides = [1, 1]} : vector<8x512xf32> to vector<8x128xf32>
    %58 = arith.negf %57 : vector<8x128xf32>
    %59 = math.exp %58 : vector<8x128xf32>
    %cst_25 = arith.constant 1.000000e+00 : f32
    %60 = vector.broadcast %cst_25 : f32 to vector<8x128xf32>
    %61 = arith.addf %60, %59 : vector<8x128xf32>
    %62 = arith.divf %60, %61 : vector<8x128xf32>
    %63 = vector.extract_strided_slice %50 {offsets = [0, 256], sizes = [8, 128], strides = [1, 1]} : vector<8x512xf32> to vector<8x128xf32>
    %64 = math.tanh %63 : vector<8x128xf32>
    %65 = vector.extract_strided_slice %50 {offsets = [0, 384], sizes = [8, 128], strides = [1, 1]} : vector<8x512xf32> to vector<8x128xf32>
    %66 = arith.negf %65 : vector<8x128xf32>
    %67 = math.exp %66 : vector<8x128xf32>
    %cst_26 = arith.constant 1.000000e+00 : f32
    %68 = vector.broadcast %cst_26 : f32 to vector<8x128xf32>
    %69 = arith.addf %68, %67 : vector<8x128xf32>
    %70 = arith.divf %68, %69 : vector<8x128xf32>
    %71 = arith.mulf %62, %40 : vector<8x128xf32>
    %72 = arith.mulf %56, %64 : vector<8x128xf32>
    %73 = arith.addf %71, %72 : vector<8x128xf32>
    %74 = math.tanh %73 : vector<8x128xf32>
    %75 = arith.mulf %70, %74 : vector<8x128xf32>
    %76 = arith.index_cast %46 : i32 to index
    %c0_27 = arith.constant 0 : index
    %77 = vector.load %arg18[%76, %c0_27] : memref<64x128xf32, #tpu.memory_space<vmem>>, vector<8x128xf32>
    tpu.vector_store %arg18[%76, %c0_27], %75 {strides = array<i32>} : memref<64x128xf32, #tpu.memory_space<vmem>>, vector<8x128xf32>,
    %c2_i32 = arith.constant 2 : i32
    %c8_i32_28 = arith.constant 8 : i32
    %78 = arith.muli %c2_i32, %c8_i32_28 : i32
    %79 = tpu.assume_multiple %78, 8 : i32
    %80 = arith.index_cast %79 : i32 to index
    %c0_29 = arith.constant 0 : index
    %81 = vector.load %arg17[%80, %c0_29] : memref<64x512xf32, #tpu.memory_space<vmem>>, vector<8x512xf32>
    %cst_30 = arith.constant dense<0.000000e+00> : vector<8x512xf32>
    %82 = tpu.matmul %75, %7, %cst_30 {dimension_numbers = #tpu.dot_dimension_numbers<[1], [0], [0], [1], [0, 0, 1, 1], [], []>} : vector<8x128xf32>, vector<128x512xf32>, vector<8x512xf32> -> vector<8x512xf32>
    %83 = arith.addf %81, %82 : vector<8x512xf32>
    %84 = vector.extract_strided_slice %83 {offsets = [0, 0], sizes = [8, 128], strides = [1, 1]} : vector<8x512xf32> to vector<8x128xf32>
    %85 = arith.negf %84 : vector<8x128xf32>
    %86 = math.exp %85 : vector<8x128xf32>
    %cst_31 = arith.constant 1.000000e+00 : f32
    %87 = vector.broadcast %cst_31 : f32 to vector<8x128xf32>
    %88 = arith.addf %87, %86 : vector<8x128xf32>
    %89 = arith.divf %87, %88 : vector<8x128xf32>
    %90 = vector.extract_strided_slice %83 {offsets = [0, 128], sizes = [8, 128], strides = [1, 1]} : vector<8x512xf32> to vector<8x128xf32>
    %91 = arith.negf %90 : vector<8x128xf32>
    %92 = math.exp %91 : vector<8x128xf32>
    %cst_32 = arith.constant 1.000000e+00 : f32
    %93 = vector.broadcast %cst_32 : f32 to vector<8x128xf32>
    %94 = arith.addf %93, %92 : vector<8x128xf32>
    %95 = arith.divf %93, %94 : vector<8x128xf32>
    %96 = vector.extract_strided_slice %83 {offsets = [0, 256], sizes = [8, 128], strides = [1, 1]} : vector<8x512xf32> to vector<8x128xf32>
    %97 = math.tanh %96 : vector<8x128xf32>
    %98 = vector.extract_strided_slice %83 {offsets = [0, 384], sizes = [8, 128], strides = [1, 1]} : vector<8x512xf32> to vector<8x128xf32>
    %99 = arith.negf %98 : vector<8x128xf32>
    %100 = math.exp %99 : vector<8x128xf32>
    %cst_33 = arith.constant 1.000000e+00 : f32
    %101 = vector.broadcast %cst_33 : f32 to vector<8x128xf32>
    %102 = arith.addf %101, %100 : vector<8x128xf32>
    %103 = arith.divf %101, %102 : vector<8x128xf32>
    %104 = arith.mulf %95, %73 : vector<8x128xf32>
    %105 = arith.mulf %89, %97 : vector<8x128xf32>
    %106 = arith.addf %104, %105 : vector<8x128xf32>
    %107 = math.tanh %106 : vector<8x128xf32>
    %108 = arith.mulf %103, %107 : vector<8x128xf32>
    %109 = arith.index_cast %79 : i32 to index
    %c0_34 = arith.constant 0 : index
    %110 = vector.load %arg18[%109, %c0_34] : memref<64x128xf32, #tpu.memory_space<vmem>>, vector<8x128xf32>
    tpu.vector_store %arg18[%109, %c0_34], %108 {strides = array<i32>} : memref<64x128xf32, #tpu.memory_space<vmem>>, vector<8x128xf32>,
    %c3_i32 = arith.constant 3 : i32
    %c8_i32_35 = arith.constant 8 : i32
    %111 = arith.muli %c3_i32, %c8_i32_35 : i32
    %112 = tpu.assume_multiple %111, 8 : i32
    %113 = arith.index_cast %112 : i32 to index
    %c0_36 = arith.constant 0 : index
    %114 = vector.load %arg17[%113, %c0_36] : memref<64x512xf32, #tpu.memory_space<vmem>>, vector<8x512xf32>
    %cst_37 = arith.constant dense<0.000000e+00> : vector<8x512xf32>
    %115 = tpu.matmul %108, %7, %cst_37 {dimension_numbers = #tpu.dot_dimension_numbers<[1], [0], [0], [1], [0, 0, 1, 1], [], []>} : vector<8x128xf32>, vector<128x512xf32>, vector<8x512xf32> -> vector<8x512xf32>
    %116 = arith.addf %114, %115 : vector<8x512xf32>
    %117 = vector.extract_strided_slice %116 {offsets = [0, 0], sizes = [8, 128], strides = [1, 1]} : vector<8x512xf32> to vector<8x128xf32>
    %118 = arith.negf %117 : vector<8x128xf32>
    %119 = math.exp %118 : vector<8x128xf32>
    %cst_38 = arith.constant 1.000000e+00 : f32
    %120 = vector.broadcast %cst_38 : f32 to vector<8x128xf32>
    %121 = arith.addf %120, %119 : vector<8x128xf32>
    %122 = arith.divf %120, %121 : vector<8x128xf32>
    %123 = vector.extract_strided_slice %116 {offsets = [0, 128], sizes = [8, 128], strides = [1, 1]} : vector<8x512xf32> to vector<8x128xf32>
    %124 = arith.negf %123 : vector<8x128xf32>
    %125 = math.exp %124 : vector<8x128xf32>
    %cst_39 = arith.constant 1.000000e+00 : f32
    %126 = vector.broadcast %cst_39 : f32 to vector<8x128xf32>
    %127 = arith.addf %126, %125 : vector<8x128xf32>
    %128 = arith.divf %126, %127 : vector<8x128xf32>
    %129 = vector.extract_strided_slice %116 {offsets = [0, 256], sizes = [8, 128], strides = [1, 1]} : vector<8x512xf32> to vector<8x128xf32>
    %130 = math.tanh %129 : vector<8x128xf32>
    %131 = vector.extract_strided_slice %116 {offsets = [0, 384], sizes = [8, 128], strides = [1, 1]} : vector<8x512xf32> to vector<8x128xf32>
    %132 = arith.negf %131 : vector<8x128xf32>
    %133 = math.exp %132 : vector<8x128xf32>
    %cst_40 = arith.constant 1.000000e+00 : f32
    %134 = vector.broadcast %cst_40 : f32 to vector<8x128xf32>
    %135 = arith.addf %134, %133 : vector<8x128xf32>
    %136 = arith.divf %134, %135 : vector<8x128xf32>
    %137 = arith.mulf %128, %106 : vector<8x128xf32>
    %138 = arith.mulf %122, %130 : vector<8x128xf32>
    %139 = arith.addf %137, %138 : vector<8x128xf32>
    %140 = math.tanh %139 : vector<8x128xf32>
    %141 = arith.mulf %136, %140 : vector<8x128xf32>
    %142 = arith.index_cast %112 : i32 to index
    %c0_41 = arith.constant 0 : index
    %143 = vector.load %arg18[%142, %c0_41] : memref<64x128xf32, #tpu.memory_space<vmem>>, vector<8x128xf32>
    tpu.vector_store %arg18[%142, %c0_41], %141 {strides = array<i32>} : memref<64x128xf32, #tpu.memory_space<vmem>>, vector<8x128xf32>,
    %c4_i32 = arith.constant 4 : i32
    %c8_i32_42 = arith.constant 8 : i32
    %144 = arith.muli %c4_i32, %c8_i32_42 : i32
    %145 = tpu.assume_multiple %144, 8 : i32
    %146 = arith.index_cast %145 : i32 to index
    %c0_43 = arith.constant 0 : index
    %147 = vector.load %arg17[%146, %c0_43] : memref<64x512xf32, #tpu.memory_space<vmem>>, vector<8x512xf32>
    %cst_44 = arith.constant dense<0.000000e+00> : vector<8x512xf32>
    %148 = tpu.matmul %141, %7, %cst_44 {dimension_numbers = #tpu.dot_dimension_numbers<[1], [0], [0], [1], [0, 0, 1, 1], [], []>} : vector<8x128xf32>, vector<128x512xf32>, vector<8x512xf32> -> vector<8x512xf32>
    %149 = arith.addf %147, %148 : vector<8x512xf32>
    %150 = vector.extract_strided_slice %149 {offsets = [0, 0], sizes = [8, 128], strides = [1, 1]} : vector<8x512xf32> to vector<8x128xf32>
    %151 = arith.negf %150 : vector<8x128xf32>
    %152 = math.exp %151 : vector<8x128xf32>
    %cst_45 = arith.constant 1.000000e+00 : f32
    %153 = vector.broadcast %cst_45 : f32 to vector<8x128xf32>
    %154 = arith.addf %153, %152 : vector<8x128xf32>
    %155 = arith.divf %153, %154 : vector<8x128xf32>
    %156 = vector.extract_strided_slice %149 {offsets = [0, 128], sizes = [8, 128], strides = [1, 1]} : vector<8x512xf32> to vector<8x128xf32>
    %157 = arith.negf %156 : vector<8x128xf32>
    %158 = math.exp %157 : vector<8x128xf32>
    %cst_46 = arith.constant 1.000000e+00 : f32
    %159 = vector.broadcast %cst_46 : f32 to vector<8x128xf32>
    %160 = arith.addf %159, %158 : vector<8x128xf32>
    %161 = arith.divf %159, %160 : vector<8x128xf32>
    %162 = vector.extract_strided_slice %149 {offsets = [0, 256], sizes = [8, 128], strides = [1, 1]} : vector<8x512xf32> to vector<8x128xf32>
    %163 = math.tanh %162 : vector<8x128xf32>
    %164 = vector.extract_strided_slice %149 {offsets = [0, 384], sizes = [8, 128], strides = [1, 1]} : vector<8x512xf32> to vector<8x128xf32>
    %165 = arith.negf %164 : vector<8x128xf32>
    %166 = math.exp %165 : vector<8x128xf32>
    %cst_47 = arith.constant 1.000000e+00 : f32
    %167 = vector.broadcast %cst_47 : f32 to vector<8x128xf32>
    %168 = arith.addf %167, %166 : vector<8x128xf32>
    %169 = arith.divf %167, %168 : vector<8x128xf32>
    %170 = arith.mulf %161, %139 : vector<8x128xf32>
    %171 = arith.mulf %155, %163 : vector<8x128xf32>
    %172 = arith.addf %170, %171 : vector<8x128xf32>
    %173 = math.tanh %172 : vector<8x128xf32>
    %174 = arith.mulf %169, %173 : vector<8x128xf32>
    %175 = arith.index_cast %145 : i32 to index
    %c0_48 = arith.constant 0 : index
    %176 = vector.load %arg18[%175, %c0_48] : memref<64x128xf32, #tpu.memory_space<vmem>>, vector<8x128xf32>
    tpu.vector_store %arg18[%175, %c0_48], %174 {strides = array<i32>} : memref<64x128xf32, #tpu.memory_space<vmem>>, vector<8x128xf32>,
    %c5_i32 = arith.constant 5 : i32
    %c8_i32_49 = arith.constant 8 : i32
    %177 = arith.muli %c5_i32, %c8_i32_49 : i32
    %178 = tpu.assume_multiple %177, 8 : i32
    %179 = arith.index_cast %178 : i32 to index
    %c0_50 = arith.constant 0 : index
    %180 = vector.load %arg17[%179, %c0_50] : memref<64x512xf32, #tpu.memory_space<vmem>>, vector<8x512xf32>
    %cst_51 = arith.constant dense<0.000000e+00> : vector<8x512xf32>
    %181 = tpu.matmul %174, %7, %cst_51 {dimension_numbers = #tpu.dot_dimension_numbers<[1], [0], [0], [1], [0, 0, 1, 1], [], []>} : vector<8x128xf32>, vector<128x512xf32>, vector<8x512xf32> -> vector<8x512xf32>
    %182 = arith.addf %180, %181 : vector<8x512xf32>
    %183 = vector.extract_strided_slice %182 {offsets = [0, 0], sizes = [8, 128], strides = [1, 1]} : vector<8x512xf32> to vector<8x128xf32>
    %184 = arith.negf %183 : vector<8x128xf32>
    %185 = math.exp %184 : vector<8x128xf32>
    %cst_52 = arith.constant 1.000000e+00 : f32
    %186 = vector.broadcast %cst_52 : f32 to vector<8x128xf32>
    %187 = arith.addf %186, %185 : vector<8x128xf32>
    %188 = arith.divf %186, %187 : vector<8x128xf32>
    %189 = vector.extract_strided_slice %182 {offsets = [0, 128], sizes = [8, 128], strides = [1, 1]} : vector<8x512xf32> to vector<8x128xf32>
    %190 = arith.negf %189 : vector<8x128xf32>
    %191 = math.exp %190 : vector<8x128xf32>
    %cst_53 = arith.constant 1.000000e+00 : f32
    %192 = vector.broadcast %cst_53 : f32 to vector<8x128xf32>
    %193 = arith.addf %192, %191 : vector<8x128xf32>
    %194 = arith.divf %192, %193 : vector<8x128xf32>
    %195 = vector.extract_strided_slice %182 {offsets = [0, 256], sizes = [8, 128], strides = [1, 1]} : vector<8x512xf32> to vector<8x128xf32>
    %196 = math.tanh %195 : vector<8x128xf32>
    %197 = vector.extract_strided_slice %182 {offsets = [0, 384], sizes = [8, 128], strides = [1, 1]} : vector<8x512xf32> to vector<8x128xf32>
    %198 = arith.negf %197 : vector<8x128xf32>
    %199 = math.exp %198 : vector<8x128xf32>
    %cst_54 = arith.constant 1.000000e+00 : f32
    %200 = vector.broadcast %cst_54 : f32 to vector<8x128xf32>
    %201 = arith.addf %200, %199 : vector<8x128xf32>
    %202 = arith.divf %200, %201 : vector<8x128xf32>
    %203 = arith.mulf %194, %172 : vector<8x128xf32>
    %204 = arith.mulf %188, %196 : vector<8x128xf32>
    %205 = arith.addf %203, %204 : vector<8x128xf32>
    %206 = math.tanh %205 : vector<8x128xf32>
    %207 = arith.mulf %202, %206 : vector<8x128xf32>
    %208 = arith.index_cast %178 : i32 to index
    %c0_55 = arith.constant 0 : index
    %209 = vector.load %arg18[%208, %c0_55] : memref<64x128xf32, #tpu.memory_space<vmem>>, vector<8x128xf32>
    tpu.vector_store %arg18[%208, %c0_55], %207 {strides = array<i32>} : memref<64x128xf32, #tpu.memory_space<vmem>>, vector<8x128xf32>,
    %c6_i32 = arith.constant 6 : i32
    %c8_i32_56 = arith.constant 8 : i32
    %210 = arith.muli %c6_i32, %c8_i32_56 : i32
    %211 = tpu.assume_multiple %210, 8 : i32
    %212 = arith.index_cast %211 : i32 to index
    %c0_57 = arith.constant 0 : index
    %213 = vector.load %arg17[%212, %c0_57] : memref<64x512xf32, #tpu.memory_space<vmem>>, vector<8x512xf32>
    %cst_58 = arith.constant dense<0.000000e+00> : vector<8x512xf32>
    %214 = tpu.matmul %207, %7, %cst_58 {dimension_numbers = #tpu.dot_dimension_numbers<[1], [0], [0], [1], [0, 0, 1, 1], [], []>} : vector<8x128xf32>, vector<128x512xf32>, vector<8x512xf32> -> vector<8x512xf32>
    %215 = arith.addf %213, %214 : vector<8x512xf32>
    %216 = vector.extract_strided_slice %215 {offsets = [0, 0], sizes = [8, 128], strides = [1, 1]} : vector<8x512xf32> to vector<8x128xf32>
    %217 = arith.negf %216 : vector<8x128xf32>
    %218 = math.exp %217 : vector<8x128xf32>
    %cst_59 = arith.constant 1.000000e+00 : f32
    %219 = vector.broadcast %cst_59 : f32 to vector<8x128xf32>
    %220 = arith.addf %219, %218 : vector<8x128xf32>
    %221 = arith.divf %219, %220 : vector<8x128xf32>
    %222 = vector.extract_strided_slice %215 {offsets = [0, 128], sizes = [8, 128], strides = [1, 1]} : vector<8x512xf32> to vector<8x128xf32>
    %223 = arith.negf %222 : vector<8x128xf32>
    %224 = math.exp %223 : vector<8x128xf32>
    %cst_60 = arith.constant 1.000000e+00 : f32
    %225 = vector.broadcast %cst_60 : f32 to vector<8x128xf32>
    %226 = arith.addf %225, %224 : vector<8x128xf32>
    %227 = arith.divf %225, %226 : vector<8x128xf32>
    %228 = vector.extract_strided_slice %215 {offsets = [0, 256], sizes = [8, 128], strides = [1, 1]} : vector<8x512xf32> to vector<8x128xf32>
    %229 = math.tanh %228 : vector<8x128xf32>
    %230 = vector.extract_strided_slice %215 {offsets = [0, 384], sizes = [8, 128], strides = [1, 1]} : vector<8x512xf32> to vector<8x128xf32>
    %231 = arith.negf %230 : vector<8x128xf32>
    %232 = math.exp %231 : vector<8x128xf32>
    %cst_61 = arith.constant 1.000000e+00 : f32
    %233 = vector.broadcast %cst_61 : f32 to vector<8x128xf32>
    %234 = arith.addf %233, %232 : vector<8x128xf32>
    %235 = arith.divf %233, %234 : vector<8x128xf32>
    %236 = arith.mulf %227, %205 : vector<8x128xf32>
    %237 = arith.mulf %221, %229 : vector<8x128xf32>
    %238 = arith.addf %236, %237 : vector<8x128xf32>
    %239 = math.tanh %238 : vector<8x128xf32>
    %240 = arith.mulf %235, %239 : vector<8x128xf32>
    %241 = arith.index_cast %211 : i32 to index
    %c0_62 = arith.constant 0 : index
    %242 = vector.load %arg18[%241, %c0_62] : memref<64x128xf32, #tpu.memory_space<vmem>>, vector<8x128xf32>
    tpu.vector_store %arg18[%241, %c0_62], %240 {strides = array<i32>} : memref<64x128xf32, #tpu.memory_space<vmem>>, vector<8x128xf32>,
    %c7_i32 = arith.constant 7 : i32
    %c8_i32_63 = arith.constant 8 : i32
    %243 = arith.muli %c7_i32, %c8_i32_63 : i32
    %244 = tpu.assume_multiple %243, 8 : i32
    %245 = arith.index_cast %244 : i32 to index
    %c0_64 = arith.constant 0 : index
    %246 = vector.load %arg17[%245, %c0_64] : memref<64x512xf32, #tpu.memory_space<vmem>>, vector<8x512xf32>
    %cst_65 = arith.constant dense<0.000000e+00> : vector<8x512xf32>
    %247 = tpu.matmul %240, %7, %cst_65 {dimension_numbers = #tpu.dot_dimension_numbers<[1], [0], [0], [1], [0, 0, 1, 1], [], []>} : vector<8x128xf32>, vector<128x512xf32>, vector<8x512xf32> -> vector<8x512xf32>
    %248 = arith.addf %246, %247 : vector<8x512xf32>
    %249 = vector.extract_strided_slice %248 {offsets = [0, 0], sizes = [8, 128], strides = [1, 1]} : vector<8x512xf32> to vector<8x128xf32>
    %250 = arith.negf %249 : vector<8x128xf32>
    %251 = math.exp %250 : vector<8x128xf32>
    %cst_66 = arith.constant 1.000000e+00 : f32
    %252 = vector.broadcast %cst_66 : f32 to vector<8x128xf32>
    %253 = arith.addf %252, %251 : vector<8x128xf32>
    %254 = arith.divf %252, %253 : vector<8x128xf32>
    %255 = vector.extract_strided_slice %248 {offsets = [0, 128], sizes = [8, 128], strides = [1, 1]} : vector<8x512xf32> to vector<8x128xf32>
    %256 = arith.negf %255 : vector<8x128xf32>
    %257 = math.exp %256 : vector<8x128xf32>
    %cst_67 = arith.constant 1.000000e+00 : f32
    %258 = vector.broadcast %cst_67 : f32 to vector<8x128xf32>
    %259 = arith.addf %258, %257 : vector<8x128xf32>
    %260 = arith.divf %258, %259 : vector<8x128xf32>
    %261 = vector.extract_strided_slice %248 {offsets = [0, 256], sizes = [8, 128], strides = [1, 1]} : vector<8x512xf32> to vector<8x128xf32>
    %262 = math.tanh %261 : vector<8x128xf32>
    %263 = vector.extract_strided_slice %248 {offsets = [0, 384], sizes = [8, 128], strides = [1, 1]} : vector<8x512xf32> to vector<8x128xf32>
    %264 = arith.negf %263 : vector<8x128xf32>
    %265 = math.exp %264 : vector<8x128xf32>
    %cst_68 = arith.constant 1.000000e+00 : f32
    %266 = vector.broadcast %cst_68 : f32 to vector<8x128xf32>
    %267 = arith.addf %266, %265 : vector<8x128xf32>
    %268 = arith.divf %266, %267 : vector<8x128xf32>
    %269 = arith.mulf %260, %238 : vector<8x128xf32>
    %270 = arith.mulf %254, %262 : vector<8x128xf32>
    %271 = arith.addf %269, %270 : vector<8x128xf32>
    %272 = math.tanh %271 : vector<8x128xf32>
    %273 = arith.mulf %268, %272 : vector<8x128xf32>
    %274 = arith.index_cast %244 : i32 to index
    %c0_69 = arith.constant 0 : index
    %275 = vector.load %arg18[%274, %c0_69] : memref<64x128xf32, #tpu.memory_space<vmem>>, vector<8x128xf32>
    tpu.vector_store %arg18[%274, %c0_69], %273 {strides = array<i32>} : memref<64x128xf32, #tpu.memory_space<vmem>>, vector<8x128xf32>,
    %c8_i32_70 = arith.constant 8 : i32
    %c0_71 = arith.constant 0 : index
    %c0_72 = arith.constant 0 : index
    %276 = vector.load %arg18[%c0_71, %c0_72] : memref<64x128xf32, #tpu.memory_space<vmem>>, vector<64x128xf32>
    %c0_73 = arith.constant 0 : index
    %c0_74 = arith.constant 0 : index
    %277 = vector.load %arg5[%c0_73, %c0_74] : memref<128x512xf32, #tpu.memory_space<vmem>>, vector<128x512xf32>
    %cst_75 = arith.constant dense<0.000000e+00> : vector<64x512xf32>
    %278 = tpu.matmul %276, %277, %cst_75 {dimension_numbers = #tpu.dot_dimension_numbers<[1], [0], [0], [1], [0, 0, 1, 1], [], []>} : vector<64x128xf32>, vector<128x512xf32>, vector<64x512xf32> -> vector<64x512xf32>
    %c0_76 = arith.constant 0 : index
    %c0_77 = arith.constant 0 : index
    %279 = vector.load %arg7[%c0_76, %c0_77] : memref<1x512xf32, #tpu.memory_space<vmem>>, vector<1x512xf32>
    %280 = vector.broadcast %279 : vector<1x512xf32> to vector<64x512xf32>
    %281 = arith.addf %278, %280 : vector<64x512xf32>
    %c0_78 = arith.constant 0 : index
    %c0_79 = arith.constant 0 : index
    %282 = vector.load %arg17[%c0_78, %c0_79] : memref<64x512xf32, #tpu.memory_space<vmem>>, vector<64x512xf32>
    tpu.vector_store %arg17[%c0_78, %c0_79], %281 {strides = array<i32>} : memref<64x512xf32, #tpu.memory_space<vmem>>, vector<64x512xf32>,
    %c0_80 = arith.constant 0 : index
    %c0_81 = arith.constant 0 : index
    %283 = vector.load %arg6[%c0_80, %c0_81] : memref<128x512xf32, #tpu.memory_space<vmem>>, vector<128x512xf32>
    %c1 = arith.constant 1 : index
    %c0_82 = arith.constant 0 : index
    %c0_83 = arith.constant 0 : index
    %284 = vector.load %arg8[%c1, %c0_82, %c0_83] : memref<2x8x128xf32, #tpu.memory_space<vmem>>, vector<1x8x128xf32>
    %285 = vector.shape_cast %284 : vector<1x8x128xf32> to vector<8x128xf32>
    %c1_84 = arith.constant 1 : index
    %c0_85 = arith.constant 0 : index
    %c0_86 = arith.constant 0 : index
    %286 = vector.load %arg9[%c1_84, %c0_85, %c0_86] : memref<2x8x128xf32, #tpu.memory_space<vmem>>, vector<1x8x128xf32>
    %287 = vector.shape_cast %286 : vector<1x8x128xf32> to vector<8x128xf32>
    %c0_i32_87 = arith.constant 0 : i32
    %c8_i32_88 = arith.constant 8 : i32
    %288 = arith.muli %c0_i32_87, %c8_i32_88 : i32
    %289 = tpu.assume_multiple %288, 8 : i32
    %290 = arith.index_cast %289 : i32 to index
    %c0_89 = arith.constant 0 : index
    %291 = vector.load %arg17[%290, %c0_89] : memref<64x512xf32, #tpu.memory_space<vmem>>, vector<8x512xf32>
    %cst_90 = arith.constant dense<0.000000e+00> : vector<8x512xf32>
    %292 = tpu.matmul %285, %283, %cst_90 {dimension_numbers = #tpu.dot_dimension_numbers<[1], [0], [0], [1], [0, 0, 1, 1], [], []>} : vector<8x128xf32>, vector<128x512xf32>, vector<8x512xf32> -> vector<8x512xf32>
    %293 = arith.addf %291, %292 : vector<8x512xf32>
    %294 = vector.extract_strided_slice %293 {offsets = [0, 0], sizes = [8, 128], strides = [1, 1]} : vector<8x512xf32> to vector<8x128xf32>
    %295 = arith.negf %294 : vector<8x128xf32>
    %296 = math.exp %295 : vector<8x128xf32>
    %cst_91 = arith.constant 1.000000e+00 : f32
    %297 = vector.broadcast %cst_91 : f32 to vector<8x128xf32>
    %298 = arith.addf %297, %296 : vector<8x128xf32>
    %299 = arith.divf %297, %298 : vector<8x128xf32>
    %300 = vector.extract_strided_slice %293 {offsets = [0, 128], sizes = [8, 128], strides = [1, 1]} : vector<8x512xf32> to vector<8x128xf32>
    %301 = arith.negf %300 : vector<8x128xf32>
    %302 = math.exp %301 : vector<8x128xf32>
    %cst_92 = arith.constant 1.000000e+00 : f32
    %303 = vector.broadcast %cst_92 : f32 to vector<8x128xf32>
    %304 = arith.addf %303, %302 : vector<8x128xf32>
    %305 = arith.divf %303, %304 : vector<8x128xf32>
    %306 = vector.extract_strided_slice %293 {offsets = [0, 256], sizes = [8, 128], strides = [1, 1]} : vector<8x512xf32> to vector<8x128xf32>
    %307 = math.tanh %306 : vector<8x128xf32>
    %308 = vector.extract_strided_slice %293 {offsets = [0, 384], sizes = [8, 128], strides = [1, 1]} : vector<8x512xf32> to vector<8x128xf32>
    %309 = arith.negf %308 : vector<8x128xf32>
    %310 = math.exp %309 : vector<8x128xf32>
    %cst_93 = arith.constant 1.000000e+00 : f32
    %311 = vector.broadcast %cst_93 : f32 to vector<8x128xf32>
    %312 = arith.addf %311, %310 : vector<8x128xf32>
    %313 = arith.divf %311, %312 : vector<8x128xf32>
    %314 = arith.mulf %305, %287 : vector<8x128xf32>
    %315 = arith.mulf %299, %307 : vector<8x128xf32>
    %316 = arith.addf %314, %315 : vector<8x128xf32>
    %317 = math.tanh %316 : vector<8x128xf32>
    %318 = arith.mulf %313, %317 : vector<8x128xf32>
    %c1_i32_94 = arith.constant 1 : i32
    %c8_i32_95 = arith.constant 8 : i32
    %319 = arith.muli %c1_i32_94, %c8_i32_95 : i32
    %320 = tpu.assume_multiple %319, 8 : i32
    %321 = arith.index_cast %320 : i32 to index
    %c0_96 = arith.constant 0 : index
    %322 = vector.load %arg17[%321, %c0_96] : memref<64x512xf32, #tpu.memory_space<vmem>>, vector<8x512xf32>
    %cst_97 = arith.constant dense<0.000000e+00> : vector<8x512xf32>
    %323 = tpu.matmul %318, %283, %cst_97 {dimension_numbers = #tpu.dot_dimension_numbers<[1], [0], [0], [1], [0, 0, 1, 1], [], []>} : vector<8x128xf32>, vector<128x512xf32>, vector<8x512xf32> -> vector<8x512xf32>
    %324 = arith.addf %322, %323 : vector<8x512xf32>
    %325 = vector.extract_strided_slice %324 {offsets = [0, 0], sizes = [8, 128], strides = [1, 1]} : vector<8x512xf32> to vector<8x128xf32>
    %326 = arith.negf %325 : vector<8x128xf32>
    %327 = math.exp %326 : vector<8x128xf32>
    %cst_98 = arith.constant 1.000000e+00 : f32
    %328 = vector.broadcast %cst_98 : f32 to vector<8x128xf32>
    %329 = arith.addf %328, %327 : vector<8x128xf32>
    %330 = arith.divf %328, %329 : vector<8x128xf32>
    %331 = vector.extract_strided_slice %324 {offsets = [0, 128], sizes = [8, 128], strides = [1, 1]} : vector<8x512xf32> to vector<8x128xf32>
    %332 = arith.negf %331 : vector<8x128xf32>
    %333 = math.exp %332 : vector<8x128xf32>
    %cst_99 = arith.constant 1.000000e+00 : f32
    %334 = vector.broadcast %cst_99 : f32 to vector<8x128xf32>
    %335 = arith.addf %334, %333 : vector<8x128xf32>
    %336 = arith.divf %334, %335 : vector<8x128xf32>
    %337 = vector.extract_strided_slice %324 {offsets = [0, 256], sizes = [8, 128], strides = [1, 1]} : vector<8x512xf32> to vector<8x128xf32>
    %338 = math.tanh %337 : vector<8x128xf32>
    %339 = vector.extract_strided_slice %324 {offsets = [0, 384], sizes = [8, 128], strides = [1, 1]} : vector<8x512xf32> to vector<8x128xf32>
    %340 = arith.negf %339 : vector<8x128xf32>
    %341 = math.exp %340 : vector<8x128xf32>
    %cst_100 = arith.constant 1.000000e+00 : f32
    %342 = vector.broadcast %cst_100 : f32 to vector<8x128xf32>
    %343 = arith.addf %342, %341 : vector<8x128xf32>
    %344 = arith.divf %342, %343 : vector<8x128xf32>
    %345 = arith.mulf %336, %316 : vector<8x128xf32>
    %346 = arith.mulf %330, %338 : vector<8x128xf32>
    %347 = arith.addf %345, %346 : vector<8x128xf32>
    %348 = math.tanh %347 : vector<8x128xf32>
    %349 = arith.mulf %344, %348 : vector<8x128xf32>
    %c2_i32_101 = arith.constant 2 : i32
    %c8_i32_102 = arith.constant 8 : i32
    %350 = arith.muli %c2_i32_101, %c8_i32_102 : i32
    %351 = tpu.assume_multiple %350, 8 : i32
    %352 = arith.index_cast %351 : i32 to index
    %c0_103 = arith.constant 0 : index
    %353 = vector.load %arg17[%352, %c0_103] : memref<64x512xf32, #tpu.memory_space<vmem>>, vector<8x512xf32>
    %cst_104 = arith.constant dense<0.000000e+00> : vector<8x512xf32>
    %354 = tpu.matmul %349, %283, %cst_104 {dimension_numbers = #tpu.dot_dimension_numbers<[1], [0], [0], [1], [0, 0, 1, 1], [], []>} : vector<8x128xf32>, vector<128x512xf32>, vector<8x512xf32> -> vector<8x512xf32>
    %355 = arith.addf %353, %354 : vector<8x512xf32>
    %356 = vector.extract_strided_slice %355 {offsets = [0, 0], sizes = [8, 128], strides = [1, 1]} : vector<8x512xf32> to vector<8x128xf32>
    %357 = arith.negf %356 : vector<8x128xf32>
    %358 = math.exp %357 : vector<8x128xf32>
    %cst_105 = arith.constant 1.000000e+00 : f32
    %359 = vector.broadcast %cst_105 : f32 to vector<8x128xf32>
    %360 = arith.addf %359, %358 : vector<8x128xf32>
    %361 = arith.divf %359, %360 : vector<8x128xf32>
    %362 = vector.extract_strided_slice %355 {offsets = [0, 128], sizes = [8, 128], strides = [1, 1]} : vector<8x512xf32> to vector<8x128xf32>
    %363 = arith.negf %362 : vector<8x128xf32>
    %364 = math.exp %363 : vector<8x128xf32>
    %cst_106 = arith.constant 1.000000e+00 : f32
    %365 = vector.broadcast %cst_106 : f32 to vector<8x128xf32>
    %366 = arith.addf %365, %364 : vector<8x128xf32>
    %367 = arith.divf %365, %366 : vector<8x128xf32>
    %368 = vector.extract_strided_slice %355 {offsets = [0, 256], sizes = [8, 128], strides = [1, 1]} : vector<8x512xf32> to vector<8x128xf32>
    %369 = math.tanh %368 : vector<8x128xf32>
    %370 = vector.extract_strided_slice %355 {offsets = [0, 384], sizes = [8, 128], strides = [1, 1]} : vector<8x512xf32> to vector<8x128xf32>
    %371 = arith.negf %370 : vector<8x128xf32>
    %372 = math.exp %371 : vector<8x128xf32>
    %cst_107 = arith.constant 1.000000e+00 : f32
    %373 = vector.broadcast %cst_107 : f32 to vector<8x128xf32>
    %374 = arith.addf %373, %372 : vector<8x128xf32>
    %375 = arith.divf %373, %374 : vector<8x128xf32>
    %376 = arith.mulf %367, %347 : vector<8x128xf32>
    %377 = arith.mulf %361, %369 : vector<8x128xf32>
    %378 = arith.addf %376, %377 : vector<8x128xf32>
    %379 = math.tanh %378 : vector<8x128xf32>
    %380 = arith.mulf %375, %379 : vector<8x128xf32>
    %c3_i32_108 = arith.constant 3 : i32
    %c8_i32_109 = arith.constant 8 : i32
    %381 = arith.muli %c3_i32_108, %c8_i32_109 : i32
    %382 = tpu.assume_multiple %381, 8 : i32
    %383 = arith.index_cast %382 : i32 to index
    %c0_110 = arith.constant 0 : index
    %384 = vector.load %arg17[%383, %c0_110] : memref<64x512xf32, #tpu.memory_space<vmem>>, vector<8x512xf32>
    %cst_111 = arith.constant dense<0.000000e+00> : vector<8x512xf32>
    %385 = tpu.matmul %380, %283, %cst_111 {dimension_numbers = #tpu.dot_dimension_numbers<[1], [0], [0], [1], [0, 0, 1, 1], [], []>} : vector<8x128xf32>, vector<128x512xf32>, vector<8x512xf32> -> vector<8x512xf32>
    %386 = arith.addf %384, %385 : vector<8x512xf32>
    %387 = vector.extract_strided_slice %386 {offsets = [0, 0], sizes = [8, 128], strides = [1, 1]} : vector<8x512xf32> to vector<8x128xf32>
    %388 = arith.negf %387 : vector<8x128xf32>
    %389 = math.exp %388 : vector<8x128xf32>
    %cst_112 = arith.constant 1.000000e+00 : f32
    %390 = vector.broadcast %cst_112 : f32 to vector<8x128xf32>
    %391 = arith.addf %390, %389 : vector<8x128xf32>
    %392 = arith.divf %390, %391 : vector<8x128xf32>
    %393 = vector.extract_strided_slice %386 {offsets = [0, 128], sizes = [8, 128], strides = [1, 1]} : vector<8x512xf32> to vector<8x128xf32>
    %394 = arith.negf %393 : vector<8x128xf32>
    %395 = math.exp %394 : vector<8x128xf32>
    %cst_113 = arith.constant 1.000000e+00 : f32
    %396 = vector.broadcast %cst_113 : f32 to vector<8x128xf32>
    %397 = arith.addf %396, %395 : vector<8x128xf32>
    %398 = arith.divf %396, %397 : vector<8x128xf32>
    %399 = vector.extract_strided_slice %386 {offsets = [0, 256], sizes = [8, 128], strides = [1, 1]} : vector<8x512xf32> to vector<8x128xf32>
    %400 = math.tanh %399 : vector<8x128xf32>
    %401 = vector.extract_strided_slice %386 {offsets = [0, 384], sizes = [8, 128], strides = [1, 1]} : vector<8x512xf32> to vector<8x128xf32>
    %402 = arith.negf %401 : vector<8x128xf32>
    %403 = math.exp %402 : vector<8x128xf32>
    %cst_114 = arith.constant 1.000000e+00 : f32
    %404 = vector.broadcast %cst_114 : f32 to vector<8x128xf32>
    %405 = arith.addf %404, %403 : vector<8x128xf32>
    %406 = arith.divf %404, %405 : vector<8x128xf32>
    %407 = arith.mulf %398, %378 : vector<8x128xf32>
    %408 = arith.mulf %392, %400 : vector<8x128xf32>
    %409 = arith.addf %407, %408 : vector<8x128xf32>
    %410 = math.tanh %409 : vector<8x128xf32>
    %411 = arith.mulf %406, %410 : vector<8x128xf32>
    %c4_i32_115 = arith.constant 4 : i32
    %c8_i32_116 = arith.constant 8 : i32
    %412 = arith.muli %c4_i32_115, %c8_i32_116 : i32
    %413 = tpu.assume_multiple %412, 8 : i32
    %414 = arith.index_cast %413 : i32 to index
    %c0_117 = arith.constant 0 : index
    %415 = vector.load %arg17[%414, %c0_117] : memref<64x512xf32, #tpu.memory_space<vmem>>, vector<8x512xf32>
    %cst_118 = arith.constant dense<0.000000e+00> : vector<8x512xf32>
    %416 = tpu.matmul %411, %283, %cst_118 {dimension_numbers = #tpu.dot_dimension_numbers<[1], [0], [0], [1], [0, 0, 1, 1], [], []>} : vector<8x128xf32>, vector<128x512xf32>, vector<8x512xf32> -> vector<8x512xf32>
    %417 = arith.addf %415, %416 : vector<8x512xf32>
    %418 = vector.extract_strided_slice %417 {offsets = [0, 0], sizes = [8, 128], strides = [1, 1]} : vector<8x512xf32> to vector<8x128xf32>
    %419 = arith.negf %418 : vector<8x128xf32>
    %420 = math.exp %419 : vector<8x128xf32>
    %cst_119 = arith.constant 1.000000e+00 : f32
    %421 = vector.broadcast %cst_119 : f32 to vector<8x128xf32>
    %422 = arith.addf %421, %420 : vector<8x128xf32>
    %423 = arith.divf %421, %422 : vector<8x128xf32>
    %424 = vector.extract_strided_slice %417 {offsets = [0, 128], sizes = [8, 128], strides = [1, 1]} : vector<8x512xf32> to vector<8x128xf32>
    %425 = arith.negf %424 : vector<8x128xf32>
    %426 = math.exp %425 : vector<8x128xf32>
    %cst_120 = arith.constant 1.000000e+00 : f32
    %427 = vector.broadcast %cst_120 : f32 to vector<8x128xf32>
    %428 = arith.addf %427, %426 : vector<8x128xf32>
    %429 = arith.divf %427, %428 : vector<8x128xf32>
    %430 = vector.extract_strided_slice %417 {offsets = [0, 256], sizes = [8, 128], strides = [1, 1]} : vector<8x512xf32> to vector<8x128xf32>
    %431 = math.tanh %430 : vector<8x128xf32>
    %432 = vector.extract_strided_slice %417 {offsets = [0, 384], sizes = [8, 128], strides = [1, 1]} : vector<8x512xf32> to vector<8x128xf32>
    %433 = arith.negf %432 : vector<8x128xf32>
    %434 = math.exp %433 : vector<8x128xf32>
    %cst_121 = arith.constant 1.000000e+00 : f32
    %435 = vector.broadcast %cst_121 : f32 to vector<8x128xf32>
    %436 = arith.addf %435, %434 : vector<8x128xf32>
    %437 = arith.divf %435, %436 : vector<8x128xf32>
    %438 = arith.mulf %429, %409 : vector<8x128xf32>
    %439 = arith.mulf %423, %431 : vector<8x128xf32>
    %440 = arith.addf %438, %439 : vector<8x128xf32>
    %441 = math.tanh %440 : vector<8x128xf32>
    %442 = arith.mulf %437, %441 : vector<8x128xf32>
    %c5_i32_122 = arith.constant 5 : i32
    %c8_i32_123 = arith.constant 8 : i32
    %443 = arith.muli %c5_i32_122, %c8_i32_123 : i32
    %444 = tpu.assume_multiple %443, 8 : i32
    %445 = arith.index_cast %444 : i32 to index
    %c0_124 = arith.constant 0 : index
    %446 = vector.load %arg17[%445, %c0_124] : memref<64x512xf32, #tpu.memory_space<vmem>>, vector<8x512xf32>
    %cst_125 = arith.constant dense<0.000000e+00> : vector<8x512xf32>
    %447 = tpu.matmul %442, %283, %cst_125 {dimension_numbers = #tpu.dot_dimension_numbers<[1], [0], [0], [1], [0, 0, 1, 1], [], []>} : vector<8x128xf32>, vector<128x512xf32>, vector<8x512xf32> -> vector<8x512xf32>
    %448 = arith.addf %446, %447 : vector<8x512xf32>
    %449 = vector.extract_strided_slice %448 {offsets = [0, 0], sizes = [8, 128], strides = [1, 1]} : vector<8x512xf32> to vector<8x128xf32>
    %450 = arith.negf %449 : vector<8x128xf32>
    %451 = math.exp %450 : vector<8x128xf32>
    %cst_126 = arith.constant 1.000000e+00 : f32
    %452 = vector.broadcast %cst_126 : f32 to vector<8x128xf32>
    %453 = arith.addf %452, %451 : vector<8x128xf32>
    %454 = arith.divf %452, %453 : vector<8x128xf32>
    %455 = vector.extract_strided_slice %448 {offsets = [0, 128], sizes = [8, 128], strides = [1, 1]} : vector<8x512xf32> to vector<8x128xf32>
    %456 = arith.negf %455 : vector<8x128xf32>
    %457 = math.exp %456 : vector<8x128xf32>
    %cst_127 = arith.constant 1.000000e+00 : f32
    %458 = vector.broadcast %cst_127 : f32 to vector<8x128xf32>
    %459 = arith.addf %458, %457 : vector<8x128xf32>
    %460 = arith.divf %458, %459 : vector<8x128xf32>
    %461 = vector.extract_strided_slice %448 {offsets = [0, 256], sizes = [8, 128], strides = [1, 1]} : vector<8x512xf32> to vector<8x128xf32>
    %462 = math.tanh %461 : vector<8x128xf32>
    %463 = vector.extract_strided_slice %448 {offsets = [0, 384], sizes = [8, 128], strides = [1, 1]} : vector<8x512xf32> to vector<8x128xf32>
    %464 = arith.negf %463 : vector<8x128xf32>
    %465 = math.exp %464 : vector<8x128xf32>
    %cst_128 = arith.constant 1.000000e+00 : f32
    %466 = vector.broadcast %cst_128 : f32 to vector<8x128xf32>
    %467 = arith.addf %466, %465 : vector<8x128xf32>
    %468 = arith.divf %466, %467 : vector<8x128xf32>
    %469 = arith.mulf %460, %440 : vector<8x128xf32>
    %470 = arith.mulf %454, %462 : vector<8x128xf32>
    %471 = arith.addf %469, %470 : vector<8x128xf32>
    %472 = math.tanh %471 : vector<8x128xf32>
    %473 = arith.mulf %468, %472 : vector<8x128xf32>
    %c6_i32_129 = arith.constant 6 : i32
    %c8_i32_130 = arith.constant 8 : i32
    %474 = arith.muli %c6_i32_129, %c8_i32_130 : i32
    %475 = tpu.assume_multiple %474, 8 : i32
    %476 = arith.index_cast %475 : i32 to index
    %c0_131 = arith.constant 0 : index
    %477 = vector.load %arg17[%476, %c0_131] : memref<64x512xf32, #tpu.memory_space<vmem>>, vector<8x512xf32>
    %cst_132 = arith.constant dense<0.000000e+00> : vector<8x512xf32>
    %478 = tpu.matmul %473, %283, %cst_132 {dimension_numbers = #tpu.dot_dimension_numbers<[1], [0], [0], [1], [0, 0, 1, 1], [], []>} : vector<8x128xf32>, vector<128x512xf32>, vector<8x512xf32> -> vector<8x512xf32>
    %479 = arith.addf %477, %478 : vector<8x512xf32>
    %480 = vector.extract_strided_slice %479 {offsets = [0, 0], sizes = [8, 128], strides = [1, 1]} : vector<8x512xf32> to vector<8x128xf32>
    %481 = arith.negf %480 : vector<8x128xf32>
    %482 = math.exp %481 : vector<8x128xf32>
    %cst_133 = arith.constant 1.000000e+00 : f32
    %483 = vector.broadcast %cst_133 : f32 to vector<8x128xf32>
    %484 = arith.addf %483, %482 : vector<8x128xf32>
    %485 = arith.divf %483, %484 : vector<8x128xf32>
    %486 = vector.extract_strided_slice %479 {offsets = [0, 128], sizes = [8, 128], strides = [1, 1]} : vector<8x512xf32> to vector<8x128xf32>
    %487 = arith.negf %486 : vector<8x128xf32>
    %488 = math.exp %487 : vector<8x128xf32>
    %cst_134 = arith.constant 1.000000e+00 : f32
    %489 = vector.broadcast %cst_134 : f32 to vector<8x128xf32>
    %490 = arith.addf %489, %488 : vector<8x128xf32>
    %491 = arith.divf %489, %490 : vector<8x128xf32>
    %492 = vector.extract_strided_slice %479 {offsets = [0, 256], sizes = [8, 128], strides = [1, 1]} : vector<8x512xf32> to vector<8x128xf32>
    %493 = math.tanh %492 : vector<8x128xf32>
    %494 = vector.extract_strided_slice %479 {offsets = [0, 384], sizes = [8, 128], strides = [1, 1]} : vector<8x512xf32> to vector<8x128xf32>
    %495 = arith.negf %494 : vector<8x128xf32>
    %496 = math.exp %495 : vector<8x128xf32>
    %cst_135 = arith.constant 1.000000e+00 : f32
    %497 = vector.broadcast %cst_135 : f32 to vector<8x128xf32>
    %498 = arith.addf %497, %496 : vector<8x128xf32>
    %499 = arith.divf %497, %498 : vector<8x128xf32>
    %500 = arith.mulf %491, %471 : vector<8x128xf32>
    %501 = arith.mulf %485, %493 : vector<8x128xf32>
    %502 = arith.addf %500, %501 : vector<8x128xf32>
    %503 = math.tanh %502 : vector<8x128xf32>
    %504 = arith.mulf %499, %503 : vector<8x128xf32>
    %c7_i32_136 = arith.constant 7 : i32
    %c8_i32_137 = arith.constant 8 : i32
    %505 = arith.muli %c7_i32_136, %c8_i32_137 : i32
    %506 = tpu.assume_multiple %505, 8 : i32
    %507 = arith.index_cast %506 : i32 to index
    %c0_138 = arith.constant 0 : index
    %508 = vector.load %arg17[%507, %c0_138] : memref<64x512xf32, #tpu.memory_space<vmem>>, vector<8x512xf32>
    %cst_139 = arith.constant dense<0.000000e+00> : vector<8x512xf32>
    %509 = tpu.matmul %504, %283, %cst_139 {dimension_numbers = #tpu.dot_dimension_numbers<[1], [0], [0], [1], [0, 0, 1, 1], [], []>} : vector<8x128xf32>, vector<128x512xf32>, vector<8x512xf32> -> vector<8x512xf32>
    %510 = arith.addf %508, %509 : vector<8x512xf32>
    %511 = vector.extract_strided_slice %510 {offsets = [0, 0], sizes = [8, 128], strides = [1, 1]} : vector<8x512xf32> to vector<8x128xf32>
    %512 = arith.negf %511 : vector<8x128xf32>
    %513 = math.exp %512 : vector<8x128xf32>
    %cst_140 = arith.constant 1.000000e+00 : f32
    %514 = vector.broadcast %cst_140 : f32 to vector<8x128xf32>
    %515 = arith.addf %514, %513 : vector<8x128xf32>
    %516 = arith.divf %514, %515 : vector<8x128xf32>
    %517 = vector.extract_strided_slice %510 {offsets = [0, 128], sizes = [8, 128], strides = [1, 1]} : vector<8x512xf32> to vector<8x128xf32>
    %518 = arith.negf %517 : vector<8x128xf32>
    %519 = math.exp %518 : vector<8x128xf32>
    %cst_141 = arith.constant 1.000000e+00 : f32
    %520 = vector.broadcast %cst_141 : f32 to vector<8x128xf32>
    %521 = arith.addf %520, %519 : vector<8x128xf32>
    %522 = arith.divf %520, %521 : vector<8x128xf32>
    %523 = vector.extract_strided_slice %510 {offsets = [0, 256], sizes = [8, 128], strides = [1, 1]} : vector<8x512xf32> to vector<8x128xf32>
    %524 = math.tanh %523 : vector<8x128xf32>
    %525 = vector.extract_strided_slice %510 {offsets = [0, 384], sizes = [8, 128], strides = [1, 1]} : vector<8x512xf32> to vector<8x128xf32>
    %526 = arith.negf %525 : vector<8x128xf32>
    %527 = math.exp %526 : vector<8x128xf32>
    %cst_142 = arith.constant 1.000000e+00 : f32
    %528 = vector.broadcast %cst_142 : f32 to vector<8x128xf32>
    %529 = arith.addf %528, %527 : vector<8x128xf32>
    %530 = arith.divf %528, %529 : vector<8x128xf32>
    %531 = arith.mulf %522, %502 : vector<8x128xf32>
    %532 = arith.mulf %516, %524 : vector<8x128xf32>
    %533 = arith.addf %531, %532 : vector<8x128xf32>
    %534 = math.tanh %533 : vector<8x128xf32>
    %535 = arith.mulf %530, %534 : vector<8x128xf32>
    %c8_i32_143 = arith.constant 8 : i32
    %c0_144 = arith.constant 0 : index
    %c0_145 = arith.constant 0 : index
    %536 = vector.load %arg10[%c0_144, %c0_145] : memref<128x128xf32, #tpu.memory_space<vmem>>, vector<128x128xf32>
    %cst_146 = arith.constant dense<0.000000e+00> : vector<8x128xf32>
    %537 = tpu.matmul %535, %536, %cst_146 {dimension_numbers = #tpu.dot_dimension_numbers<[1], [0], [0], [1], [0, 0, 1, 1], [], []>} : vector<8x128xf32>, vector<128x128xf32>, vector<8x128xf32> -> vector<8x128xf32>
    %c0_147 = arith.constant 0 : index
    %c0_148 = arith.constant 0 : index
    %538 = vector.load %arg11[%c0_147, %c0_148] : memref<1x128xf32, #tpu.memory_space<vmem>>, vector<1x128xf32>
    %539 = vector.broadcast %538 : vector<1x128xf32> to vector<8x128xf32>
    %540 = arith.addf %537, %539 : vector<8x128xf32>
    %c0_149 = arith.constant 0 : index
    %c0_150 = arith.constant 0 : index
    %541 = vector.load %arg12[%c0_149, %c0_150] : memref<128x2xf32, #tpu.memory_space<vmem>>, vector<128x2xf32>
    %cst_151 = arith.constant dense<0.000000e+00> : vector<8x2xf32>
    %542 = tpu.matmul %540, %541, %cst_151 {dimension_numbers = #tpu.dot_dimension_numbers<[1], [0], [0], [1], [0, 0, 1, 1], [], []>} : vector<8x128xf32>, vector<128x2xf32>, vector<8x2xf32> -> vector<8x2xf32>
    %c0_152 = arith.constant 0 : index
    %c0_153 = arith.constant 0 : index
    %543 = vector.load %arg13[%c0_152, %c0_153] : memref<1x2xf32, #tpu.memory_space<vmem>>, vector<1x2xf32>
    %544 = vector.broadcast %543 : vector<1x2xf32> to vector<8x2xf32>
    %545 = arith.addf %542, %544 : vector<8x2xf32>
    %cst_154 = arith.constant dense<0xFF800000> : vector<8xf32>
    %546 = vector.multi_reduction <maximumf>, %545, %cst_154 [1] : vector<8x2xf32> to vector<8xf32>
    %547 = vector.shape_cast %546 : vector<8xf32> to vector<8x1xf32>
    %548 = vector.broadcast %547 : vector<8x1xf32> to vector<8x2xf32>
    %549 = arith.subf %545, %548 : vector<8x2xf32>
    %550 = math.exp %549 : vector<8x2xf32>
    %cst_155 = arith.constant dense<0.000000e+00> : vector<8xf32>
    %551 = vector.multi_reduction <add>, %550, %cst_155 [1] : vector<8x2xf32> to vector<8xf32>
    %552 = vector.shape_cast %551 : vector<8xf32> to vector<8x1xf32>
    %553 = tpu.reciprocal %552 {approx = true} : vector<8x1xf32> -> vector<8x1xf32>
    %554 = vector.broadcast %553 : vector<8x1xf32> to vector<8x2xf32>
    %555 = arith.mulf %550, %554 : vector<8x2xf32>
    %c0_156 = arith.constant 0 : index
    %c0_157 = arith.constant 0 : index
    %556 = vector.load %arg14[%c0_156, %c0_157] : memref<8x2xf32, #tpu.memory_space<vmem>>, vector<8x2xf32>
    tpu.vector_store %arg14[%c0_156, %c0_157], %555 {strides = array<i32>} : memref<8x2xf32, #tpu.memory_space<vmem>>, vector<8x2xf32>,
    %c0_158 = arith.constant 0 : index
    %c0_159 = arith.constant 0 : index
    %c0_160 = arith.constant 0 : index
    %557 = vector.load %arg15[%c0_158, %c0_159, %c0_160] : memref<2x8x128xf32, #tpu.memory_space<vmem>>, vector<1x8x128xf32>
    %558 = vector.shape_cast %557 : vector<1x8x128xf32> to vector<8x128xf32>
    %559 = vector.shape_cast %273 : vector<8x128xf32> to vector<1x8x128xf32>
    tpu.vector_store %arg15[%c0_158, %c0_159, %c0_160], %559 {strides = array<i32>} : memref<2x8x128xf32, #tpu.memory_space<vmem>>, vector<1x8x128xf32>,
    %c1_161 = arith.constant 1 : index
    %c0_162 = arith.constant 0 : index
    %c0_163 = arith.constant 0 : index
    %560 = vector.load %arg15[%c1_161, %c0_162, %c0_163] : memref<2x8x128xf32, #tpu.memory_space<vmem>>, vector<1x8x128xf32>
    %561 = vector.shape_cast %560 : vector<1x8x128xf32> to vector<8x128xf32>
    %562 = vector.shape_cast %535 : vector<8x128xf32> to vector<1x8x128xf32>
    tpu.vector_store %arg15[%c1_161, %c0_162, %c0_163], %562 {strides = array<i32>} : memref<2x8x128xf32, #tpu.memory_space<vmem>>, vector<1x8x128xf32>,
    %c0_164 = arith.constant 0 : index
    %c0_165 = arith.constant 0 : index
    %c0_166 = arith.constant 0 : index
    %563 = vector.load %arg16[%c0_164, %c0_165, %c0_166] : memref<2x8x128xf32, #tpu.memory_space<vmem>>, vector<1x8x128xf32>
    %564 = vector.shape_cast %563 : vector<1x8x128xf32> to vector<8x128xf32>
    %565 = vector.shape_cast %271 : vector<8x128xf32> to vector<1x8x128xf32>
    tpu.vector_store %arg16[%c0_164, %c0_165, %c0_166], %565 {strides = array<i32>} : memref<2x8x128xf32, #tpu.memory_space<vmem>>, vector<1x8x128xf32>,
    %c1_167 = arith.constant 1 : index
    %c0_168 = arith.constant 0 : index
    %c0_169 = arith.constant 0 : index
    %566 = vector.load %arg16[%c1_167, %c0_168, %c0_169] : memref<2x8x128xf32, #tpu.memory_space<vmem>>, vector<1x8x128xf32>
    %567 = vector.shape_cast %566 : vector<1x8x128xf32> to vector<8x128xf32>
    %568 = vector.shape_cast %533 : vector<8x128xf32> to vector<1x8x128xf32>
    tpu.vector_store %arg16[%c1_167, %c0_168, %c0_169], %568 {strides = array<i32>} : memref<2x8x128xf32, #tpu.memory_space<vmem>>, vector<1x8x128xf32>,
    return
  }
  func.func @transform_0(%arg0: i32) -> (i32, i32) {
    %c0_i32 = arith.constant 0 : i32
    %c0_i32_0 = arith.constant 0 : i32
    %c0_i32_1 = arith.constant 0 : i32
    return %c0_i32, %c0_i32_0 : i32, i32
  }
  func.func @transform_1(%arg0: i32) -> (i32, i32) {
    %c0_i32 = arith.constant 0 : i32
    %c0_i32_0 = arith.constant 0 : i32
    %c0_i32_1 = arith.constant 0 : i32
    return %c0_i32, %c0_i32_0 : i32, i32
  }
  func.func @transform_2(%arg0: i32) -> (i32, i32) {
    %c0_i32 = arith.constant 0 : i32
    %c0_i32_0 = arith.constant 0 : i32
    %c0_i32_1 = arith.constant 0 : i32
    return %c0_i32, %c0_i32_0 : i32, i32
  }
  func.func @transform_3(%arg0: i32) -> (i32, i32) {
    %c0_i32 = arith.constant 0 : i32
    %c0_i32_0 = arith.constant 0 : i32
    %c0_i32_1 = arith.constant 0 : i32
    return %c0_i32, %c0_i32_0 : i32, i32
  }
  func.func @transform_4(%arg0: i32) -> (i32, i32) {
    %c0_i32 = arith.constant 0 : i32
    %c0_i32_0 = arith.constant 0 : i32
    %c0_i32_1 = arith.constant 0 : i32
    return %c0_i32, %c0_i32_0 : i32, i32
  }
  func.func @transform_5(%arg0: i32) -> (i32, i32) {
    %c0_i32 = arith.constant 0 : i32
    %c0_i32_0 = arith.constant 0 : i32
    %c0_i32_1 = arith.constant 0 : i32
    return %c0_i32, %c0_i32_0 : i32, i32
  }
  func.func @transform_6(%arg0: i32) -> (i32, i32) {
    %c0_i32 = arith.constant 0 : i32
    %c0_i32_0 = arith.constant 0 : i32
    %c0_i32_1 = arith.constant 0 : i32
    return %c0_i32, %c0_i32_0 : i32, i32
  }
  func.func @transform_7(%arg0: i32) -> (i32, i32, i32) {
    %c0_i32 = arith.constant 0 : i32
    %c0_i32_0 = arith.constant 0 : i32
    %c0_i32_1 = arith.constant 0 : i32
    %c0_i32_2 = arith.constant 0 : i32
    return %c0_i32, %c0_i32_0, %c0_i32_1 : i32, i32, i32
  }
  func.func @transform_8(%arg0: i32) -> (i32, i32, i32) {
    %c0_i32 = arith.constant 0 : i32
    %c0_i32_0 = arith.constant 0 : i32
    %c0_i32_1 = arith.constant 0 : i32
    %c0_i32_2 = arith.constant 0 : i32
    return %c0_i32, %c0_i32_0, %c0_i32_1 : i32, i32, i32
  }
  func.func @transform_9(%arg0: i32) -> (i32, i32) {
    %c0_i32 = arith.constant 0 : i32
    %c0_i32_0 = arith.constant 0 : i32
    %c0_i32_1 = arith.constant 0 : i32
    return %c0_i32, %c0_i32_0 : i32, i32
  }
  func.func @transform_10(%arg0: i32) -> (i32, i32) {
    %c0_i32 = arith.constant 0 : i32
    %c0_i32_0 = arith.constant 0 : i32
    %c0_i32_1 = arith.constant 0 : i32
    return %c0_i32, %c0_i32_0 : i32, i32
  }
  func.func @transform_11(%arg0: i32) -> (i32, i32) {
    %c0_i32 = arith.constant 0 : i32
    %c0_i32_0 = arith.constant 0 : i32
    %c0_i32_1 = arith.constant 0 : i32
    return %c0_i32, %c0_i32_0 : i32, i32
  }
  func.func @transform_12(%arg0: i32) -> (i32, i32) {
    %c0_i32 = arith.constant 0 : i32
    %c0_i32_0 = arith.constant 0 : i32
    %c0_i32_1 = arith.constant 0 : i32
    return %c0_i32, %c0_i32_0 : i32, i32
  }
  func.func @transform_13(%arg0: i32) -> (i32, i32) {
    %c0_i32 = arith.constant 0 : i32
    %c0_i32_0 = arith.constant 0 : i32
    %c0_i32_1 = arith.constant 0 : i32
    return %c0_i32, %c0_i32_0 : i32, i32
  }
  func.func @transform_14(%arg0: i32) -> (i32, i32, i32) {
    %c0_i32 = arith.constant 0 : i32
    %c0_i32_0 = arith.constant 0 : i32
    %c0_i32_1 = arith.constant 0 : i32
    %c0_i32_2 = arith.constant 0 : i32
    return %c0_i32, %c0_i32_0, %c0_i32_1 : i32, i32, i32
  }
  func.func @transform_15(%arg0: i32) -> (i32, i32, i32) {
    %c0_i32 = arith.constant 0 : i32
    %c0_i32_0 = arith.constant 0 : i32
    %c0_i32_1 = arith.constant 0 : i32
    %c0_i32_2 = arith.constant 0 : i32
    return %c0_i32, %c0_i32_0, %c0_i32_1 : i32, i32, i32
  }
}

</mosaic_0001>

<llo_original>
// kernel: my_lstm_forward.1
$region0: #{my_lstm_forward.1}
  #allocation0 [shape = 'u32[]', space=smem, size = 0x4, offset = 0x4, fixed_abs, tag = 'smem constant byte address 0x4 - core index']
  #allocation1 [shape = 'u32[144,128]{1,0:T(1,128)}', space=vmem, size = 0x12000, scoped, tag = 'internal scratch']
  #allocation2 [shape = 'f32[64,512]{1,0:T(8,128)}', space=vmem, size = 0x20000, scoped, tag = 'scratch operand']
  #allocation3 [shape = 'f32[64,128]{1,0:T(8,128)}', space=vmem, size = 0x8000, scoped, tag = 'scratch operand']
  %s0 = inlined_call_operand.vmem [shape: f32[64,256], index: 0, kind: input, shape index: {}]
  %s1 = inlined_call_operand.vmem [shape: f32[256,512], index: 1, kind: input, shape index: {}]
  %s2 = inlined_call_operand.vmem [shape: f32[128,512], index: 2, kind: input, shape index: {}]
  %s3 = inlined_call_operand.vmem [shape: f32[1,512], index: 3, kind: input, shape index: {}]
  %s4 = inlined_call_operand.vmem [shape: f32[128,512], index: 4, kind: input, shape index: {}]
  %s5 = inlined_call_operand.vmem [shape: f32[128,512], index: 5, kind: input, shape index: {}]
  %s6 = inlined_call_operand.vmem [shape: f32[1,512], index: 6, kind: input, shape index: {}]
  %s7 = inlined_call_operand.vmem [shape: f32[2,8,128], index: 7, kind: input, shape index: {}]
  %s8 = inlined_call_operand.vmem [shape: f32[2,8,128], index: 8, kind: input, shape index: {}]
  %s9 = inlined_call_operand.vmem [shape: f32[128,128], index: 9, kind: input, shape index: {}]
  %s10 = inlined_call_operand.vmem [shape: f32[1,128], index: 10, kind: input, shape index: {}]
  %s11 = inlined_call_operand.vmem [shape: f32[128,2], index: 11, kind: input, shape index: {}]
  %s12 = inlined_call_operand.vmem [shape: f32[1,2], index: 12, kind: input, shape index: {}]
  %s13 = inlined_call_operand.vmem [shape: f32[8,2], index: 13, kind: output, shape index: {0}]
  %s14 = inlined_call_operand.vmem [shape: f32[2,8,128], index: 14, kind: output, shape index: {1}]
  %s15 = inlined_call_operand.vmem [shape: f32[2,8,128], index: 15, kind: output, shape index: {2}]
  %16 = xla_tuple %s13, %s14, %s15
  %s17 = sld [smem:[#allocation0]]
  $region78: #{my_lstm_forward.1} parent=0
    _
  %s19 = ssub.s32 1, %s17
  %s20 = scalar_select 0, %s19, %s17
  // Predicated region
  $region2: #{my_lstm_forward.1} parent=0 // pred_check
    _
  $region3: #{my_lstm_forward.1} parent=0 // pred_check_branch
    %22 = sbr.rel (0) target = $region5
  $region4: #{my_lstm_forward.1} parent=0 // pred_region
    _
  $region5: #{my_lstm_forward.1} parent=0 // pred_fallthru
    _
  // Predicated region
  $region6: #{my_lstm_forward.1} parent=0 // pred_check
    _
  $region7: #{my_lstm_forward.1} parent=0 // pred_check_branch
    %24 = sbr.rel (0) target = $region9
  $region8: #{my_lstm_forward.1} parent=0 // pred_region
    _
  $region9: #{my_lstm_forward.1} parent=0 // pred_fallthru
    _
  // Predicated region
  $region10: #{my_lstm_forward.1} parent=0 // pred_check
    _
  $region11: #{my_lstm_forward.1} parent=0 // pred_check_branch
    %26 = sbr.rel (0) target = $region13
  $region12: #{my_lstm_forward.1} parent=0 // pred_region
    _
  $region13: #{my_lstm_forward.1} parent=0 // pred_fallthru
    _
  // Predicated region
  $region14: #{my_lstm_forward.1} parent=0 // pred_check
    _
  $region15: #{my_lstm_forward.1} parent=0 // pred_check_branch
    %28 = sbr.rel (0) target = $region17
  $region16: #{my_lstm_forward.1} parent=0 // pred_region
    _
  $region17: #{my_lstm_forward.1} parent=0 // pred_fallthru
    _
  // Predicated region
  $region18: #{my_lstm_forward.1} parent=0 // pred_check
    _
  $region19: #{my_lstm_forward.1} parent=0 // pred_check_branch
    %30 = sbr.rel (0) target = $region21
  $region20: #{my_lstm_forward.1} parent=0 // pred_region
    _
  $region21: #{my_lstm_forward.1} parent=0 // pred_fallthru
    _
  // Predicated region
  $region22: #{my_lstm_forward.1} parent=0 // pred_check
    _
  $region23: #{my_lstm_forward.1} parent=0 // pred_check_branch
    %32 = sbr.rel (0) target = $region25
  $region24: #{my_lstm_forward.1} parent=0 // pred_region
    _
  $region25: #{my_lstm_forward.1} parent=0 // pred_fallthru
    _
  // Predicated region
  $region26: #{my_lstm_forward.1} parent=0 // pred_check
    _
  $region27: #{my_lstm_forward.1} parent=0 // pred_check_branch
    %34 = sbr.rel (0) target = $region29
  $region28: #{my_lstm_forward.1} parent=0 // pred_region
    _
  $region29: #{my_lstm_forward.1} parent=0 // pred_fallthru
    _
  // Predicated region
  $region30: #{my_lstm_forward.1} parent=0 // pred_check
    _
  $region31: #{my_lstm_forward.1} parent=0 // pred_check_branch
    %36 = sbr.rel (0) target = $region33
  $region32: #{my_lstm_forward.1} parent=0 // pred_region
    _
  $region33: #{my_lstm_forward.1} parent=0 // pred_fallthru
    _
  // Predicated region
  $region34: #{my_lstm_forward.1} parent=0 // pred_check
    _
  $region35: #{my_lstm_forward.1} parent=0 // pred_check_branch
    %38 = sbr.rel (0) target = $region37
  $region36: #{my_lstm_forward.1} parent=0 // pred_region
    _
  $region37: #{my_lstm_forward.1} parent=0 // pred_fallthru
    _
  // Predicated region
  $region38: #{my_lstm_forward.1} parent=0 // pred_check
    _
  $region39: #{my_lstm_forward.1} parent=0 // pred_check_branch
    %40 = sbr.rel (0) target = $region41
  $region40: #{my_lstm_forward.1} parent=0 // pred_region
    _
  $region41: #{my_lstm_forward.1} parent=0 // pred_fallthru
    _
  // Predicated region
  $region42: #{my_lstm_forward.1} parent=0 // pred_check
    _
  $region43: #{my_lstm_forward.1} parent=0 // pred_check_branch
    %42 = sbr.rel (0) target = $region45
  $region44: #{my_lstm_forward.1} parent=0 // pred_region
    _
  $region45: #{my_lstm_forward.1} parent=0 // pred_fallthru
    _
  // Predicated region
  $region46: #{my_lstm_forward.1} parent=0 // pred_check
    _
  $region47: #{my_lstm_forward.1} parent=0 // pred_check_branch
    %44 = sbr.rel (0) target = $region49
  $region48: #{my_lstm_forward.1} parent=0 // pred_region
    _
  $region49: #{my_lstm_forward.1} parent=0 // pred_fallthru
    _
  // Predicated region
  $region50: #{my_lstm_forward.1} parent=0 // pred_check
    _
  $region51: #{my_lstm_forward.1} parent=0 // pred_check_branch
    %46 = sbr.rel (0) target = $region53
  $region52: #{my_lstm_forward.1} parent=0 // pred_region
    _
  $region53: #{my_lstm_forward.1} parent=0 // pred_fallthru
    _
  %v47 = vld [vmem:[%s0] sm:$0xff]
  %v48 = vld [vmem:[%s0 + $0x8] sm:$0xff]
  %v49 = vld [vmem:[%s0 + $0x10] sm:$0xff]
  %v50 = vld [vmem:[%s0 + $0x18] sm:$0xff]
  %v51 = vld [vmem:[%s0 + $0x20] sm:$0xff]
  %v52 = vld [vmem:[%s0 + $0x28] sm:$0xff]
  %v53 = vld [vmem:[%s0 + $0x30] sm:$0xff]
  %v54 = vld [vmem:[%s0 + $0x38] sm:$0xff]
  %v55 = vld [vmem:[%s0 + $0x40] sm:$0xff]
  %v56 = vld [vmem:[%s0 + $0x48] sm:$0xff]
  %v57 = vld [vmem:[%s0 + $0x50] sm:$0xff]
  %v58 = vld [vmem:[%s0 + $0x58] sm:$0xff]
  %v59 = vld [vmem:[%s0 + $0x60] sm:$0xff]
  %v60 = vld [vmem:[%s0 + $0x68] sm:$0xff]
  %v61 = vld [vmem:[%s0 + $0x70] sm:$0xff]
  %v62 = vld [vmem:[%s0 + $0x78] sm:$0xff]
  %v63 = vld [vmem:[%s1] sm:$0xff]
  %v64 = vld [vmem:[%s1 + $0x8] sm:$0xff]
  %v65 = vld [vmem:[%s1 + $0x10] sm:$0xff]
  %v66 = vld [vmem:[%s1 + $0x18] sm:$0xff]
  %v67 = vld [vmem:[%s1 + $0x20] sm:$0xff]
  %v68 = vld [vmem:[%s1 + $0x28] sm:$0xff]
  %v69 = vld [vmem:[%s1 + $0x30] sm:$0xff]
  %v70 = vld [vmem:[%s1 + $0x38] sm:$0xff]
  %v71 = vld [vmem:[%s1 + $0x40] sm:$0xff]
  %v72 = vld [vmem:[%s1 + $0x48] sm:$0xff]
  %v73 = vld [vmem:[%s1 + $0x50] sm:$0xff]
  %v74 = vld [vmem:[%s1 + $0x58] sm:$0xff]
  %v75 = vld [vmem:[%s1 + $0x60] sm:$0xff]
  %v76 = vld [vmem:[%s1 + $0x68] sm:$0xff]
  %v77 = vld [vmem:[%s1 + $0x70] sm:$0xff]
  %v78 = vld [vmem:[%s1 + $0x78] sm:$0xff]
  %v79 = vld [vmem:[%s1 + $0x80] sm:$0xff]
  %v80 = vld [vmem:[%s1 + $0x88] sm:$0xff]
  %v81 = vld [vmem:[%s1 + $0x90] sm:$0xff]
  %v82 = vld [vmem:[%s1 + $0x98] sm:$0xff]
  %v83 = vld [vmem:[%s1 + $0xa0] sm:$0xff]
  %v84 = vld [vmem:[%s1 + $0xa8] sm:$0xff]
  %v85 = vld [vmem:[%s1 + $0xb0] sm:$0xff]
  %v86 = vld [vmem:[%s1 + $0xb8] sm:$0xff]
  %v87 = vld [vmem:[%s1 + $0xc0] sm:$0xff]
  %v88 = vld [vmem:[%s1 + $0xc8] sm:$0xff]
  %v89 = vld [vmem:[%s1 + $0xd0] sm:$0xff]
  %v90 = vld [vmem:[%s1 + $0xd8] sm:$0xff]
  %v91 = vld [vmem:[%s1 + $0xe0] sm:$0xff]
  %v92 = vld [vmem:[%s1 + $0xe8] sm:$0xff]
  %v93 = vld [vmem:[%s1 + $0xf0] sm:$0xff]
  %v94 = vld [vmem:[%s1 + $0xf8] sm:$0xff]
  %v95 = vld [vmem:[%s1 + $0x100] sm:$0xff]
  %v96 = vld [vmem:[%s1 + $0x108] sm:$0xff]
  %v97 = vld [vmem:[%s1 + $0x110] sm:$0xff]
  %v98 = vld [vmem:[%s1 + $0x118] sm:$0xff]
  %v99 = vld [vmem:[%s1 + $0x120] sm:$0xff]
  %v100 = vld [vmem:[%s1 + $0x128] sm:$0xff]
  %v101 = vld [vmem:[%s1 + $0x130] sm:$0xff]
  %v102 = vld [vmem:[%s1 + $0x138] sm:$0xff]
  %v103 = vld [vmem:[%s1 + $0x140] sm:$0xff]
  %v104 = vld [vmem:[%s1 + $0x148] sm:$0xff]
  %v105 = vld [vmem:[%s1 + $0x150] sm:$0xff]
  %v106 = vld [vmem:[%s1 + $0x158] sm:$0xff]
  %v107 = vld [vmem:[%s1 + $0x160] sm:$0xff]
  %v108 = vld [vmem:[%s1 + $0x168] sm:$0xff]
  %v109 = vld [vmem:[%s1 + $0x170] sm:$0xff]
  %v110 = vld [vmem:[%s1 + $0x178] sm:$0xff]
  %v111 = vld [vmem:[%s1 + $0x180] sm:$0xff]
  %v112 = vld [vmem:[%s1 + $0x188] sm:$0xff]
  %v113 = vld [vmem:[%s1 + $0x190] sm:$0xff]
  %v114 = vld [vmem:[%s1 + $0x198] sm:$0xff]
  %v115 = vld [vmem:[%s1 + $0x1a0] sm:$0xff]
  %v116 = vld [vmem:[%s1 + $0x1a8] sm:$0xff]
  %v117 = vld [vmem:[%s1 + $0x1b0] sm:$0xff]
  %v118 = vld [vmem:[%s1 + $0x1b8] sm:$0xff]
  %v119 = vld [vmem:[%s1 + $0x1c0] sm:$0xff]
  %v120 = vld [vmem:[%s1 + $0x1c8] sm:$0xff]
  %v121 = vld [vmem:[%s1 + $0x1d0] sm:$0xff]
  %v122 = vld [vmem:[%s1 + $0x1d8] sm:$0xff]
  %v123 = vld [vmem:[%s1 + $0x1e0] sm:$0xff]
  %v124 = vld [vmem:[%s1 + $0x1e8] sm:$0xff]
  %v125 = vld [vmem:[%s1 + $0x1f0] sm:$0xff]
  %v126 = vld [vmem:[%s1 + $0x1f8] sm:$0xff]
  %v127 = vld [vmem:[%s1 + $0x200] sm:$0xff]
  %v128 = vld [vmem:[%s1 + $0x208] sm:$0xff]
  %v129 = vld [vmem:[%s1 + $0x210] sm:$0xff]
  %v130 = vld [vmem:[%s1 + $0x218] sm:$0xff]
  %v131 = vld [vmem:[%s1 + $0x220] sm:$0xff]
  %v132 = vld [vmem:[%s1 + $0x228] sm:$0xff]
  %v133 = vld [vmem:[%s1 + $0x230] sm:$0xff]
  %v134 = vld [vmem:[%s1 + $0x238] sm:$0xff]
  %v135 = vld [vmem:[%s1 + $0x240] sm:$0xff]
  %v136 = vld [vmem:[%s1 + $0x248] sm:$0xff]
  %v137 = vld [vmem:[%s1 + $0x250] sm:$0xff]
  %v138 = vld [vmem:[%s1 + $0x258] sm:$0xff]
  %v139 = vld [vmem:[%s1 + $0x260] sm:$0xff]
  %v140 = vld [vmem:[%s1 + $0x268] sm:$0xff]
  %v141 = vld [vmem:[%s1 + $0x270] sm:$0xff]
  %v142 = vld [vmem:[%s1 + $0x278] sm:$0xff]
  %v143 = vld [vmem:[%s1 + $0x280] sm:$0xff]
  %v144 = vld [vmem:[%s1 + $0x288] sm:$0xff]
  %v145 = vld [vmem:[%s1 + $0x290] sm:$0xff]
  %v146 = vld [vmem:[%s1 + $0x298] sm:$0xff]
  %v147 = vld [vmem:[%s1 + $0x2a0] sm:$0xff]
  %v148 = vld [vmem:[%s1 + $0x2a8] sm:$0xff]
  %v149 = vld [vmem:[%s1 + $0x2b0] sm:$0xff]
  %v150 = vld [vmem:[%s1 + $0x2b8] sm:$0xff]
  %v151 = vld [vmem:[%s1 + $0x2c0] sm:$0xff]
  %v152 = vld [vmem:[%s1 + $0x2c8] sm:$0xff]
  %v153 = vld [vmem:[%s1 + $0x2d0] sm:$0xff]
  %v154 = vld [vmem:[%s1 + $0x2d8] sm:$0xff]
  %v155 = vld [vmem:[%s1 + $0x2e0] sm:$0xff]
  %v156 = vld [vmem:[%s1 + $0x2e8] sm:$0xff]
  %v157 = vld [vmem:[%s1 + $0x2f0] sm:$0xff]
  %v158 = vld [vmem:[%s1 + $0x2f8] sm:$0xff]
  %v159 = vld [vmem:[%s1 + $0x300] sm:$0xff]
  %v160 = vld [vmem:[%s1 + $0x308] sm:$0xff]
  %v161 = vld [vmem:[%s1 + $0x310] sm:$0xff]
  %v162 = vld [vmem:[%s1 + $0x318] sm:$0xff]
  %v163 = vld [vmem:[%s1 + $0x320] sm:$0xff]
  %v164 = vld [vmem:[%s1 + $0x328] sm:$0xff]
  %v165 = vld [vmem:[%s1 + $0x330] sm:$0xff]
  %v166 = vld [vmem:[%s1 + $0x338] sm:$0xff]
  %v167 = vld [vmem:[%s1 + $0x340] sm:$0xff]
  %v168 = vld [vmem:[%s1 + $0x348] sm:$0xff]
  %v169 = vld [vmem:[%s1 + $0x350] sm:$0xff]
  %v170 = vld [vmem:[%s1 + $0x358] sm:$0xff]
  %v171 = vld [vmem:[%s1 + $0x360] sm:$0xff]
  %v172 = vld [vmem:[%s1 + $0x368] sm:$0xff]
  %v173 = vld [vmem:[%s1 + $0x370] sm:$0xff]
  %v174 = vld [vmem:[%s1 + $0x378] sm:$0xff]
  %v175 = vld [vmem:[%s1 + $0x380] sm:$0xff]
  %v176 = vld [vmem:[%s1 + $0x388] sm:$0xff]
  %v177 = vld [vmem:[%s1 + $0x390] sm:$0xff]
  %v178 = vld [vmem:[%s1 + $0x398] sm:$0xff]
  %v179 = vld [vmem:[%s1 + $0x3a0] sm:$0xff]
  %v180 = vld [vmem:[%s1 + $0x3a8] sm:$0xff]
  %v181 = vld [vmem:[%s1 + $0x3b0] sm:$0xff]
  %v182 = vld [vmem:[%s1 + $0x3b8] sm:$0xff]
  %v183 = vld [vmem:[%s1 + $0x3c0] sm:$0xff]
  %v184 = vld [vmem:[%s1 + $0x3c8] sm:$0xff]
  %v185 = vld [vmem:[%s1 + $0x3d0] sm:$0xff]
  %v186 = vld [vmem:[%s1 + $0x3d8] sm:$0xff]
  %v187 = vld [vmem:[%s1 + $0x3e0] sm:$0xff]
  %v188 = vld [vmem:[%s1 + $0x3e8] sm:$0xff]
  %v189 = vld [vmem:[%s1 + $0x3f0] sm:$0xff]
  %v190 = vld [vmem:[%s1 + $0x3f8] sm:$0xff]
  %v191 = vld [vmem:[%s3] sm:$0xf]
  %v193 = vlaneseq
  %v194 = vshrl.u32 %v193, 7
  %v195 = vsub.s32 0, %v194
  %v196 = vrot.slane %v191, %v195
  %v197 = vlaneseq
  %v198 = vshrl.u32 %v197, 7
  %v199 = vsub.s32 1, %v198
  %v200 = vrot.slane %v191, %v199
  %v201 = vlaneseq
  %v202 = vshrl.u32 %v201, 7
  %v203 = vsub.s32 2, %v202
  %v204 = vrot.slane %v191, %v203
  %v205 = vlaneseq
  %v206 = vshrl.u32 %v205, 7
  %v207 = vsub.s32 3, %v206
  %v208 = vrot.slane %v191, %v207
  %213 = vmatprep.subr.mxu0 %v64
  %214 = vmatpush1.msra.mxu0 %v63
  %215 = vmatprep.subr.mxu0 %v68
  %216 = vmatpush1.msra.mxu0 %v67
  %217 = vmatprep.subr.mxu0 %v72
  %218 = vmatpush1.msra.mxu0 %v71
  %219 = vmatprep.subr.mxu0 %v76
  %220 = vmatpush1.msra.mxu0 %v75
  %221 = vmatprep.subr.mxu0 %v80
  %222 = vmatpush1.msra.mxu0 %v79
  %223 = vmatprep.subr.mxu0 %v84
  %224 = vmatpush1.msra.mxu0 %v83
  %225 = vmatprep.subr.mxu0 %v88
  %226 = vmatpush1.msra.mxu0 %v87
  %227 = vmatprep.subr.mxu0 %v92
  %228 = vmatpush1.msra.mxu0 %v91
  %229 = vmatprep.subr.mxu0 %v96
  %230 = vmatpush1.msra.mxu0 %v95
  %231 = vmatprep.subr.mxu0 %v100
  %232 = vmatpush1.msra.mxu0 %v99
  %233 = vmatprep.subr.mxu0 %v104
  %234 = vmatpush1.msra.mxu0 %v103
  %235 = vmatprep.subr.mxu0 %v108
  %236 = vmatpush1.msra.mxu0 %v107
  %237 = vmatprep.subr.mxu0 %v112
  %238 = vmatpush1.msra.mxu0 %v111
  %239 = vmatprep.subr.mxu0 %v116
  %240 = vmatpush1.msra.mxu0 %v115
  %241 = vmatprep.subr.mxu0 %v120
  %242 = vmatpush1.msra.mxu0 %v119
  %243 = vmatprep.subr.mxu0 %v124
  %244 = vmatpush1.msra.mxu0 %v123
  %245 = vmatprep.subr.mxu0 %v128
  %246 = vmatpush1.msra.mxu0 %v127
  %247 = vmatprep.subr.mxu0 %v132
  %248 = vmatpush1.msra.mxu0 %v131
  %249 = vmatprep.subr.mxu0 %v136
  %250 = vmatpush1.msra.mxu0 %v135
  %251 = vmatprep.subr.mxu0 %v140
  %252 = vmatpush1.msra.mxu0 %v139
  %253 = vmatprep.subr.mxu0 %v144
  %254 = vmatpush1.msra.mxu0 %v143
  %255 = vmatprep.subr.mxu0 %v148
  %256 = vmatpush1.msra.mxu0 %v147
  %257 = vmatprep.subr.mxu0 %v152
  %258 = vmatpush1.msra.mxu0 %v151
  %259 = vmatprep.subr.mxu0 %v156
  %260 = vmatpush1.msra.mxu0 %v155
  %261 = vmatprep.subr.mxu0 %v160
  %262 = vmatpush1.msra.mxu0 %v159
  %263 = vmatprep.subr.mxu0 %v164
  %264 = vmatpush1.msra.mxu0 %v163
  %265 = vmatprep.subr.mxu0 %v168
  %266 = vmatpush1.msra.mxu0 %v167
  %267 = vmatprep.subr.mxu0 %v172
  %268 = vmatpush1.msra.mxu0 %v171
  %269 = vmatprep.subr.mxu0 %v176
  %270 = vmatpush1.msra.mxu0 %v175
  %271 = vmatprep.subr.mxu0 %v180
  %272 = vmatpush1.msra.mxu0 %v179
  %273 = vmatprep.subr.mxu0 %v184
  %274 = vmatpush1.msra.mxu0 %v183
  %275 = vmatprep.subr.mxu0 %v188
  %276 = vmatpush1.msra.mxu0 %v187
  %277 = vmatprep.mubr.f32.mxu0 %v48
  %278 = vmatmul.mubr.f32.gmra.mrb[0].mxu0 %v47
  %v279 = vpop.f32.mrb[0].mxu0
  %v280 = vadd.f32 %v196, %v279
  %v281 = vpop.f32.mrb[0].mxu0
  %v282 = vadd.f32 %v200, %v281
  %283 = vmatprep.mubr.f32.mxu0 %v50
  %284 = vmatmul.mubr.f32.gmra.mrb[0].mxu0 %v49
  %v285 = vpop.f32.mrb[0].mxu0
  %v286 = vadd.f32 %v196, %v285
  %v287 = vpop.f32.mrb[0].mxu0
  %v288 = vadd.f32 %v200, %v287
  %289 = vmatprep.mubr.f32.mxu0 %v52
  %290 = vmatmul.mubr.f32.gmra.mrb[0].mxu0 %v51
  %v291 = vpop.f32.mrb[0].mxu0
  %v292 = vadd.f32 %v196, %v291
  %v293 = vpop.f32.mrb[0].mxu0
  %v294 = vadd.f32 %v200, %v293
  %295 = vmatprep.mubr.f32.mxu0 %v54
  %296 = vmatmul.mubr.f32.gmra.mrb[0].mxu0 %v53
  %v297 = vpop.f32.mrb[0].mxu0
  %v298 = vadd.f32 %v196, %v297
  %v299 = vpop.f32.mrb[0].mxu0
  %v300 = vadd.f32 %v200, %v299
  %301 = vmatprep.mubr.f32.mxu0 %v56
  %302 = vmatmul.mubr.f32.gmra.mrb[0].mxu0 %v55
  %v303 = vpop.f32.mrb[0].mxu0
  %v304 = vadd.f32 %v196, %v303
  %v305 = vpop.f32.mrb[0].mxu0
  %v306 = vadd.f32 %v200, %v305
  %307 = vmatprep.mubr.f32.mxu0 %v58
  %308 = vmatmul.mubr.f32.gmra.mrb[0].mxu0 %v57
  %v309 = vpop.f32.mrb[0].mxu0
  %v310 = vadd.f32 %v196, %v309
  %v311 = vpop.f32.mrb[0].mxu0
  %v312 = vadd.f32 %v200, %v311
  %313 = vmatprep.mubr.f32.mxu0 %v60
  %314 = vmatmul.mubr.f32.gmra.mrb[0].mxu0 %v59
  %v315 = vpop.f32.mrb[0].mxu0
  %v316 = vadd.f32 %v196, %v315
  %v317 = vpop.f32.mrb[0].mxu0
  %v318 = vadd.f32 %v200, %v317
  %319 = vmatprep.mubr.f32.mxu0 %v62
  %320 = vmatmul.mubr.f32.gmra.mrb[0].mxu0 %v61
  %v321 = vpop.f32.mrb[0].mxu0
  %v322 = vadd.f32 %v196, %v321
  %v323 = vpop.f32.mrb[0].mxu0
  %v324 = vadd.f32 %v200, %v323
  %325 = vdwg.mxu0
  %326 = vmatprep.subr.mxu0 %v66
  %327 = vmatpush1.msra.mxu0 %v65
  %328 = vmatprep.subr.mxu0 %v70
  %329 = vmatpush1.msra.mxu0 %v69
  %330 = vmatprep.subr.mxu0 %v74
  %331 = vmatpush1.msra.mxu0 %v73
  %332 = vmatprep.subr.mxu0 %v78
  %333 = vmatpush1.msra.mxu0 %v77
  %334 = vmatprep.subr.mxu0 %v82
  %335 = vmatpush1.msra.mxu0 %v81
  %336 = vmatprep.subr.mxu0 %v86
  %337 = vmatpush1.msra.mxu0 %v85
  %338 = vmatprep.subr.mxu0 %v90
  %339 = vmatpush1.msra.mxu0 %v89
  %340 = vmatprep.subr.mxu0 %v94
  %341 = vmatpush1.msra.mxu0 %v93
  %342 = vmatprep.subr.mxu0 %v98
  %343 = vmatpush1.msra.mxu0 %v97
  %344 = vmatprep.subr.mxu0 %v102
  %345 = vmatpush1.msra.mxu0 %v101
  %346 = vmatprep.subr.mxu0 %v106
  %347 = vmatpush1.msra.mxu0 %v105
  %348 = vmatprep.subr.mxu0 %v110
  %349 = vmatpush1.msra.mxu0 %v109
  %350 = vmatprep.subr.mxu0 %v114
  %351 = vmatpush1.msra.mxu0 %v113
  %352 = vmatprep.subr.mxu0 %v118
  %353 = vmatpush1.msra.mxu0 %v117
  %354 = vmatprep.subr.mxu0 %v122
  %355 = vmatpush1.msra.mxu0 %v121
  %356 = vmatprep.subr.mxu0 %v126
  %357 = vmatpush1.msra.mxu0 %v125
  %358 = vmatprep.subr.mxu0 %v130
  %359 = vmatpush1.msra.mxu0 %v129
  %360 = vmatprep.subr.mxu0 %v134
  %361 = vmatpush1.msra.mxu0 %v133
  %362 = vmatprep.subr.mxu0 %v138
  %363 = vmatpush1.msra.mxu0 %v137
  %364 = vmatprep.subr.mxu0 %v142
  %365 = vmatpush1.msra.mxu0 %v141
  %366 = vmatprep.subr.mxu0 %v146
  %367 = vmatpush1.msra.mxu0 %v145
  %368 = vmatprep.subr.mxu0 %v150
  %369 = vmatpush1.msra.mxu0 %v149
  %370 = vmatprep.subr.mxu0 %v154
  %371 = vmatpush1.msra.mxu0 %v153
  %372 = vmatprep.subr.mxu0 %v158
  %373 = vmatpush1.msra.mxu0 %v157
  %374 = vmatprep.subr.mxu0 %v162
  %375 = vmatpush1.msra.mxu0 %v161
  %376 = vmatprep.subr.mxu0 %v166
  %377 = vmatpush1.msra.mxu0 %v165
  %378 = vmatprep.subr.mxu0 %v170
  %379 = vmatpush1.msra.mxu0 %v169
  %380 = vmatprep.subr.mxu0 %v174
  %381 = vmatpush1.msra.mxu0 %v173
  %382 = vmatprep.subr.mxu0 %v178
  %383 = vmatpush1.msra.mxu0 %v177
  %384 = vmatprep.subr.mxu0 %v182
  %385 = vmatpush1.msra.mxu0 %v181
  %386 = vmatprep.subr.mxu0 %v186
  %387 = vmatpush1.msra.mxu0 %v185
  %388 = vmatprep.subr.mxu0 %v190
  %389 = vmatpush1.msra.mxu0 %v189
  %390 = vmatprep.mubr.f32.mxu0 %v48
  %391 = vmatmul.mubr.f32.gmra.mrb[0].mxu0 %v47
  %v392 = vpop.f32.mrb[0].mxu0
  %v393 = vadd.f32 %v204, %v392
  %v394 = vpop.f32.mrb[0].mxu0
  %v395 = vadd.f32 %v208, %v394
  %396 = vmatprep.mubr.f32.mxu0 %v50
  %397 = vmatmul.mubr.f32.gmra.mrb[0].mxu0 %v49
  %v398 = vpop.f32.mrb[0].mxu0
  %v399 = vadd.f32 %v204, %v398
  %v400 = vpop.f32.mrb[0].mxu0
  %v401 = vadd.f32 %v208, %v400
  %402 = vmatprep.mubr.f32.mxu0 %v52
  %403 = vmatmul.mubr.f32.gmra.mrb[0].mxu0 %v51
  %v404 = vpop.f32.mrb[0].mxu0
  %v405 = vadd.f32 %v204, %v404
  %v406 = vpop.f32.mrb[0].mxu0
  %v407 = vadd.f32 %v208, %v406
  %408 = vmatprep.mubr.f32.mxu0 %v54
  %409 = vmatmul.mubr.f32.gmra.mrb[0].mxu0 %v53
  %v410 = vpop.f32.mrb[0].mxu0
  %v411 = vadd.f32 %v204, %v410
  %v412 = vpop.f32.mrb[0].mxu0
  %v413 = vadd.f32 %v208, %v412
  %414 = vmatprep.mubr.f32.mxu0 %v56
  %415 = vmatmul.mubr.f32.gmra.mrb[0].mxu0 %v55
  %v416 = vpop.f32.mrb[0].mxu0
  %v417 = vadd.f32 %v204, %v416
  %v418 = vpop.f32.mrb[0].mxu0
  %v419 = vadd.f32 %v208, %v418
  %420 = vmatprep.mubr.f32.mxu0 %v58
  %421 = vmatmul.mubr.f32.gmra.mrb[0].mxu0 %v57
  %v422 = vpop.f32.mrb[0].mxu0
  %v423 = vadd.f32 %v204, %v422
  %v424 = vpop.f32.mrb[0].mxu0
  %v425 = vadd.f32 %v208, %v424
  %426 = vmatprep.mubr.f32.mxu0 %v60
  %427 = vmatmul.mubr.f32.gmra.mrb[0].mxu0 %v59
  %v428 = vpop.f32.mrb[0].mxu0
  %v429 = vadd.f32 %v204, %v428
  %v430 = vpop.f32.mrb[0].mxu0
  %v431 = vadd.f32 %v208, %v430
  %432 = vmatprep.mubr.f32.mxu0 %v62
  %433 = vmatmul.mubr.f32.gmra.mrb[0].mxu0 %v61
  %v434 = vpop.f32.mrb[0].mxu0
  %v435 = vadd.f32 %v204, %v434
  %v436 = vpop.f32.mrb[0].mxu0
  %v437 = vadd.f32 %v208, %v436
  %438 = vdwg.mxu0
  %439 = vst [vmem:[#allocation2] sm:$0xff] %v280
  %440 = vst [vmem:[#allocation2 + $0x8] sm:$0xff] %v282
  %441 = vst [vmem:[#allocation2 + $0x10] sm:$0xff] %v393
  %442 = vst [vmem:[#allocation2 + $0x18] sm:$0xff] %v395
  %443 = vst [vmem:[#allocation2 + $0x20] sm:$0xff] %v286
  %444 = vst [vmem:[#allocation2 + $0x28] sm:$0xff] %v288
  %445 = vst [vmem:[#allocation2 + $0x30] sm:$0xff] %v399
  %446 = vst [vmem:[#allocation2 + $0x38] sm:$0xff] %v401
  %447 = vst [vmem:[#allocation2 + $0x40] sm:$0xff] %v292
  %448 = vst [vmem:[#allocation2 + $0x48] sm:$0xff] %v294
  %449 = vst [vmem:[#allocation2 + $0x50] sm:$0xff] %v405
  %450 = vst [vmem:[#allocation2 + $0x58] sm:$0xff] %v407
  %451 = vst [vmem:[#allocation2 + $0x60] sm:$0xff] %v298
  %452 = vst [vmem:[#allocation2 + $0x68] sm:$0xff] %v300
  %453 = vst [vmem:[#allocation2 + $0x70] sm:$0xff] %v411
  %454 = vst [vmem:[#allocation2 + $0x78] sm:$0xff] %v413
  %455 = vst [vmem:[#allocation2 + $0x80] sm:$0xff] %v304
  %456 = vst [vmem:[#allocation2 + $0x88] sm:$0xff] %v306
  %457 = vst [vmem:[#allocation2 + $0x90] sm:$0xff] %v417
  %458 = vst [vmem:[#allocation2 + $0x98] sm:$0xff] %v419
  %459 = vst [vmem:[#allocation2 + $0xa0] sm:$0xff] %v310
  %460 = vst [vmem:[#allocation2 + $0xa8] sm:$0xff] %v312
  %461 = vst [vmem:[#allocation2 + $0xb0] sm:$0xff] %v423
  %462 = vst [vmem:[#allocation2 + $0xb8] sm:$0xff] %v425
  %463 = vst [vmem:[#allocation2 + $0xc0] sm:$0xff] %v316
  %464 = vst [vmem:[#allocation2 + $0xc8] sm:$0xff] %v318
  %465 = vst [vmem:[#allocation2 + $0xd0] sm:$0xff] %v429
  %466 = vst [vmem:[#allocation2 + $0xd8] sm:$0xff] %v431
  %467 = vst [vmem:[#allocation2 + $0xe0] sm:$0xff] %v322
  %468 = vst [vmem:[#allocation2 + $0xe8] sm:$0xff] %v324
  %469 = vst [vmem:[#allocation2 + $0xf0] sm:$0xff] %v435
  %470 = vst [vmem:[#allocation2 + $0xf8] sm:$0xff] %v437
  %v471 = vld [vmem:[%s2] sm:$0xff]
  %v472 = vld [vmem:[%s2 + $0x8] sm:$0xff]
  %v473 = vld [vmem:[%s2 + $0x10] sm:$0xff]
  %v474 = vld [vmem:[%s2 + $0x18] sm:$0xff]
  %v475 = vld [vmem:[%s2 + $0x20] sm:$0xff]
  %v476 = vld [vmem:[%s2 + $0x28] sm:$0xff]
  %v477 = vld [vmem:[%s2 + $0x30] sm:$0xff]
  %v478 = vld [vmem:[%s2 + $0x38] sm:$0xff]
  %v479 = vld [vmem:[%s2 + $0x40] sm:$0xff]
  %v480 = vld [vmem:[%s2 + $0x48] sm:$0xff]
  %v481 = vld [vmem:[%s2 + $0x50] sm:$0xff]
  %v482 = vld [vmem:[%s2 + $0x58] sm:$0xff]
  %v483 = vld [vmem:[%s2 + $0x60] sm:$0xff]
  %v484 = vld [vmem:[%s2 + $0x68] sm:$0xff]
  %v485 = vld [vmem:[%s2 + $0x70] sm:$0xff]
  %v486 = vld [vmem:[%s2 + $0x78] sm:$0xff]
  %v487 = vld [vmem:[%s2 + $0x80] sm:$0xff]
  %v488 = vld [vmem:[%s2 + $0x88] sm:$0xff]
  %v489 = vld [vmem:[%s2 + $0x90] sm:$0xff]
  %v490 = vld [vmem:[%s2 + $0x98] sm:$0xff]
  %v491 = vld [vmem:[%s2 + $0xa0] sm:$0xff]
  %v492 = vld [vmem:[%s2 + $0xa8] sm:$0xff]
  %v493 = vld [vmem:[%s2 + $0xb0] sm:$0xff]
  %v494 = vld [vmem:[%s2 + $0xb8] sm:$0xff]
  %v495 = vld [vmem:[%s2 + $0xc0] sm:$0xff]
  %v496 = vld [vmem:[%s2 + $0xc8] sm:$0xff]
  %v497 = vld [vmem:[%s2 + $0xd0] sm:$0xff]
  %v498 = vld [vmem:[%s2 + $0xd8] sm:$0xff]
  %v499 = vld [vmem:[%s2 + $0xe0] sm:$0xff]
  %v500 = vld [vmem:[%s2 + $0xe8] sm:$0xff]
  %v501 = vld [vmem:[%s2 + $0xf0] sm:$0xff]
  %v502 = vld [vmem:[%s2 + $0xf8] sm:$0xff]
  %v503 = vld [vmem:[%s2 + $0x100] sm:$0xff]
  %v504 = vld [vmem:[%s2 + $0x108] sm:$0xff]
  %v505 = vld [vmem:[%s2 + $0x110] sm:$0xff]
  %v506 = vld [vmem:[%s2 + $0x118] sm:$0xff]
  %v507 = vld [vmem:[%s2 + $0x120] sm:$0xff]
  %v508 = vld [vmem:[%s2 + $0x128] sm:$0xff]
  %v509 = vld [vmem:[%s2 + $0x130] sm:$0xff]
  %v510 = vld [vmem:[%s2 + $0x138] sm:$0xff]
  %v511 = vld [vmem:[%s2 + $0x140] sm:$0xff]
  %v512 = vld [vmem:[%s2 + $0x148] sm:$0xff]
  %v513 = vld [vmem:[%s2 + $0x150] sm:$0xff]
  %v514 = vld [vmem:[%s2 + $0x158] sm:$0xff]
  %v515 = vld [vmem:[%s2 + $0x160] sm:$0xff]
  %v516 = vld [vmem:[%s2 + $0x168] sm:$0xff]
  %v517 = vld [vmem:[%s2 + $0x170] sm:$0xff]
  %v518 = vld [vmem:[%s2 + $0x178] sm:$0xff]
  %v519 = vld [vmem:[%s2 + $0x180] sm:$0xff]
  %v520 = vld [vmem:[%s2 + $0x188] sm:$0xff]
  %v521 = vld [vmem:[%s2 + $0x190] sm:$0xff]
  %v522 = vld [vmem:[%s2 + $0x198] sm:$0xff]
  %v523 = vld [vmem:[%s2 + $0x1a0] sm:$0xff]
  %v524 = vld [vmem:[%s2 + $0x1a8] sm:$0xff]
  %v525 = vld [vmem:[%s2 + $0x1b0] sm:$0xff]
  %v526 = vld [vmem:[%s2 + $0x1b8] sm:$0xff]
  %v527 = vld [vmem:[%s2 + $0x1c0] sm:$0xff]
  %v528 = vld [vmem:[%s2 + $0x1c8] sm:$0xff]
  %v529 = vld [vmem:[%s2 + $0x1d0] sm:$0xff]
  %v530 = vld [vmem:[%s2 + $0x1d8] sm:$0xff]
  %v531 = vld [vmem:[%s2 + $0x1e0] sm:$0xff]
  %v532 = vld [vmem:[%s2 + $0x1e8] sm:$0xff]
  %v533 = vld [vmem:[%s2 + $0x1f0] sm:$0xff]
  %v534 = vld [vmem:[%s2 + $0x1f8] sm:$0xff]
  %v535 = vld [vmem:[%s7] sm:$0xff]
  %v536 = vld [vmem:[%s8] sm:$0xff]
  %s537 = smul.u32 0, 4
  %s538 = smul.addr %s537, 8
  %s539 = scalar_lea.vmem [#allocation2], %s538
  %v540 = vld [vmem:[%s539] sm:$0xff]
  %v541 = vld [vmem:[%s539 + $0x8] sm:$0xff]
  %v542 = vld [vmem:[%s539 + $0x10] sm:$0xff]
  %v543 = vld [vmem:[%s539 + $0x18] sm:$0xff]
  %544 = vmatprep.subr.mxu0 %v472
  %545 = vmatpush1.msra.mxu0 %v471
  %546 = vmatprep.subr.mxu0 %v476
  %547 = vmatpush1.msra.mxu0 %v475
  %548 = vmatprep.subr.mxu0 %v480
  %549 = vmatpush1.msra.mxu0 %v479
  %550 = vmatprep.subr.mxu0 %v484
  %551 = vmatpush1.msra.mxu0 %v483
  %552 = vmatprep.subr.mxu0 %v488
  %553 = vmatpush1.msra.mxu0 %v487
  %554 = vmatprep.subr.mxu0 %v492
  %555 = vmatpush1.msra.mxu0 %v491
  %556 = vmatprep.subr.mxu0 %v496
  %557 = vmatpush1.msra.mxu0 %v495
  %558 = vmatprep.subr.mxu0 %v500
  %559 = vmatpush1.msra.mxu0 %v499
  %560 = vmatprep.subr.mxu0 %v504
  %561 = vmatpush1.msra.mxu0 %v503
  %562 = vmatprep.subr.mxu0 %v508
  %563 = vmatpush1.msra.mxu0 %v507
  %564 = vmatprep.subr.mxu0 %v512
  %565 = vmatpush1.msra.mxu0 %v511
  %566 = vmatprep.subr.mxu0 %v516
  %567 = vmatpush1.msra.mxu0 %v515
  %568 = vmatprep.subr.mxu0 %v520
  %569 = vmatpush1.msra.mxu0 %v519
  %570 = vmatprep.subr.mxu0 %v524
  %571 = vmatpush1.msra.mxu0 %v523
  %572 = vmatprep.subr.mxu0 %v528
  %573 = vmatpush1.msra.mxu0 %v527
  %574 = vmatprep.subr.mxu0 %v532
  %575 = vmatpush1.msra.mxu0 %v531
  %576 = vmatprep.subr.mxu0 0.0
  %577 = vmatpush1.msra.mxu0 0.0
  %578 = vmatprep.subr.mxu0 0.0
  %579 = vmatpush1.msra.mxu0 0.0
  %580 = vmatprep.subr.mxu0 0.0
  %581 = vmatpush1.msra.mxu0 0.0
  %582 = vmatprep.subr.mxu0 0.0
  %583 = vmatpush1.msra.mxu0 0.0
  %584 = vmatprep.subr.mxu0 0.0
  %585 = vmatpush1.msra.mxu0 0.0
  %586 = vmatprep.subr.mxu0 0.0
  %587 = vmatpush1.msra.mxu0 0.0
  %588 = vmatprep.subr.mxu0 0.0
  %589 = vmatpush1.msra.mxu0 0.0
  %590 = vmatprep.subr.mxu0 0.0
  %591 = vmatpush1.msra.mxu0 0.0
  %592 = vmatprep.subr.mxu0 0.0
  %593 = vmatpush1.msra.mxu0 0.0
  %594 = vmatprep.subr.mxu0 0.0
  %595 = vmatpush1.msra.mxu0 0.0
  %596 = vmatprep.subr.mxu0 0.0
  %597 = vmatpush1.msra.mxu0 0.0
  %598 = vmatprep.subr.mxu0 0.0
  %599 = vmatpush1.msra.mxu0 0.0
  %600 = vmatprep.subr.mxu0 0.0
  %601 = vmatpush1.msra.mxu0 0.0
  %602 = vmatprep.subr.mxu0 0.0
  %603 = vmatpush1.msra.mxu0 0.0
  %604 = vmatprep.subr.mxu0 0.0
  %605 = vmatpush1.msra.mxu0 0.0
  %606 = vmatprep.subr.mxu0 0.0
  %607 = vmatpush1.msra.mxu0 0.0
  %608 = vmatprep.mubr.f32.mxu0 0.0
  %609 = vmatmul.mubr.f32.gmra.mrb[0].mxu0 %v535
  %v610 = vpop.f32.mrb[0].mxu0
  %v611 = vadd.f32 0.0, %v610
  %v612 = vpop.f32.mrb[0].mxu0
  %v613 = vadd.f32 0.0, %v612
  %614 = vdwg.mxu0
  %615 = vmatprep.subr.mxu0 %v474
  %616 = vmatpush1.msra.mxu0 %v473
  %617 = vmatprep.subr.mxu0 %v478
  %618 = vmatpush1.msra.mxu0 %v477
  %619 = vmatprep.subr.mxu0 %v482
  %620 = vmatpush1.msra.mxu0 %v481
  %621 = vmatprep.subr.mxu0 %v486
  %622 = vmatpush1.msra.mxu0 %v485
  %623 = vmatprep.subr.mxu0 %v490
  %624 = vmatpush1.msra.mxu0 %v489
  %625 = vmatprep.subr.mxu0 %v494
  %626 = vmatpush1.msra.mxu0 %v493
  %627 = vmatprep.subr.mxu0 %v498
  %628 = vmatpush1.msra.mxu0 %v497
  %629 = vmatprep.subr.mxu0 %v502
  %630 = vmatpush1.msra.mxu0 %v501
  %631 = vmatprep.subr.mxu0 %v506
  %632 = vmatpush1.msra.mxu0 %v505
  %633 = vmatprep.subr.mxu0 %v510
  %634 = vmatpush1.msra.mxu0 %v509
  %635 = vmatprep.subr.mxu0 %v514
  %636 = vmatpush1.msra.mxu0 %v513
  %637 = vmatprep.subr.mxu0 %v518
  %638 = vmatpush1.msra.mxu0 %v517
  %639 = vmatprep.subr.mxu0 %v522
  %640 = vmatpush1.msra.mxu0 %v521
  %641 = vmatprep.subr.mxu0 %v526
  %642 = vmatpush1.msra.mxu0 %v525
  %643 = vmatprep.subr.mxu0 %v530
  %644 = vmatpush1.msra.mxu0 %v529
  %645 = vmatprep.subr.mxu0 %v534
  %646 = vmatpush1.msra.mxu0 %v533
  %647 = vmatprep.subr.mxu0 0.0
  %648 = vmatpush1.msra.mxu0 0.0
  %649 = vmatprep.subr.mxu0 0.0
  %650 = vmatpush1.msra.mxu0 0.0
  %651 = vmatprep.subr.mxu0 0.0
  %652 = vmatpush1.msra.mxu0 0.0
  %653 = vmatprep.subr.mxu0 0.0
  %654 = vmatpush1.msra.mxu0 0.0
  %655 = vmatprep.subr.mxu0 0.0
  %656 = vmatpush1.msra.mxu0 0.0
  %657 = vmatprep.subr.mxu0 0.0
  %658 = vmatpush1.msra.mxu0 0.0
  %659 = vmatprep.subr.mxu0 0.0
  %660 = vmatpush1.msra.mxu0 0.0
  %661 = vmatprep.subr.mxu0 0.0
  %662 = vmatpush1.msra.mxu0 0.0
  %663 = vmatprep.subr.mxu0 0.0
  %664 = vmatpush1.msra.mxu0 0.0
  %665 = vmatprep.subr.mxu0 0.0
  %666 = vmatpush1.msra.mxu0 0.0
  %667 = vmatprep.subr.mxu0 0.0
  %668 = vmatpush1.msra.mxu0 0.0
  %669 = vmatprep.subr.mxu0 0.0
  %670 = vmatpush1.msra.mxu0 0.0
  %671 = vmatprep.subr.mxu0 0.0
  %672 = vmatpush1.msra.mxu0 0.0
  %673 = vmatprep.subr.mxu0 0.0
  %674 = vmatpush1.msra.mxu0 0.0
  %675 = vmatprep.subr.mxu0 0.0
  %676 = vmatpush1.msra.mxu0 0.0
  %677 = vmatprep.subr.mxu0 0.0
  %678 = vmatpush1.msra.mxu0 0.0
  %679 = vmatprep.mubr.f32.mxu0 0.0
  %680 = vmatmul.mubr.f32.gmra.mrb[0].mxu0 %v535
  %v681 = vpop.f32.mrb[0].mxu0
  %v682 = vadd.f32 0.0, %v681
  %v683 = vpop.f32.mrb[0].mxu0
  %v684 = vadd.f32 0.0, %v683
  %685 = vdwg.mxu0
  %v686 = vadd.f32 %v540, %v611
  %v687 = vadd.f32 %v541, %v613
  %v688 = vadd.f32 %v542, %v682
  %v689 = vadd.f32 %v543, %v684
  %v690 = vxor.u32 %v686, 2147483648
  %v691 = vmul.f32 %v690, 1.442695
  %v692 = vpow.pop %v691
  %v693 = vadd.f32 %v692, 1.0
  %v694 = vrcp.pop %v693
  %v695 = vmul.f32 1.0, %v694
  %v696 = vxor.u32 %v687, 2147483648
  %v697 = vmul.f32 %v696, 1.442695
  %v698 = vpow.pop %v697
  %v699 = vadd.f32 %v698, 1.0
  %v700 = vrcp.pop %v699
  %v701 = vmul.f32 1.0, %v700
  %v702 = vtanh.pop %v688
  %v703 = vxor.u32 %v689, 2147483648
  %v704 = vmul.f32 %v703, 1.442695
  %v705 = vpow.pop %v704
  %v706 = vadd.f32 %v705, 1.0
  %v707 = vrcp.pop %v706
  %v708 = vmul.f32 1.0, %v707
  %v709 = vmul.f32 %v701, %v536
  %v710 = vmul.f32 %v695, %v702
  %v711 = vadd.f32 %v709, %v710
  %v712 = vtanh.pop %v711
  %v713 = vmul.f32 %v708, %v712
  %714 = vst [vmem:[#allocation3] sm:$0xff] %v713
  %s715 = smul.u32 1, 4
  %s716 = smul.addr %s715, 8
  %s717 = scalar_lea.vmem [#allocation2], %s716
  %v718 = vld [vmem:[%s717] sm:$0xff]
  %v719 = vld [vmem:[%s717 + $0x8] sm:$0xff]
  %v720 = vld [vmem:[%s717 + $0x10] sm:$0xff]
  %v721 = vld [vmem:[%s717 + $0x18] sm:$0xff]
  %722 = vmatprep.subr.mxu0 %v472
  %723 = vmatpush1.msra.mxu0 %v471
  %724 = vmatprep.subr.mxu0 %v476
  %725 = vmatpush1.msra.mxu0 %v475
  %726 = vmatprep.subr.mxu0 %v480
  %727 = vmatpush1.msra.mxu0 %v479
  %728 = vmatprep.subr.mxu0 %v484
  %729 = vmatpush1.msra.mxu0 %v483
  %730 = vmatprep.subr.mxu0 %v488
  %731 = vmatpush1.msra.mxu0 %v487
  %732 = vmatprep.subr.mxu0 %v492
  %733 = vmatpush1.msra.mxu0 %v491
  %734 = vmatprep.subr.mxu0 %v496
  %735 = vmatpush1.msra.mxu0 %v495
  %736 = vmatprep.subr.mxu0 %v500
  %737 = vmatpush1.msra.mxu0 %v499
  %738 = vmatprep.subr.mxu0 %v504
  %739 = vmatpush1.msra.mxu0 %v503
  %740 = vmatprep.subr.mxu0 %v508
  %741 = vmatpush1.msra.mxu0 %v507
  %742 = vmatprep.subr.mxu0 %v512
  %743 = vmatpush1.msra.mxu0 %v511
  %744 = vmatprep.subr.mxu0 %v516
  %745 = vmatpush1.msra.mxu0 %v515
  %746 = vmatprep.subr.mxu0 %v520
  %747 = vmatpush1.msra.mxu0 %v519
  %748 = vmatprep.subr.mxu0 %v524
  %749 = vmatpush1.msra.mxu0 %v523
  %750 = vmatprep.subr.mxu0 %v528
  %751 = vmatpush1.msra.mxu0 %v527
  %752 = vmatprep.subr.mxu0 %v532
  %753 = vmatpush1.msra.mxu0 %v531
  %754 = vmatprep.subr.mxu0 0.0
  %755 = vmatpush1.msra.mxu0 0.0
  %756 = vmatprep.subr.mxu0 0.0
  %757 = vmatpush1.msra.mxu0 0.0
  %758 = vmatprep.subr.mxu0 0.0
  %759 = vmatpush1.msra.mxu0 0.0
  %760 = vmatprep.subr.mxu0 0.0
  %761 = vmatpush1.msra.mxu0 0.0
  %762 = vmatprep.subr.mxu0 0.0
  %763 = vmatpush1.msra.mxu0 0.0
  %764 = vmatprep.subr.mxu0 0.0
  %765 = vmatpush1.msra.mxu0 0.0
  %766 = vmatprep.subr.mxu0 0.0
  %767 = vmatpush1.msra.mxu0 0.0
  %768 = vmatprep.subr.mxu0 0.0
  %769 = vmatpush1.msra.mxu0 0.0
  %770 = vmatprep.subr.mxu0 0.0
  %771 = vmatpush1.msra.mxu0 0.0
  %772 = vmatprep.subr.mxu0 0.0
  %773 = vmatpush1.msra.mxu0 0.0
  %774 = vmatprep.subr.mxu0 0.0
  %775 = vmatpush1.msra.mxu0 0.0
  %776 = vmatprep.subr.mxu0 0.0
  %777 = vmatpush1.msra.mxu0 0.0
  %778 = vmatprep.subr.mxu0 0.0
  %779 = vmatpush1.msra.mxu0 0.0
  %780 = vmatprep.subr.mxu0 0.0
  %781 = vmatpush1.msra.mxu0 0.0
  %782 = vmatprep.subr.mxu0 0.0
  %783 = vmatpush1.msra.mxu0 0.0
  %784 = vmatprep.subr.mxu0 0.0
  %785 = vmatpush1.msra.mxu0 0.0
  %786 = vmatprep.mubr.f32.mxu0 0.0
  %787 = vmatmul.mubr.f32.gmra.mrb[0].mxu0 %v713
  %v788 = vpop.f32.mrb[0].mxu0
  %v789 = vadd.f32 0.0, %v788
  %v790 = vpop.f32.mrb[0].mxu0
  %v791 = vadd.f32 0.0, %v790
  %792 = vdwg.mxu0
  %793 = vmatprep.subr.mxu0 %v474
  %794 = vmatpush1.msra.mxu0 %v473
  %795 = vmatprep.subr.mxu0 %v478
  %796 = vmatpush1.msra.mxu0 %v477
  %797 = vmatprep.subr.mxu0 %v482
  %798 = vmatpush1.msra.mxu0 %v481
  %799 = vmatprep.subr.mxu0 %v486
  %800 = vmatpush1.msra.mxu0 %v485
  %801 = vmatprep.subr.mxu0 %v490
  %802 = vmatpush1.msra.mxu0 %v489
  %803 = vmatprep.subr.mxu0 %v494
  %804 = vmatpush1.msra.mxu0 %v493
  %805 = vmatprep.subr.mxu0 %v498
  %806 = vmatpush1.msra.mxu0 %v497
  %807 = vmatprep.subr.mxu0 %v502
  %808 = vmatpush1.msra.mxu0 %v501
  %809 = vmatprep.subr.mxu0 %v506
  %810 = vmatpush1.msra.mxu0 %v505
  %811 = vmatprep.subr.mxu0 %v510
  %812 = vmatpush1.msra.mxu0 %v509
  %813 = vmatprep.subr.mxu0 %v514
  %814 = vmatpush1.msra.mxu0 %v513
  %815 = vmatprep.subr.mxu0 %v518
  %816 = vmatpush1.msra.mxu0 %v517
  %817 = vmatprep.subr.mxu0 %v522
  %818 = vmatpush1.msra.mxu0 %v521
  %819 = vmatprep.subr.mxu0 %v526
  %820 = vmatpush1.msra.mxu0 %v525
  %821 = vmatprep.subr.mxu0 %v530
  %822 = vmatpush1.msra.mxu0 %v529
  %823 = vmatprep.subr.mxu0 %v534
  %824 = vmatpush1.msra.mxu0 %v533
  %825 = vmatprep.subr.mxu0 0.0
  %826 = vmatpush1.msra.mxu0 0.0
  %827 = vmatprep.subr.mxu0 0.0
  %828 = vmatpush1.msra.mxu0 0.0
  %829 = vmatprep.subr.mxu0 0.0
  %830 = vmatpush1.msra.mxu0 0.0
  %831 = vmatprep.subr.mxu0 0.0
  %832 = vmatpush1.msra.mxu0 0.0
  %833 = vmatprep.subr.mxu0 0.0
  %834 = vmatpush1.msra.mxu0 0.0
  %835 = vmatprep.subr.mxu0 0.0
  %836 = vmatpush1.msra.mxu0 0.0
  %837 = vmatprep.subr.mxu0 0.0
  %838 = vmatpush1.msra.mxu0 0.0
  %839 = vmatprep.subr.mxu0 0.0
  %840 = vmatpush1.msra.mxu0 0.0
  %841 = vmatprep.subr.mxu0 0.0
  %842 = vmatpush1.msra.mxu0 0.0
  %843 = vmatprep.subr.mxu0 0.0
  %844 = vmatpush1.msra.mxu0 0.0
  %845 = vmatprep.subr.mxu0 0.0
  %846 = vmatpush1.msra.mxu0 0.0
  %847 = vmatprep.subr.mxu0 0.0
  %848 = vmatpush1.msra.mxu0 0.0
  %849 = vmatprep.subr.mxu0 0.0
  %850 = vmatpush1.msra.mxu0 0.0
  %851 = vmatprep.subr.mxu0 0.0
  %852 = vmatpush1.msra.mxu0 0.0
  %853 = vmatprep.subr.mxu0 0.0
  %854 = vmatpush1.msra.mxu0 0.0
  %855 = vmatprep.subr.mxu0 0.0
  %856 = vmatpush1.msra.mxu0 0.0
  %857 = vmatprep.mubr.f32.mxu0 0.0
  %858 = vmatmul.mubr.f32.gmra.mrb[0].mxu0 %v713
  %v859 = vpop.f32.mrb[0].mxu0
  %v860 = vadd.f32 0.0, %v859
  %v861 = vpop.f32.mrb[0].mxu0
  %v862 = vadd.f32 0.0, %v861
  %863 = vdwg.mxu0
  %v864 = vadd.f32 %v718, %v789
  %v865 = vadd.f32 %v719, %v791
  %v866 = vadd.f32 %v720, %v860
  %v867 = vadd.f32 %v721, %v862
  %v868 = vxor.u32 %v864, 2147483648
  %v869 = vmul.f32 %v868, 1.442695
  %v870 = vpow.pop %v869
  %v871 = vadd.f32 %v870, 1.0
  %v872 = vrcp.pop %v871
  %v873 = vmul.f32 1.0, %v872
  %v874 = vxor.u32 %v865, 2147483648
  %v875 = vmul.f32 %v874, 1.442695
  %v876 = vpow.pop %v875
  %v877 = vadd.f32 %v876, 1.0
  %v878 = vrcp.pop %v877
  %v879 = vmul.f32 1.0, %v878
  %v880 = vtanh.pop %v866
  %v881 = vxor.u32 %v867, 2147483648
  %v882 = vmul.f32 %v881, 1.442695
  %v883 = vpow.pop %v882
  %v884 = vadd.f32 %v883, 1.0
  %v885 = vrcp.pop %v884
  %v886 = vmul.f32 1.0, %v885
  %v887 = vmul.f32 %v879, %v711
  %v888 = vmul.f32 %v873, %v880
  %v889 = vadd.f32 %v887, %v888
  %v890 = vtanh.pop %v889
  %v891 = vmul.f32 %v886, %v890
  %s892 = scalar_lea.vmem [#allocation3], 8
  %893 = vst [vmem:[%s892] sm:$0xff] %v891
  %s894 = smul.u32 2, 4
  %s895 = smul.addr %s894, 8
  %s896 = scalar_lea.vmem [#allocation2], %s895
  %v897 = vld [vmem:[%s896] sm:$0xff]
  %v898 = vld [vmem:[%s896 + $0x8] sm:$0xff]
  %v899 = vld [vmem:[%s896 + $0x10] sm:$0xff]
  %v900 = vld [vmem:[%s896 + $0x18] sm:$0xff]
  %901 = vmatprep.subr.mxu0 %v472
  %902 = vmatpush1.msra.mxu0 %v471
  %903 = vmatprep.subr.mxu0 %v476
  %904 = vmatpush1.msra.mxu0 %v475
  %905 = vmatprep.subr.mxu0 %v480
  %906 = vmatpush1.msra.mxu0 %v479
  %907 = vmatprep.subr.mxu0 %v484
  %908 = vmatpush1.msra.mxu0 %v483
  %909 = vmatprep.subr.mxu0 %v488
  %910 = vmatpush1.msra.mxu0 %v487
  %911 = vmatprep.subr.mxu0 %v492
  %912 = vmatpush1.msra.mxu0 %v491
  %913 = vmatprep.subr.mxu0 %v496
  %914 = vmatpush1.msra.mxu0 %v495
  %915 = vmatprep.subr.mxu0 %v500
  %916 = vmatpush1.msra.mxu0 %v499
  %917 = vmatprep.subr.mxu0 %v504
  %918 = vmatpush1.msra.mxu0 %v503
  %919 = vmatprep.subr.mxu0 %v508
  %920 = vmatpush1.msra.mxu0 %v507
  %921 = vmatprep.subr.mxu0 %v512
  %922 = vmatpush1.msra.mxu0 %v511
  %923 = vmatprep.subr.mxu0 %v516
  %924 = vmatpush1.msra.mxu0 %v515
  %925 = vmatprep.subr.mxu0 %v520
  %926 = vmatpush1.msra.mxu0 %v519
  %927 = vmatprep.subr.mxu0 %v524
  %928 = vmatpush1.msra.mxu0 %v523
  %929 = vmatprep.subr.mxu0 %v528
  %930 = vmatpush1.msra.mxu0 %v527
  %931 = vmatprep.subr.mxu0 %v532
  %932 = vmatpush1.msra.mxu0 %v531
  %933 = vmatprep.subr.mxu0 0.0
  %934 = vmatpush1.msra.mxu0 0.0
  %935 = vmatprep.subr.mxu0 0.0
  %936 = vmatpush1.msra.mxu0 0.0
  %937 = vmatprep.subr.mxu0 0.0
  %938 = vmatpush1.msra.mxu0 0.0
  %939 = vmatprep.subr.mxu0 0.0
  %940 = vmatpush1.msra.mxu0 0.0
  %941 = vmatprep.subr.mxu0 0.0
  %942 = vmatpush1.msra.mxu0 0.0
  %943 = vmatprep.subr.mxu0 0.0
  %944 = vmatpush1.msra.mxu0 0.0
  %945 = vmatprep.subr.mxu0 0.0
  %946 = vmatpush1.msra.mxu0 0.0
  %947 = vmatprep.subr.mxu0 0.0
  %948 = vmatpush1.msra.mxu0 0.0
  %949 = vmatprep.subr.mxu0 0.0
  %950 = vmatpush1.msra.mxu0 0.0
  %951 = vmatprep.subr.mxu0 0.0
  %952 = vmatpush1.msra.mxu0 0.0
  %953 = vmatprep.subr.mxu0 0.0
  %954 = vmatpush1.msra.mxu0 0.0
  %955 = vmatprep.subr.mxu0 0.0
  %956 = vmatpush1.msra.mxu0 0.0
  %957 = vmatprep.subr.mxu0 0.0
  %958 = vmatpush1.msra.mxu0 0.0
  %959 = vmatprep.subr.mxu0 0.0
  %960 = vmatpush1.msra.mxu0 0.0
  %961 = vmatprep.subr.mxu0 0.0
  %962 = vmatpush1.msra.mxu0 0.0
  %963 = vmatprep.subr.mxu0 0.0
  %964 = vmatpush1.msra.mxu0 0.0
  %965 = vmatprep.mubr.f32.mxu0 0.0
  %966 = vmatmul.mubr.f32.gmra.mrb[0].mxu0 %v891
  %v967 = vpop.f32.mrb[0].mxu0
  %v968 = vadd.f32 0.0, %v967
  %v969 = vpop.f32.mrb[0].mxu0
  %v970 = vadd.f32 0.0, %v969
  %971 = vdwg.mxu0
  %972 = vmatprep.subr.mxu0 %v474
  %973 = vmatpush1.msra.mxu0 %v473
  %974 = vmatprep.subr.mxu0 %v478
  %975 = vmatpush1.msra.mxu0 %v477
  %976 = vmatprep.subr.mxu0 %v482
  %977 = vmatpush1.msra.mxu0 %v481
  %978 = vmatprep.subr.mxu0 %v486
  %979 = vmatpush1.msra.mxu0 %v485
  %980 = vmatprep.subr.mxu0 %v490
  %981 = vmatpush1.msra.mxu0 %v489
  %982 = vmatprep.subr.mxu0 %v494
  %983 = vmatpush1.msra.mxu0 %v493
  %984 = vmatprep.subr.mxu0 %v498
  %985 = vmatpush1.msra.mxu0 %v497
  %986 = vmatprep.subr.mxu0 %v502
  %987 = vmatpush1.msra.mxu0 %v501
  %988 = vmatprep.subr.mxu0 %v506
  %989 = vmatpush1.msra.mxu0 %v505
  %990 = vmatprep.subr.mxu0 %v510
  %991 = vmatpush1.msra.mxu0 %v509
  %992 = vmatprep.subr.mxu0 %v514
  %993 = vmatpush1.msra.mxu0 %v513
  %994 = vmatprep.subr.mxu0 %v518
  %995 = vmatpush1.msra.mxu0 %v517
  %996 = vmatprep.subr.mxu0 %v522
  %997 = vmatpush1.msra.mxu0 %v521
  %998 = vmatprep.subr.mxu0 %v526
  %999 = vmatpush1.msra.mxu0 %v525
  %1000 = vmatprep.subr.mxu0 %v530
  %1001 = vmatpush1.msra.mxu0 %v529
  %1002 = vmatprep.subr.mxu0 %v534
  %1003 = vmatpush1.msra.mxu0 %v533
  %1004 = vmatprep.subr.mxu0 0.0
  %1005 = vmatpush1.msra.mxu0 0.0
  %1006 = vmatprep.subr.mxu0 0.0
  %1007 = vmatpush1.msra.mxu0 0.0
  %1008 = vmatprep.subr.mxu0 0.0
  %1009 = vmatpush1.msra.mxu0 0.0
  %1010 = vmatprep.subr.mxu0 0.0
  %1011 = vmatpush1.msra.mxu0 0.0
  %1012 = vmatprep.subr.mxu0 0.0
  %1013 = vmatpush1.msra.mxu0 0.0
  %1014 = vmatprep.subr.mxu0 0.0
  %1015 = vmatpush1.msra.mxu0 0.0
  %1016 = vmatprep.subr.mxu0 0.0
  %1017 = vmatpush1.msra.mxu0 0.0
  %1018 = vmatprep.subr.mxu0 0.0
  %1019 = vmatpush1.msra.mxu0 0.0
  %1020 = vmatprep.subr.mxu0 0.0
  %1021 = vmatpush1.msra.mxu0 0.0
  %1022 = vmatprep.subr.mxu0 0.0
  %1023 = vmatpush1.msra.mxu0 0.0
  %1024 = vmatprep.subr.mxu0 0.0
  %1025 = vmatpush1.msra.mxu0 0.0
  %1026 = vmatprep.subr.mxu0 0.0
  %1027 = vmatpush1.msra.mxu0 0.0
  %1028 = vmatprep.subr.mxu0 0.0
  %1029 = vmatpush1.msra.mxu0 0.0
  %1030 = vmatprep.subr.mxu0 0.0
  %1031 = vmatpush1.msra.mxu0 0.0
  %1032 = vmatprep.subr.mxu0 0.0
  %1033 = vmatpush1.msra.mxu0 0.0
  %1034 = vmatprep.subr.mxu0 0.0
  %1035 = vmatpush1.msra.mxu0 0.0
  %1036 = vmatprep.mubr.f32.mxu0 0.0
  %1037 = vmatmul.mubr.f32.gmra.mrb[0].mxu0 %v891
  %v1038 = vpop.f32.mrb[0].mxu0
  %v1039 = vadd.f32 0.0, %v1038
  %v1040 = vpop.f32.mrb[0].mxu0
  %v1041 = vadd.f32 0.0, %v1040
  %1042 = vdwg.mxu0
  %v1043 = vadd.f32 %v897, %v968
  %v1044 = vadd.f32 %v898, %v970
  %v1045 = vadd.f32 %v899, %v1039
  %v1046 = vadd.f32 %v900, %v1041
  %v1047 = vxor.u32 %v1043, 2147483648
  %v1048 = vmul.f32 %v1047, 1.442695
  %v1049 = vpow.pop %v1048
  %v1050 = vadd.f32 %v1049, 1.0
  %v1051 = vrcp.pop %v1050
  %v1052 = vmul.f32 1.0, %v1051
  %v1053 = vxor.u32 %v1044, 2147483648
  %v1054 = vmul.f32 %v1053, 1.442695
  %v1055 = vpow.pop %v1054
  %v1056 = vadd.f32 %v1055, 1.0
  %v1057 = vrcp.pop %v1056
  %v1058 = vmul.f32 1.0, %v1057
  %v1059 = vtanh.pop %v1045
  %v1060 = vxor.u32 %v1046, 2147483648
  %v1061 = vmul.f32 %v1060, 1.442695
  %v1062 = vpow.pop %v1061
  %v1063 = vadd.f32 %v1062, 1.0
  %v1064 = vrcp.pop %v1063
  %v1065 = vmul.f32 1.0, %v1064
  %v1066 = vmul.f32 %v1058, %v889
  %v1067 = vmul.f32 %v1052, %v1059
  %v1068 = vadd.f32 %v1066, %v1067
  %v1069 = vtanh.pop %v1068
  %v1070 = vmul.f32 %v1065, %v1069
  %s1071 = scalar_lea.vmem [#allocation3], 16
  %1072 = vst [vmem:[%s1071] sm:$0xff] %v1070
  %s1073 = smul.u32 3, 4
  %s1074 = smul.addr %s1073, 8
  %s1075 = scalar_lea.vmem [#allocation2], %s1074
  %v1076 = vld [vmem:[%s1075] sm:$0xff]
  %v1077 = vld [vmem:[%s1075 + $0x8] sm:$0xff]
  %v1078 = vld [vmem:[%s1075 + $0x10] sm:$0xff]
  %v1079 = vld [vmem:[%s1075 + $0x18] sm:$0xff]
  %1080 = vmatprep.subr.mxu0 %v472
  %1081 = vmatpush1.msra.mxu0 %v471
  %1082 = vmatprep.subr.mxu0 %v476
  %1083 = vmatpush1.msra.mxu0 %v475
  %1084 = vmatprep.subr.mxu0 %v480
  %1085 = vmatpush1.msra.mxu0 %v479
  %1086 = vmatprep.subr.mxu0 %v484
  %1087 = vmatpush1.msra.mxu0 %v483
  %1088 = vmatprep.subr.mxu0 %v488
  %1089 = vmatpush1.msra.mxu0 %v487
  %1090 = vmatprep.subr.mxu0 %v492
  %1091 = vmatpush1.msra.mxu0 %v491
  %1092 = vmatprep.subr.mxu0 %v496
  %1093 = vmatpush1.msra.mxu0 %v495
  %1094 = vmatprep.subr.mxu0 %v500
  %1095 = vmatpush1.msra.mxu0 %v499
  %1096 = vmatprep.subr.mxu0 %v504
  %1097 = vmatpush1.msra.mxu0 %v503
  %1098 = vmatprep.subr.mxu0 %v508
  %1099 = vmatpush1.msra.mxu0 %v507
  %1100 = vmatprep.subr.mxu0 %v512
  %1101 = vmatpush1.msra.mxu0 %v511
  %1102 = vmatprep.subr.mxu0 %v516
  %1103 = vmatpush1.msra.mxu0 %v515
  %1104 = vmatprep.subr.mxu0 %v520
  %1105 = vmatpush1.msra.mxu0 %v519
  %1106 = vmatprep.subr.mxu0 %v524
  %1107 = vmatpush1.msra.mxu0 %v523
  %1108 = vmatprep.subr.mxu0 %v528
  %1109 = vmatpush1.msra.mxu0 %v527
  %1110 = vmatprep.subr.mxu0 %v532
  %1111 = vmatpush1.msra.mxu0 %v531
  %1112 = vmatprep.subr.mxu0 0.0
  %1113 = vmatpush1.msra.mxu0 0.0
  %1114 = vmatprep.subr.mxu0 0.0
  %1115 = vmatpush1.msra.mxu0 0.0
  %1116 = vmatprep.subr.mxu0 0.0
  %1117 = vmatpush1.msra.mxu0 0.0
  %1118 = vmatprep.subr.mxu0 0.0
  %1119 = vmatpush1.msra.mxu0 0.0
  %1120 = vmatprep.subr.mxu0 0.0
  %1121 = vmatpush1.msra.mxu0 0.0
  %1122 = vmatprep.subr.mxu0 0.0
  %1123 = vmatpush1.msra.mxu0 0.0
  %1124 = vmatprep.subr.mxu0 0.0
  %1125 = vmatpush1.msra.mxu0 0.0
  %1126 = vmatprep.subr.mxu0 0.0
  %1127 = vmatpush1.msra.mxu0 0.0
  %1128 = vmatprep.subr.mxu0 0.0
  %1129 = vmatpush1.msra.mxu0 0.0
  %1130 = vmatprep.subr.mxu0 0.0
  %1131 = vmatpush1.msra.mxu0 0.0
  %1132 = vmatprep.subr.mxu0 0.0
  %1133 = vmatpush1.msra.mxu0 0.0
  %1134 = vmatprep.subr.mxu0 0.0
  %1135 = vmatpush1.msra.mxu0 0.0
  %1136 = vmatprep.subr.mxu0 0.0
  %1137 = vmatpush1.msra.mxu0 0.0
  %1138 = vmatprep.subr.mxu0 0.0
  %1139 = vmatpush1.msra.mxu0 0.0
  %1140 = vmatprep.subr.mxu0 0.0
  %1141 = vmatpush1.msra.mxu0 0.0
  %1142 = vmatprep.subr.mxu0 0.0
  %1143 = vmatpush1.msra.mxu0 0.0
  %1144 = vmatprep.mubr.f32.mxu0 0.0
  %1145 = vmatmul.mubr.f32.gmra.mrb[0].mxu0 %v1070
  %v1146 = vpop.f32.mrb[0].mxu0
  %v1147 = vadd.f32 0.0, %v1146
  %v1148 = vpop.f32.mrb[0].mxu0
  %v1149 = vadd.f32 0.0, %v1148
  %1150 = vdwg.mxu0
  %1151 = vmatprep.subr.mxu0 %v474
  %1152 = vmatpush1.msra.mxu0 %v473
  %1153 = vmatprep.subr.mxu0 %v478
  %1154 = vmatpush1.msra.mxu0 %v477
  %1155 = vmatprep.subr.mxu0 %v482
  %1156 = vmatpush1.msra.mxu0 %v481
  %1157 = vmatprep.subr.mxu0 %v486
  %1158 = vmatpush1.msra.mxu0 %v485
  %1159 = vmatprep.subr.mxu0 %v490
  %1160 = vmatpush1.msra.mxu0 %v489
  %1161 = vmatprep.subr.mxu0 %v494
  %1162 = vmatpush1.msra.mxu0 %v493
  %1163 = vmatprep.subr.mxu0 %v498
  %1164 = vmatpush1.msra.mxu0 %v497
  %1165 = vmatprep.subr.mxu0 %v502
  %1166 = vmatpush1.msra.mxu0 %v501
  %1167 = vmatprep.subr.mxu0 %v506
  %1168 = vmatpush1.msra.mxu0 %v505
  %1169 = vmatprep.subr.mxu0 %v510
  %1170 = vmatpush1.msra.mxu0 %v509
  %1171 = vmatprep.subr.mxu0 %v514
  %1172 = vmatpush1.msra.mxu0 %v513
  %1173 = vmatprep.subr.mxu0 %v518
  %1174 = vmatpush1.msra.mxu0 %v517
  %1175 = vmatprep.subr.mxu0 %v522
  %1176 = vmatpush1.msra.mxu0 %v521
  %1177 = vmatprep.subr.mxu0 %v526
  %1178 = vmatpush1.msra.mxu0 %v525
  %1179 = vmatprep.subr.mxu0 %v530
  %1180 = vmatpush1.msra.mxu0 %v529
  %1181 = vmatprep.subr.mxu0 %v534
  %1182 = vmatpush1.msra.mxu0 %v533
  %1183 = vmatprep.subr.mxu0 0.0
  %1184 = vmatpush1.msra.mxu0 0.0
  %1185 = vmatprep.subr.mxu0 0.0
  %1186 = vmatpush1.msra.mxu0 0.0
  %1187 = vmatprep.subr.mxu0 0.0
  %1188 = vmatpush1.msra.mxu0 0.0
  %1189 = vmatprep.subr.mxu0 0.0
  %1190 = vmatpush1.msra.mxu0 0.0
  %1191 = vmatprep.subr.mxu0 0.0
  %1192 = vmatpush1.msra.mxu0 0.0
  %1193 = vmatprep.subr.mxu0 0.0
  %1194 = vmatpush1.msra.mxu0 0.0
  %1195 = vmatprep.subr.mxu0 0.0
  %1196 = vmatpush1.msra.mxu0 0.0
  %1197 = vmatprep.subr.mxu0 0.0
  %1198 = vmatpush1.msra.mxu0 0.0
  %1199 = vmatprep.subr.mxu0 0.0
  %1200 = vmatpush1.msra.mxu0 0.0
  %1201 = vmatprep.subr.mxu0 0.0
  %1202 = vmatpush1.msra.mxu0 0.0
  %1203 = vmatprep.subr.mxu0 0.0
  %1204 = vmatpush1.msra.mxu0 0.0
  %1205 = vmatprep.subr.mxu0 0.0
  %1206 = vmatpush1.msra.mxu0 0.0
  %1207 = vmatprep.subr.mxu0 0.0
  %1208 = vmatpush1.msra.mxu0 0.0
  %1209 = vmatprep.subr.mxu0 0.0
  %1210 = vmatpush1.msra.mxu0 0.0
  %1211 = vmatprep.subr.mxu0 0.0
  %1212 = vmatpush1.msra.mxu0 0.0
  %1213 = vmatprep.subr.mxu0 0.0
  %1214 = vmatpush1.msra.mxu0 0.0
  %1215 = vmatprep.mubr.f32.mxu0 0.0
  %1216 = vmatmul.mubr.f32.gmra.mrb[0].mxu0 %v1070
  %v1217 = vpop.f32.mrb[0].mxu0
  %v1218 = vadd.f32 0.0, %v1217
  %v1219 = vpop.f32.mrb[0].mxu0
  %v1220 = vadd.f32 0.0, %v1219
  %1221 = vdwg.mxu0
  %v1222 = vadd.f32 %v1076, %v1147
  %v1223 = vadd.f32 %v1077, %v1149
  %v1224 = vadd.f32 %v1078, %v1218
  %v1225 = vadd.f32 %v1079, %v1220
  %v1226 = vxor.u32 %v1222, 2147483648
  %v1227 = vmul.f32 %v1226, 1.442695
  %v1228 = vpow.pop %v1227
  %v1229 = vadd.f32 %v1228, 1.0
  %v1230 = vrcp.pop %v1229
  %v1231 = vmul.f32 1.0, %v1230
  %v1232 = vxor.u32 %v1223, 2147483648
  %v1233 = vmul.f32 %v1232, 1.442695
  %v1234 = vpow.pop %v1233
  %v1235 = vadd.f32 %v1234, 1.0
  %v1236 = vrcp.pop %v1235
  %v1237 = vmul.f32 1.0, %v1236
  %v1238 = vtanh.pop %v1224
  %v1239 = vxor.u32 %v1225, 2147483648
  %v1240 = vmul.f32 %v1239, 1.442695
  %v1241 = vpow.pop %v1240
  %v1242 = vadd.f32 %v1241, 1.0
  %v1243 = vrcp.pop %v1242
  %v1244 = vmul.f32 1.0, %v1243
  %v1245 = vmul.f32 %v1237, %v1068
  %v1246 = vmul.f32 %v1231, %v1238
  %v1247 = vadd.f32 %v1245, %v1246
  %v1248 = vtanh.pop %v1247
  %v1249 = vmul.f32 %v1244, %v1248
  %s1250 = scalar_lea.vmem [#allocation3], 24
  %1251 = vst [vmem:[%s1250] sm:$0xff] %v1249
  %s1252 = smul.u32 4, 4
  %s1253 = smul.addr %s1252, 8
  %s1254 = scalar_lea.vmem [#allocation2], %s1253
  %v1255 = vld [vmem:[%s1254] sm:$0xff]
  %v1256 = vld [vmem:[%s1254 + $0x8] sm:$0xff]
  %v1257 = vld [vmem:[%s1254 + $0x10] sm:$0xff]
  %v1258 = vld [vmem:[%s1254 + $0x18] sm:$0xff]
  %1259 = vmatprep.subr.mxu0 %v472
  %1260 = vmatpush1.msra.mxu0 %v471
  %1261 = vmatprep.subr.mxu0 %v476
  %1262 = vmatpush1.msra.mxu0 %v475
  %1263 = vmatprep.subr.mxu0 %v480
  %1264 = vmatpush1.msra.mxu0 %v479
  %1265 = vmatprep.subr.mxu0 %v484
  %1266 = vmatpush1.msra.mxu0 %v483
  %1267 = vmatprep.subr.mxu0 %v488
  %1268 = vmatpush1.msra.mxu0 %v487
  %1269 = vmatprep.subr.mxu0 %v492
  %1270 = vmatpush1.msra.mxu0 %v491
  %1271 = vmatprep.subr.mxu0 %v496
  %1272 = vmatpush1.msra.mxu0 %v495
  %1273 = vmatprep.subr.mxu0 %v500
  %1274 = vmatpush1.msra.mxu0 %v499
  %1275 = vmatprep.subr.mxu0 %v504
  %1276 = vmatpush1.msra.mxu0 %v503
  %1277 = vmatprep.subr.mxu0 %v508
  %1278 = vmatpush1.msra.mxu0 %v507
  %1279 = vmatprep.subr.mxu0 %v512
  %1280 = vmatpush1.msra.mxu0 %v511
  %1281 = vmatprep.subr.mxu0 %v516
  %1282 = vmatpush1.msra.mxu0 %v515
  %1283 = vmatprep.subr.mxu0 %v520
  %1284 = vmatpush1.msra.mxu0 %v519
  %1285 = vmatprep.subr.mxu0 %v524
  %1286 = vmatpush1.msra.mxu0 %v523
  %1287 = vmatprep.subr.mxu0 %v528
  %1288 = vmatpush1.msra.mxu0 %v527
  %1289 = vmatprep.subr.mxu0 %v532
  %1290 = vmatpush1.msra.mxu0 %v531
  %1291 = vmatprep.subr.mxu0 0.0
  %1292 = vmatpush1.msra.mxu0 0.0
  %1293 = vmatprep.subr.mxu0 0.0
  %1294 = vmatpush1.msra.mxu0 0.0
  %1295 = vmatprep.subr.mxu0 0.0
  %1296 = vmatpush1.msra.mxu0 0.0
  %1297 = vmatprep.subr.mxu0 0.0
  %1298 = vmatpush1.msra.mxu0 0.0
  %1299 = vmatprep.subr.mxu0 0.0
  %1300 = vmatpush1.msra.mxu0 0.0
  %1301 = vmatprep.subr.mxu0 0.0
  %1302 = vmatpush1.msra.mxu0 0.0
  %1303 = vmatprep.subr.mxu0 0.0
  %1304 = vmatpush1.msra.mxu0 0.0
  %1305 = vmatprep.subr.mxu0 0.0
  %1306 = vmatpush1.msra.mxu0 0.0
  %1307 = vmatprep.subr.mxu0 0.0
  %1308 = vmatpush1.msra.mxu0 0.0
  %1309 = vmatprep.subr.mxu0 0.0
  %1310 = vmatpush1.msra.mxu0 0.0
  %1311 = vmatprep.subr.mxu0 0.0
  %1312 = vmatpush1.msra.mxu0 0.0
  %1313 = vmatprep.subr.mxu0 0.0
  %1314 = vmatpush1.msra.mxu0 0.0
  %1315 = vmatprep.subr.mxu0 0.0
  %1316 = vmatpush1.msra.mxu0 0.0
  %1317 = vmatprep.subr.mxu0 0.0
  %1318 = vmatpush1.msra.mxu0 0.0
  %1319 = vmatprep.subr.mxu0 0.0
  %1320 = vmatpush1.msra.mxu0 0.0
  %1321 = vmatprep.subr.mxu0 0.0
  %1322 = vmatpush1.msra.mxu0 0.0
  %1323 = vmatprep.mubr.f32.mxu0 0.0
  %1324 = vmatmul.mubr.f32.gmra.mrb[0].mxu0 %v1249
  %v1325 = vpop.f32.mrb[0].mxu0
  %v1326 = vadd.f32 0.0, %v1325
  %v1327 = vpop.f32.mrb[0].mxu0
  %v1328 = vadd.f32 0.0, %v1327
  %1329 = vdwg.mxu0
  %1330 = vmatprep.subr.mxu0 %v474
  %1331 = vmatpush1.msra.mxu0 %v473
  %1332 = vmatprep.subr.mxu0 %v478
  %1333 = vmatpush1.msra.mxu0 %v477
  %1334 = vmatprep.subr.mxu0 %v482
  %1335 = vmatpush1.msra.mxu0 %v481
  %1336 = vmatprep.subr.mxu0 %v486
  %1337 = vmatpush1.msra.mxu0 %v485
  %1338 = vmatprep.subr.mxu0 %v490
  %1339 = vmatpush1.msra.mxu0 %v489
  %1340 = vmatprep.subr.mxu0 %v494
  %1341 = vmatpush1.msra.mxu0 %v493
  %1342 = vmatprep.subr.mxu0 %v498
  %1343 = vmatpush1.msra.mxu0 %v497
  %1344 = vmatprep.subr.mxu0 %v502
  %1345 = vmatpush1.msra.mxu0 %v501
  %1346 = vmatprep.subr.mxu0 %v506
  %1347 = vmatpush1.msra.mxu0 %v505
  %1348 = vmatprep.subr.mxu0 %v510
  %1349 = vmatpush1.msra.mxu0 %v509
  %1350 = vmatprep.subr.mxu0 %v514
  %1351 = vmatpush1.msra.mxu0 %v513
  %1352 = vmatprep.subr.mxu0 %v518
  %1353 = vmatpush1.msra.mxu0 %v517
  %1354 = vmatprep.subr.mxu0 %v522
  %1355 = vmatpush1.msra.mxu0 %v521
  %1356 = vmatprep.subr.mxu0 %v526
  %1357 = vmatpush1.msra.mxu0 %v525
  %1358 = vmatprep.subr.mxu0 %v530
  %1359 = vmatpush1.msra.mxu0 %v529
  %1360 = vmatprep.subr.mxu0 %v534
  %1361 = vmatpush1.msra.mxu0 %v533
  %1362 = vmatprep.subr.mxu0 0.0
  %1363 = vmatpush1.msra.mxu0 0.0
  %1364 = vmatprep.subr.mxu0 0.0
  %1365 = vmatpush1.msra.mxu0 0.0
  %1366 = vmatprep.subr.mxu0 0.0
  %1367 = vmatpush1.msra.mxu0 0.0
  %1368 = vmatprep.subr.mxu0 0.0
  %1369 = vmatpush1.msra.mxu0 0.0
  %1370 = vmatprep.subr.mxu0 0.0
  %1371 = vmatpush1.msra.mxu0 0.0
  %1372 = vmatprep.subr.mxu0 0.0
  %1373 = vmatpush1.msra.mxu0 0.0
  %1374 = vmatprep.subr.mxu0 0.0
  %1375 = vmatpush1.msra.mxu0 0.0
  %1376 = vmatprep.subr.mxu0 0.0
  %1377 = vmatpush1.msra.mxu0 0.0
  %1378 = vmatprep.subr.mxu0 0.0
  %1379 = vmatpush1.msra.mxu0 0.0
  %1380 = vmatprep.subr.mxu0 0.0
  %1381 = vmatpush1.msra.mxu0 0.0
  %1382 = vmatprep.subr.mxu0 0.0
  %1383 = vmatpush1.msra.mxu0 0.0
  %1384 = vmatprep.subr.mxu0 0.0
  %1385 = vmatpush1.msra.mxu0 0.0
  %1386 = vmatprep.subr.mxu0 0.0
  %1387 = vmatpush1.msra.mxu0 0.0
  %1388 = vmatprep.subr.mxu0 0.0
  %1389 = vmatpush1.msra.mxu0 0.0
  %1390 = vmatprep.subr.mxu0 0.0
  %1391 = vmatpush1.msra.mxu0 0.0
  %1392 = vmatprep.subr.mxu0 0.0
  %1393 = vmatpush1.msra.mxu0 0.0
  %1394 = vmatprep.mubr.f32.mxu0 0.0
  %1395 = vmatmul.mubr.f32.gmra.mrb[0].mxu0 %v1249
  %v1396 = vpop.f32.mrb[0].mxu0
  %v1397 = vadd.f32 0.0, %v1396
  %v1398 = vpop.f32.mrb[0].mxu0
  %v1399 = vadd.f32 0.0, %v1398
  %1400 = vdwg.mxu0
  %v1401 = vadd.f32 %v1255, %v1326
  %v1402 = vadd.f32 %v1256, %v1328
  %v1403 = vadd.f32 %v1257, %v1397
  %v1404 = vadd.f32 %v1258, %v1399
  %v1405 = vxor.u32 %v1401, 2147483648
  %v1406 = vmul.f32 %v1405, 1.442695
  %v1407 = vpow.pop %v1406
  %v1408 = vadd.f32 %v1407, 1.0
  %v1409 = vrcp.pop %v1408
  %v1410 = vmul.f32 1.0, %v1409
  %v1411 = vxor.u32 %v1402, 2147483648
  %v1412 = vmul.f32 %v1411, 1.442695
  %v1413 = vpow.pop %v1412
  %v1414 = vadd.f32 %v1413, 1.0
  %v1415 = vrcp.pop %v1414
  %v1416 = vmul.f32 1.0, %v1415
  %v1417 = vtanh.pop %v1403
  %v1418 = vxor.u32 %v1404, 2147483648
  %v1419 = vmul.f32 %v1418, 1.442695
  %v1420 = vpow.pop %v1419
  %v1421 = vadd.f32 %v1420, 1.0
  %v1422 = vrcp.pop %v1421
  %v1423 = vmul.f32 1.0, %v1422
  %v1424 = vmul.f32 %v1416, %v1247
  %v1425 = vmul.f32 %v1410, %v1417
  %v1426 = vadd.f32 %v1424, %v1425
  %v1427 = vtanh.pop %v1426
  %v1428 = vmul.f32 %v1423, %v1427
  %s1429 = scalar_lea.vmem [#allocation3], 32
  %1430 = vst [vmem:[%s1429] sm:$0xff] %v1428
  %s1431 = smul.u32 5, 4
  %s1432 = smul.addr %s1431, 8
  %s1433 = scalar_lea.vmem [#allocation2], %s1432
  %v1434 = vld [vmem:[%s1433] sm:$0xff]
  %v1435 = vld [vmem:[%s1433 + $0x8] sm:$0xff]
  %v1436 = vld [vmem:[%s1433 + $0x10] sm:$0xff]
  %v1437 = vld [vmem:[%s1433 + $0x18] sm:$0xff]
  %1438 = vmatprep.subr.mxu0 %v472
  %1439 = vmatpush1.msra.mxu0 %v471
  %1440 = vmatprep.subr.mxu0 %v476
  %1441 = vmatpush1.msra.mxu0 %v475
  %1442 = vmatprep.subr.mxu0 %v480
  %1443 = vmatpush1.msra.mxu0 %v479
  %1444 = vmatprep.subr.mxu0 %v484
  %1445 = vmatpush1.msra.mxu0 %v483
  %1446 = vmatprep.subr.mxu0 %v488
  %1447 = vmatpush1.msra.mxu0 %v487
  %1448 = vmatprep.subr.mxu0 %v492
  %1449 = vmatpush1.msra.mxu0 %v491
  %1450 = vmatprep.subr.mxu0 %v496
  %1451 = vmatpush1.msra.mxu0 %v495
  %1452 = vmatprep.subr.mxu0 %v500
  %1453 = vmatpush1.msra.mxu0 %v499
  %1454 = vmatprep.subr.mxu0 %v504
  %1455 = vmatpush1.msra.mxu0 %v503
  %1456 = vmatprep.subr.mxu0 %v508
  %1457 = vmatpush1.msra.mxu0 %v507
  %1458 = vmatprep.subr.mxu0 %v512
  %1459 = vmatpush1.msra.mxu0 %v511
  %1460 = vmatprep.subr.mxu0 %v516
  %1461 = vmatpush1.msra.mxu0 %v515
  %1462 = vmatprep.subr.mxu0 %v520
  %1463 = vmatpush1.msra.mxu0 %v519
  %1464 = vmatprep.subr.mxu0 %v524
  %1465 = vmatpush1.msra.mxu0 %v523
  %1466 = vmatprep.subr.mxu0 %v528
  %1467 = vmatpush1.msra.mxu0 %v527
  %1468 = vmatprep.subr.mxu0 %v532
  %1469 = vmatpush1.msra.mxu0 %v531
  %1470 = vmatprep.subr.mxu0 0.0
  %1471 = vmatpush1.msra.mxu0 0.0
  %1472 = vmatprep.subr.mxu0 0.0
  %1473 = vmatpush1.msra.mxu0 0.0
  %1474 = vmatprep.subr.mxu0 0.0
  %1475 = vmatpush1.msra.mxu0 0.0
  %1476 = vmatprep.subr.mxu0 0.0
  %1477 = vmatpush1.msra.mxu0 0.0
  %1478 = vmatprep.subr.mxu0 0.0
  %1479 = vmatpush1.msra.mxu0 0.0
  %1480 = vmatprep.subr.mxu0 0.0
  %1481 = vmatpush1.msra.mxu0 0.0
  %1482 = vmatprep.subr.mxu0 0.0
  %1483 = vmatpush1.msra.mxu0 0.0
  %1484 = vmatprep.subr.mxu0 0.0
  %1485 = vmatpush1.msra.mxu0 0.0
  %1486 = vmatprep.subr.mxu0 0.0
  %1487 = vmatpush1.msra.mxu0 0.0
  %1488 = vmatprep.subr.mxu0 0.0
  %1489 = vmatpush1.msra.mxu0 0.0
  %1490 = vmatprep.subr.mxu0 0.0
  %1491 = vmatpush1.msra.mxu0 0.0
  %1492 = vmatprep.subr.mxu0 0.0
  %1493 = vmatpush1.msra.mxu0 0.0
  %1494 = vmatprep.subr.mxu0 0.0
  %1495 = vmatpush1.msra.mxu0 0.0
  %1496 = vmatprep.subr.mxu0 0.0
  %1497 = vmatpush1.msra.mxu0 0.0
  %1498 = vmatprep.subr.mxu0 0.0
  %1499 = vmatpush1.msra.mxu0 0.0
  %1500 = vmatprep.subr.mxu0 0.0
  %1501 = vmatpush1.msra.mxu0 0.0
  %1502 = vmatprep.mubr.f32.mxu0 0.0
  %1503 = vmatmul.mubr.f32.gmra.mrb[0].mxu0 %v1428
  %v1504 = vpop.f32.mrb[0].mxu0
  %v1505 = vadd.f32 0.0, %v1504
  %v1506 = vpop.f32.mrb[0].mxu0
  %v1507 = vadd.f32 0.0, %v1506
  %1508 = vdwg.mxu0
  %1509 = vmatprep.subr.mxu0 %v474
  %1510 = vmatpush1.msra.mxu0 %v473
  %1511 = vmatprep.subr.mxu0 %v478
  %1512 = vmatpush1.msra.mxu0 %v477
  %1513 = vmatprep.subr.mxu0 %v482
  %1514 = vmatpush1.msra.mxu0 %v481
  %1515 = vmatprep.subr.mxu0 %v486
  %1516 = vmatpush1.msra.mxu0 %v485
  %1517 = vmatprep.subr.mxu0 %v490
  %1518 = vmatpush1.msra.mxu0 %v489
  %1519 = vmatprep.subr.mxu0 %v494
  %1520 = vmatpush1.msra.mxu0 %v493
  %1521 = vmatprep.subr.mxu0 %v498
  %1522 = vmatpush1.msra.mxu0 %v497
  %1523 = vmatprep.subr.mxu0 %v502
  %1524 = vmatpush1.msra.mxu0 %v501
  %1525 = vmatprep.subr.mxu0 %v506
  %1526 = vmatpush1.msra.mxu0 %v505
  %1527 = vmatprep.subr.mxu0 %v510
  %1528 = vmatpush1.msra.mxu0 %v509
  %1529 = vmatprep.subr.mxu0 %v514
  %1530 = vmatpush1.msra.mxu0 %v513
  %1531 = vmatprep.subr.mxu0 %v518
  %1532 = vmatpush1.msra.mxu0 %v517
  %1533 = vmatprep.subr.mxu0 %v522
  %1534 = vmatpush1.msra.mxu0 %v521
  %1535 = vmatprep.subr.mxu0 %v526
  %1536 = vmatpush1.msra.mxu0 %v525
  %1537 = vmatprep.subr.mxu0 %v530
  %1538 = vmatpush1.msra.mxu0 %v529
  %1539 = vmatprep.subr.mxu0 %v534
  %1540 = vmatpush1.msra.mxu0 %v533
  %1541 = vmatprep.subr.mxu0 0.0
  %1542 = vmatpush1.msra.mxu0 0.0
  %1543 = vmatprep.subr.mxu0 0.0
  %1544 = vmatpush1.msra.mxu0 0.0
  %1545 = vmatprep.subr.mxu0 0.0
  %1546 = vmatpush1.msra.mxu0 0.0
  %1547 = vmatprep.subr.mxu0 0.0
  %1548 = vmatpush1.msra.mxu0 0.0
  %1549 = vmatprep.subr.mxu0 0.0
  %1550 = vmatpush1.msra.mxu0 0.0
  %1551 = vmatprep.subr.mxu0 0.0
  %1552 = vmatpush1.msra.mxu0 0.0
  %1553 = vmatprep.subr.mxu0 0.0
  %1554 = vmatpush1.msra.mxu0 0.0
  %1555 = vmatprep.subr.mxu0 0.0
  %1556 = vmatpush1.msra.mxu0 0.0
  %1557 = vmatprep.subr.mxu0 0.0
  %1558 = vmatpush1.msra.mxu0 0.0
  %1559 = vmatprep.subr.mxu0 0.0
  %1560 = vmatpush1.msra.mxu0 0.0
  %1561 = vmatprep.subr.mxu0 0.0
  %1562 = vmatpush1.msra.mxu0 0.0
  %1563 = vmatprep.subr.mxu0 0.0
  %1564 = vmatpush1.msra.mxu0 0.0
  %1565 = vmatprep.subr.mxu0 0.0
  %1566 = vmatpush1.msra.mxu0 0.0
  %1567 = vmatprep.subr.mxu0 0.0
  %1568 = vmatpush1.msra.mxu0 0.0
  %1569 = vmatprep.subr.mxu0 0.0
  %1570 = vmatpush1.msra.mxu0 0.0
  %1571 = vmatprep.subr.mxu0 0.0
  %1572 = vmatpush1.msra.mxu0 0.0
  %1573 = vmatprep.mubr.f32.mxu0 0.0
  %1574 = vmatmul.mubr.f32.gmra.mrb[0].mxu0 %v1428
  %v1575 = vpop.f32.mrb[0].mxu0
  %v1576 = vadd.f32 0.0, %v1575
  %v1577 = vpop.f32.mrb[0].mxu0
  %v1578 = vadd.f32 0.0, %v1577
  %1579 = vdwg.mxu0
  %v1580 = vadd.f32 %v1434, %v1505
  %v1581 = vadd.f32 %v1435, %v1507
  %v1582 = vadd.f32 %v1436, %v1576
  %v1583 = vadd.f32 %v1437, %v1578
  %v1584 = vxor.u32 %v1580, 2147483648
  %v1585 = vmul.f32 %v1584, 1.442695
  %v1586 = vpow.pop %v1585
  %v1587 = vadd.f32 %v1586, 1.0
  %v1588 = vrcp.pop %v1587
  %v1589 = vmul.f32 1.0, %v1588
  %v1590 = vxor.u32 %v1581, 2147483648
  %v1591 = vmul.f32 %v1590, 1.442695
  %v1592 = vpow.pop %v1591
  %v1593 = vadd.f32 %v1592, 1.0
  %v1594 = vrcp.pop %v1593
  %v1595 = vmul.f32 1.0, %v1594
  %v1596 = vtanh.pop %v1582
  %v1597 = vxor.u32 %v1583, 2147483648
  %v1598 = vmul.f32 %v1597, 1.442695
  %v1599 = vpow.pop %v1598
  %v1600 = vadd.f32 %v1599, 1.0
  %v1601 = vrcp.pop %v1600
  %v1602 = vmul.f32 1.0, %v1601
  %v1603 = vmul.f32 %v1595, %v1426
  %v1604 = vmul.f32 %v1589, %v1596
  %v1605 = vadd.f32 %v1603, %v1604
  %v1606 = vtanh.pop %v1605
  %v1607 = vmul.f32 %v1602, %v1606
  %s1608 = scalar_lea.vmem [#allocation3], 40
  %1609 = vst [vmem:[%s1608] sm:$0xff] %v1607
  %s1610 = smul.u32 6, 4
  %s1611 = smul.addr %s1610, 8
  %s1612 = scalar_lea.vmem [#allocation2], %s1611
  %v1613 = vld [vmem:[%s1612] sm:$0xff]
  %v1614 = vld [vmem:[%s1612 + $0x8] sm:$0xff]
  %v1615 = vld [vmem:[%s1612 + $0x10] sm:$0xff]
  %v1616 = vld [vmem:[%s1612 + $0x18] sm:$0xff]
  %1617 = vmatprep.subr.mxu0 %v472
  %1618 = vmatpush1.msra.mxu0 %v471
  %1619 = vmatprep.subr.mxu0 %v476
  %1620 = vmatpush1.msra.mxu0 %v475
  %1621 = vmatprep.subr.mxu0 %v480
  %1622 = vmatpush1.msra.mxu0 %v479
  %1623 = vmatprep.subr.mxu0 %v484
  %1624 = vmatpush1.msra.mxu0 %v483
  %1625 = vmatprep.subr.mxu0 %v488
  %1626 = vmatpush1.msra.mxu0 %v487
  %1627 = vmatprep.subr.mxu0 %v492
  %1628 = vmatpush1.msra.mxu0 %v491
  %1629 = vmatprep.subr.mxu0 %v496
  %1630 = vmatpush1.msra.mxu0 %v495
  %1631 = vmatprep.subr.mxu0 %v500
  %1632 = vmatpush1.msra.mxu0 %v499
  %1633 = vmatprep.subr.mxu0 %v504
  %1634 = vmatpush1.msra.mxu0 %v503
  %1635 = vmatprep.subr.mxu0 %v508
  %1636 = vmatpush1.msra.mxu0 %v507
  %1637 = vmatprep.subr.mxu0 %v512
  %1638 = vmatpush1.msra.mxu0 %v511
  %1639 = vmatprep.subr.mxu0 %v516
  %1640 = vmatpush1.msra.mxu0 %v515
  %1641 = vmatprep.subr.mxu0 %v520
  %1642 = vmatpush1.msra.mxu0 %v519
  %1643 = vmatprep.subr.mxu0 %v524
  %1644 = vmatpush1.msra.mxu0 %v523
  %1645 = vmatprep.subr.mxu0 %v528
  %1646 = vmatpush1.msra.mxu0 %v527
  %1647 = vmatprep.subr.mxu0 %v532
  %1648 = vmatpush1.msra.mxu0 %v531
  %1649 = vmatprep.subr.mxu0 0.0
  %1650 = vmatpush1.msra.mxu0 0.0
  %1651 = vmatprep.subr.mxu0 0.0
  %1652 = vmatpush1.msra.mxu0 0.0
  %1653 = vmatprep.subr.mxu0 0.0
  %1654 = vmatpush1.msra.mxu0 0.0
  %1655 = vmatprep.subr.mxu0 0.0
  %1656 = vmatpush1.msra.mxu0 0.0
  %1657 = vmatprep.subr.mxu0 0.0
  %1658 = vmatpush1.msra.mxu0 0.0
  %1659 = vmatprep.subr.mxu0 0.0
  %1660 = vmatpush1.msra.mxu0 0.0
  %1661 = vmatprep.subr.mxu0 0.0
  %1662 = vmatpush1.msra.mxu0 0.0
  %1663 = vmatprep.subr.mxu0 0.0
  %1664 = vmatpush1.msra.mxu0 0.0
  %1665 = vmatprep.subr.mxu0 0.0
  %1666 = vmatpush1.msra.mxu0 0.0
  %1667 = vmatprep.subr.mxu0 0.0
  %1668 = vmatpush1.msra.mxu0 0.0
  %1669 = vmatprep.subr.mxu0 0.0
  %1670 = vmatpush1.msra.mxu0 0.0
  %1671 = vmatprep.subr.mxu0 0.0
  %1672 = vmatpush1.msra.mxu0 0.0
  %1673 = vmatprep.subr.mxu0 0.0
  %1674 = vmatpush1.msra.mxu0 0.0
  %1675 = vmatprep.subr.mxu0 0.0
  %1676 = vmatpush1.msra.mxu0 0.0
  %1677 = vmatprep.subr.mxu0 0.0
  %1678 = vmatpush1.msra.mxu0 0.0
  %1679 = vmatprep.subr.mxu0 0.0
  %1680 = vmatpush1.msra.mxu0 0.0
  %1681 = vmatprep.mubr.f32.mxu0 0.0
  %1682 = vmatmul.mubr.f32.gmra.mrb[0].mxu0 %v1607
  %v1683 = vpop.f32.mrb[0].mxu0
  %v1684 = vadd.f32 0.0, %v1683
  %v1685 = vpop.f32.mrb[0].mxu0
  %v1686 = vadd.f32 0.0, %v1685
  %1687 = vdwg.mxu0
  %1688 = vmatprep.subr.mxu0 %v474
  %1689 = vmatpush1.msra.mxu0 %v473
  %1690 = vmatprep.subr.mxu0 %v478
  %1691 = vmatpush1.msra.mxu0 %v477
  %1692 = vmatprep.subr.mxu0 %v482
  %1693 = vmatpush1.msra.mxu0 %v481
  %1694 = vmatprep.subr.mxu0 %v486
  %1695 = vmatpush1.msra.mxu0 %v485
  %1696 = vmatprep.subr.mxu0 %v490
  %1697 = vmatpush1.msra.mxu0 %v489
  %1698 = vmatprep.subr.mxu0 %v494
  %1699 = vmatpush1.msra.mxu0 %v493
  %1700 = vmatprep.subr.mxu0 %v498
  %1701 = vmatpush1.msra.mxu0 %v497
  %1702 = vmatprep.subr.mxu0 %v502
  %1703 = vmatpush1.msra.mxu0 %v501
  %1704 = vmatprep.subr.mxu0 %v506
  %1705 = vmatpush1.msra.mxu0 %v505
  %1706 = vmatprep.subr.mxu0 %v510
  %1707 = vmatpush1.msra.mxu0 %v509
  %1708 = vmatprep.subr.mxu0 %v514
  %1709 = vmatpush1.msra.mxu0 %v513
  %1710 = vmatprep.subr.mxu0 %v518
  %1711 = vmatpush1.msra.mxu0 %v517
  %1712 = vmatprep.subr.mxu0 %v522
  %1713 = vmatpush1.msra.mxu0 %v521
  %1714 = vmatprep.subr.mxu0 %v526
  %1715 = vmatpush1.msra.mxu0 %v525
  %1716 = vmatprep.subr.mxu0 %v530
  %1717 = vmatpush1.msra.mxu0 %v529
  %1718 = vmatprep.subr.mxu0 %v534
  %1719 = vmatpush1.msra.mxu0 %v533
  %1720 = vmatprep.subr.mxu0 0.0
  %1721 = vmatpush1.msra.mxu0 0.0
  %1722 = vmatprep.subr.mxu0 0.0
  %1723 = vmatpush1.msra.mxu0 0.0
  %1724 = vmatprep.subr.mxu0 0.0
  %1725 = vmatpush1.msra.mxu0 0.0
  %1726 = vmatprep.subr.mxu0 0.0
  %1727 = vmatpush1.msra.mxu0 0.0
  %1728 = vmatprep.subr.mxu0 0.0
  %1729 = vmatpush1.msra.mxu0 0.0
  %1730 = vmatprep.subr.mxu0 0.0
  %1731 = vmatpush1.msra.mxu0 0.0
  %1732 = vmatprep.subr.mxu0 0.0
  %1733 = vmatpush1.msra.mxu0 0.0
  %1734 = vmatprep.subr.mxu0 0.0
  %1735 = vmatpush1.msra.mxu0 0.0
  %1736 = vmatprep.subr.mxu0 0.0
  %1737 = vmatpush1.msra.mxu0 0.0
  %1738 = vmatprep.subr.mxu0 0.0
  %1739 = vmatpush1.msra.mxu0 0.0
  %1740 = vmatprep.subr.mxu0 0.0
  %1741 = vmatpush1.msra.mxu0 0.0
  %1742 = vmatprep.subr.mxu0 0.0
  %1743 = vmatpush1.msra.mxu0 0.0
  %1744 = vmatprep.subr.mxu0 0.0
  %1745 = vmatpush1.msra.mxu0 0.0
  %1746 = vmatprep.subr.mxu0 0.0
  %1747 = vmatpush1.msra.mxu0 0.0
  %1748 = vmatprep.subr.mxu0 0.0
  %1749 = vmatpush1.msra.mxu0 0.0
  %1750 = vmatprep.subr.mxu0 0.0
  %1751 = vmatpush1.msra.mxu0 0.0
  %1752 = vmatprep.mubr.f32.mxu0 0.0
  %1753 = vmatmul.mubr.f32.gmra.mrb[0].mxu0 %v1607
  %v1754 = vpop.f32.mrb[0].mxu0
  %v1755 = vadd.f32 0.0, %v1754
  %v1756 = vpop.f32.mrb[0].mxu0
  %v1757 = vadd.f32 0.0, %v1756
  %1758 = vdwg.mxu0
  %v1759 = vadd.f32 %v1613, %v1684
  %v1760 = vadd.f32 %v1614, %v1686
  %v1761 = vadd.f32 %v1615, %v1755
  %v1762 = vadd.f32 %v1616, %v1757
  %v1763 = vxor.u32 %v1759, 2147483648
  %v1764 = vmul.f32 %v1763, 1.442695
  %v1765 = vpow.pop %v1764
  %v1766 = vadd.f32 %v1765, 1.0
  %v1767 = vrcp.pop %v1766
  %v1768 = vmul.f32 1.0, %v1767
  %v1769 = vxor.u32 %v1760, 2147483648
  %v1770 = vmul.f32 %v1769, 1.442695
  %v1771 = vpow.pop %v1770
  %v1772 = vadd.f32 %v1771, 1.0
  %v1773 = vrcp.pop %v1772
  %v1774 = vmul.f32 1.0, %v1773
  %v1775 = vtanh.pop %v1761
  %v1776 = vxor.u32 %v1762, 2147483648
  %v1777 = vmul.f32 %v1776, 1.442695
  %v1778 = vpow.pop %v1777
  %v1779 = vadd.f32 %v1778, 1.0
  %v1780 = vrcp.pop %v1779
  %v1781 = vmul.f32 1.0, %v1780
  %v1782 = vmul.f32 %v1774, %v1605
  %v1783 = vmul.f32 %v1768, %v1775
  %v1784 = vadd.f32 %v1782, %v1783
  %v1785 = vtanh.pop %v1784
  %v1786 = vmul.f32 %v1781, %v1785
  %s1787 = scalar_lea.vmem [#allocation3], 48
  %1788 = vst [vmem:[%s1787] sm:$0xff] %v1786
  %s1789 = smul.u32 7, 4
  %s1790 = smul.addr %s1789, 8
  %s1791 = scalar_lea.vmem [#allocation2], %s1790
  %v1792 = vld [vmem:[%s1791] sm:$0xff]
  %v1793 = vld [vmem:[%s1791 + $0x8] sm:$0xff]
  %v1794 = vld [vmem:[%s1791 + $0x10] sm:$0xff]
  %v1795 = vld [vmem:[%s1791 + $0x18] sm:$0xff]
  %1796 = vmatprep.subr.mxu0 %v472
  %1797 = vmatpush1.msra.mxu0 %v471
  %1798 = vmatprep.subr.mxu0 %v476
  %1799 = vmatpush1.msra.mxu0 %v475
  %1800 = vmatprep.subr.mxu0 %v480
  %1801 = vmatpush1.msra.mxu0 %v479
  %1802 = vmatprep.subr.mxu0 %v484
  %1803 = vmatpush1.msra.mxu0 %v483
  %1804 = vmatprep.subr.mxu0 %v488
  %1805 = vmatpush1.msra.mxu0 %v487
  %1806 = vmatprep.subr.mxu0 %v492
  %1807 = vmatpush1.msra.mxu0 %v491
  %1808 = vmatprep.subr.mxu0 %v496
  %1809 = vmatpush1.msra.mxu0 %v495
  %1810 = vmatprep.subr.mxu0 %v500
  %1811 = vmatpush1.msra.mxu0 %v499
  %1812 = vmatprep.subr.mxu0 %v504
  %1813 = vmatpush1.msra.mxu0 %v503
  %1814 = vmatprep.subr.mxu0 %v508
  %1815 = vmatpush1.msra.mxu0 %v507
  %1816 = vmatprep.subr.mxu0 %v512
  %1817 = vmatpush1.msra.mxu0 %v511
  %1818 = vmatprep.subr.mxu0 %v516
  %1819 = vmatpush1.msra.mxu0 %v515
  %1820 = vmatprep.subr.mxu0 %v520
  %1821 = vmatpush1.msra.mxu0 %v519
  %1822 = vmatprep.subr.mxu0 %v524
  %1823 = vmatpush1.msra.mxu0 %v523
  %1824 = vmatprep.subr.mxu0 %v528
  %1825 = vmatpush1.msra.mxu0 %v527
  %1826 = vmatprep.subr.mxu0 %v532
  %1827 = vmatpush1.msra.mxu0 %v531
  %1828 = vmatprep.subr.mxu0 0.0
  %1829 = vmatpush1.msra.mxu0 0.0
  %1830 = vmatprep.subr.mxu0 0.0
  %1831 = vmatpush1.msra.mxu0 0.0
  %1832 = vmatprep.subr.mxu0 0.0
  %1833 = vmatpush1.msra.mxu0 0.0
  %1834 = vmatprep.subr.mxu0 0.0
  %1835 = vmatpush1.msra.mxu0 0.0
  %1836 = vmatprep.subr.mxu0 0.0
  %1837 = vmatpush1.msra.mxu0 0.0
  %1838 = vmatprep.subr.mxu0 0.0
  %1839 = vmatpush1.msra.mxu0 0.0
  %1840 = vmatprep.subr.mxu0 0.0
  %1841 = vmatpush1.msra.mxu0 0.0
  %1842 = vmatprep.subr.mxu0 0.0
  %1843 = vmatpush1.msra.mxu0 0.0
  %1844 = vmatprep.subr.mxu0 0.0
  %1845 = vmatpush1.msra.mxu0 0.0
  %1846 = vmatprep.subr.mxu0 0.0
  %1847 = vmatpush1.msra.mxu0 0.0
  %1848 = vmatprep.subr.mxu0 0.0
  %1849 = vmatpush1.msra.mxu0 0.0
  %1850 = vmatprep.subr.mxu0 0.0
  %1851 = vmatpush1.msra.mxu0 0.0
  %1852 = vmatprep.subr.mxu0 0.0
  %1853 = vmatpush1.msra.mxu0 0.0
  %1854 = vmatprep.subr.mxu0 0.0
  %1855 = vmatpush1.msra.mxu0 0.0
  %1856 = vmatprep.subr.mxu0 0.0
  %1857 = vmatpush1.msra.mxu0 0.0
  %1858 = vmatprep.subr.mxu0 0.0
  %1859 = vmatpush1.msra.mxu0 0.0
  %1860 = vmatprep.mubr.f32.mxu0 0.0
  %1861 = vmatmul.mubr.f32.gmra.mrb[0].mxu0 %v1786
  %v1862 = vpop.f32.mrb[0].mxu0
  %v1863 = vadd.f32 0.0, %v1862
  %v1864 = vpop.f32.mrb[0].mxu0
  %v1865 = vadd.f32 0.0, %v1864
  %1866 = vdwg.mxu0
  %1867 = vmatprep.subr.mxu0 %v474
  %1868 = vmatpush1.msra.mxu0 %v473
  %1869 = vmatprep.subr.mxu0 %v478
  %1870 = vmatpush1.msra.mxu0 %v477
  %1871 = vmatprep.subr.mxu0 %v482
  %1872 = vmatpush1.msra.mxu0 %v481
  %1873 = vmatprep.subr.mxu0 %v486
  %1874 = vmatpush1.msra.mxu0 %v485
  %1875 = vmatprep.subr.mxu0 %v490
  %1876 = vmatpush1.msra.mxu0 %v489
  %1877 = vmatprep.subr.mxu0 %v494
  %1878 = vmatpush1.msra.mxu0 %v493
  %1879 = vmatprep.subr.mxu0 %v498
  %1880 = vmatpush1.msra.mxu0 %v497
  %1881 = vmatprep.subr.mxu0 %v502
  %1882 = vmatpush1.msra.mxu0 %v501
  %1883 = vmatprep.subr.mxu0 %v506
  %1884 = vmatpush1.msra.mxu0 %v505
  %1885 = vmatprep.subr.mxu0 %v510
  %1886 = vmatpush1.msra.mxu0 %v509
  %1887 = vmatprep.subr.mxu0 %v514
  %1888 = vmatpush1.msra.mxu0 %v513
  %1889 = vmatprep.subr.mxu0 %v518
  %1890 = vmatpush1.msra.mxu0 %v517
  %1891 = vmatprep.subr.mxu0 %v522
  %1892 = vmatpush1.msra.mxu0 %v521
  %1893 = vmatprep.subr.mxu0 %v526
  %1894 = vmatpush1.msra.mxu0 %v525
  %1895 = vmatprep.subr.mxu0 %v530
  %1896 = vmatpush1.msra.mxu0 %v529
  %1897 = vmatprep.subr.mxu0 %v534
  %1898 = vmatpush1.msra.mxu0 %v533
  %1899 = vmatprep.subr.mxu0 0.0
  %1900 = vmatpush1.msra.mxu0 0.0
  %1901 = vmatprep.subr.mxu0 0.0
  %1902 = vmatpush1.msra.mxu0 0.0
  %1903 = vmatprep.subr.mxu0 0.0
  %1904 = vmatpush1.msra.mxu0 0.0
  %1905 = vmatprep.subr.mxu0 0.0
  %1906 = vmatpush1.msra.mxu0 0.0
  %1907 = vmatprep.subr.mxu0 0.0
  %1908 = vmatpush1.msra.mxu0 0.0
  %1909 = vmatprep.subr.mxu0 0.0
  %1910 = vmatpush1.msra.mxu0 0.0
  %1911 = vmatprep.subr.mxu0 0.0
  %1912 = vmatpush1.msra.mxu0 0.0
  %1913 = vmatprep.subr.mxu0 0.0
  %1914 = vmatpush1.msra.mxu0 0.0
  %1915 = vmatprep.subr.mxu0 0.0
  %1916 = vmatpush1.msra.mxu0 0.0
  %1917 = vmatprep.subr.mxu0 0.0
  %1918 = vmatpush1.msra.mxu0 0.0
  %1919 = vmatprep.subr.mxu0 0.0
  %1920 = vmatpush1.msra.mxu0 0.0
  %1921 = vmatprep.subr.mxu0 0.0
  %1922 = vmatpush1.msra.mxu0 0.0
  %1923 = vmatprep.subr.mxu0 0.0
  %1924 = vmatpush1.msra.mxu0 0.0
  %1925 = vmatprep.subr.mxu0 0.0
  %1926 = vmatpush1.msra.mxu0 0.0
  %1927 = vmatprep.subr.mxu0 0.0
  %1928 = vmatpush1.msra.mxu0 0.0
  %1929 = vmatprep.subr.mxu0 0.0
  %1930 = vmatpush1.msra.mxu0 0.0
  %1931 = vmatprep.mubr.f32.mxu0 0.0
  %1932 = vmatmul.mubr.f32.gmra.mrb[0].mxu0 %v1786
  %v1933 = vpop.f32.mrb[0].mxu0
  %v1934 = vadd.f32 0.0, %v1933
  %v1935 = vpop.f32.mrb[0].mxu0
  %v1936 = vadd.f32 0.0, %v1935
  %1937 = vdwg.mxu0
  %v1938 = vadd.f32 %v1792, %v1863
  %v1939 = vadd.f32 %v1793, %v1865
  %v1940 = vadd.f32 %v1794, %v1934
  %v1941 = vadd.f32 %v1795, %v1936
  %v1942 = vxor.u32 %v1938, 2147483648
  %v1943 = vmul.f32 %v1942, 1.442695
  %v1944 = vpow.pop %v1943
  %v1945 = vadd.f32 %v1944, 1.0
  %v1946 = vrcp.pop %v1945
  %v1947 = vmul.f32 1.0, %v1946
  %v1948 = vxor.u32 %v1939, 2147483648
  %v1949 = vmul.f32 %v1948, 1.442695
  %v1950 = vpow.pop %v1949
  %v1951 = vadd.f32 %v1950, 1.0
  %v1952 = vrcp.pop %v1951
  %v1953 = vmul.f32 1.0, %v1952
  %v1954 = vtanh.pop %v1940
  %v1955 = vxor.u32 %v1941, 2147483648
  %v1956 = vmul.f32 %v1955, 1.442695
  %v1957 = vpow.pop %v1956
  %v1958 = vadd.f32 %v1957, 1.0
  %v1959 = vrcp.pop %v1958
  %v1960 = vmul.f32 1.0, %v1959
  %v1961 = vmul.f32 %v1953, %v1784
  %v1962 = vmul.f32 %v1947, %v1954
  %v1963 = vadd.f32 %v1961, %v1962
  %v1964 = vtanh.pop %v1963
  %v1965 = vmul.f32 %v1960, %v1964
  %s1966 = scalar_lea.vmem [#allocation3], 56
  %1967 = vst [vmem:[%s1966] sm:$0xff] %v1965
  %v1968 = vld [vmem:[#allocation3] sm:$0xff]
  %v1969 = vld [vmem:[#allocation3 + $0x8] sm:$0xff]
  %v1970 = vld [vmem:[#allocation3 + $0x10] sm:$0xff]
  %v1971 = vld [vmem:[#allocation3 + $0x18] sm:$0xff]
  %v1972 = vld [vmem:[#allocation3 + $0x20] sm:$0xff]
  %v1973 = vld [vmem:[#allocation3 + $0x28] sm:$0xff]
  %v1974 = vld [vmem:[#allocation3 + $0x30] sm:$0xff]
  %v1975 = vld [vmem:[#allocation3 + $0x38] sm:$0xff]
  %v1976 = vld [vmem:[%s4] sm:$0xff]
  %v1977 = vld [vmem:[%s4 + $0x8] sm:$0xff]
  %v1978 = vld [vmem:[%s4 + $0x10] sm:$0xff]
  %v1979 = vld [vmem:[%s4 + $0x18] sm:$0xff]
  %v1980 = vld [vmem:[%s4 + $0x20] sm:$0xff]
  %v1981 = vld [vmem:[%s4 + $0x28] sm:$0xff]
  %v1982 = vld [vmem:[%s4 + $0x30] sm:$0xff]
  %v1983 = vld [vmem:[%s4 + $0x38] sm:$0xff]
  %v1984 = vld [vmem:[%s4 + $0x40] sm:$0xff]
  %v1985 = vld [vmem:[%s4 + $0x48] sm:$0xff]
  %v1986 = vld [vmem:[%s4 + $0x50] sm:$0xff]
  %v1987 = vld [vmem:[%s4 + $0x58] sm:$0xff]
  %v1988 = vld [vmem:[%s4 + $0x60] sm:$0xff]
  %v1989 = vld [vmem:[%s4 + $0x68] sm:$0xff]
  %v1990 = vld [vmem:[%s4 + $0x70] sm:$0xff]
  %v1991 = vld [vmem:[%s4 + $0x78] sm:$0xff]
  %v1992 = vld [vmem:[%s4 + $0x80] sm:$0xff]
  %v1993 = vld [vmem:[%s4 + $0x88] sm:$0xff]
  %v1994 = vld [vmem:[%s4 + $0x90] sm:$0xff]
  %v1995 = vld [vmem:[%s4 + $0x98] sm:$0xff]
  %v1996 = vld [vmem:[%s4 + $0xa0] sm:$0xff]
  %v1997 = vld [vmem:[%s4 + $0xa8] sm:$0xff]
  %v1998 = vld [vmem:[%s4 + $0xb0] sm:$0xff]
  %v1999 = vld [vmem:[%s4 + $0xb8] sm:$0xff]
  %v2000 = vld [vmem:[%s4 + $0xc0] sm:$0xff]
  %v2001 = vld [vmem:[%s4 + $0xc8] sm:$0xff]
  %v2002 = vld [vmem:[%s4 + $0xd0] sm:$0xff]
  %v2003 = vld [vmem:[%s4 + $0xd8] sm:$0xff]
  %v2004 = vld [vmem:[%s4 + $0xe0] sm:$0xff]
  %v2005 = vld [vmem:[%s4 + $0xe8] sm:$0xff]
  %v2006 = vld [vmem:[%s4 + $0xf0] sm:$0xff]
  %v2007 = vld [vmem:[%s4 + $0xf8] sm:$0xff]
  %v2008 = vld [vmem:[%s4 + $0x100] sm:$0xff]
  %v2009 = vld [vmem:[%s4 + $0x108] sm:$0xff]
  %v2010 = vld [vmem:[%s4 + $0x110] sm:$0xff]
  %v2011 = vld [vmem:[%s4 + $0x118] sm:$0xff]
  %v2012 = vld [vmem:[%s4 + $0x120] sm:$0xff]
  %v2013 = vld [vmem:[%s4 + $0x128] sm:$0xff]
  %v2014 = vld [vmem:[%s4 + $0x130] sm:$0xff]
  %v2015 = vld [vmem:[%s4 + $0x138] sm:$0xff]
  %v2016 = vld [vmem:[%s4 + $0x140] sm:$0xff]
  %v2017 = vld [vmem:[%s4 + $0x148] sm:$0xff]
  %v2018 = vld [vmem:[%s4 + $0x150] sm:$0xff]
  %v2019 = vld [vmem:[%s4 + $0x158] sm:$0xff]
  %v2020 = vld [vmem:[%s4 + $0x160] sm:$0xff]
  %v2021 = vld [vmem:[%s4 + $0x168] sm:$0xff]
  %v2022 = vld [vmem:[%s4 + $0x170] sm:$0xff]
  %v2023 = vld [vmem:[%s4 + $0x178] sm:$0xff]
  %v2024 = vld [vmem:[%s4 + $0x180] sm:$0xff]
  %v2025 = vld [vmem:[%s4 + $0x188] sm:$0xff]
  %v2026 = vld [vmem:[%s4 + $0x190] sm:$0xff]
  %v2027 = vld [vmem:[%s4 + $0x198] sm:$0xff]
  %v2028 = vld [vmem:[%s4 + $0x1a0] sm:$0xff]
  %v2029 = vld [vmem:[%s4 + $0x1a8] sm:$0xff]
  %v2030 = vld [vmem:[%s4 + $0x1b0] sm:$0xff]
  %v2031 = vld [vmem:[%s4 + $0x1b8] sm:$0xff]
  %v2032 = vld [vmem:[%s4 + $0x1c0] sm:$0xff]
  %v2033 = vld [vmem:[%s4 + $0x1c8] sm:$0xff]
  %v2034 = vld [vmem:[%s4 + $0x1d0] sm:$0xff]
  %v2035 = vld [vmem:[%s4 + $0x1d8] sm:$0xff]
  %v2036 = vld [vmem:[%s4 + $0x1e0] sm:$0xff]
  %v2037 = vld [vmem:[%s4 + $0x1e8] sm:$0xff]
  %v2038 = vld [vmem:[%s4 + $0x1f0] sm:$0xff]
  %v2039 = vld [vmem:[%s4 + $0x1f8] sm:$0xff]
  %v2040 = vld [vmem:[%s6] sm:$0xf]
  %v2042 = vlaneseq
  %v2043 = vshrl.u32 %v2042, 7
  %v2044 = vsub.s32 0, %v2043
  %v2045 = vrot.slane %v2040, %v2044
  %v2046 = vlaneseq
  %v2047 = vshrl.u32 %v2046, 7
  %v2048 = vsub.s32 1, %v2047
  %v2049 = vrot.slane %v2040, %v2048
  %v2050 = vlaneseq
  %v2051 = vshrl.u32 %v2050, 7
  %v2052 = vsub.s32 2, %v2051
  %v2053 = vrot.slane %v2040, %v2052
  %v2054 = vlaneseq
  %v2055 = vshrl.u32 %v2054, 7
  %v2056 = vsub.s32 3, %v2055
  %v2057 = vrot.slane %v2040, %v2056
  %2062 = vmatprep.subr.mxu0 %v1977
  %2063 = vmatpush1.msra.mxu0 %v1976
  %2064 = vmatprep.subr.mxu0 %v1981
  %2065 = vmatpush1.msra.mxu0 %v1980
  %2066 = vmatprep.subr.mxu0 %v1985
  %2067 = vmatpush1.msra.mxu0 %v1984
  %2068 = vmatprep.subr.mxu0 %v1989
  %2069 = vmatpush1.msra.mxu0 %v1988
  %2070 = vmatprep.subr.mxu0 %v1993
  %2071 = vmatpush1.msra.mxu0 %v1992
  %2072 = vmatprep.subr.mxu0 %v1997
  %2073 = vmatpush1.msra.mxu0 %v1996
  %2074 = vmatprep.subr.mxu0 %v2001
  %2075 = vmatpush1.msra.mxu0 %v2000
  %2076 = vmatprep.subr.mxu0 %v2005
  %2077 = vmatpush1.msra.mxu0 %v2004
  %2078 = vmatprep.subr.mxu0 %v2009
  %2079 = vmatpush1.msra.mxu0 %v2008
  %2080 = vmatprep.subr.mxu0 %v2013
  %2081 = vmatpush1.msra.mxu0 %v2012
  %2082 = vmatprep.subr.mxu0 %v2017
  %2083 = vmatpush1.msra.mxu0 %v2016
  %2084 = vmatprep.subr.mxu0 %v2021
  %2085 = vmatpush1.msra.mxu0 %v2020
  %2086 = vmatprep.subr.mxu0 %v2025
  %2087 = vmatpush1.msra.mxu0 %v2024
  %2088 = vmatprep.subr.mxu0 %v2029
  %2089 = vmatpush1.msra.mxu0 %v2028
  %2090 = vmatprep.subr.mxu0 %v2033
  %2091 = vmatpush1.msra.mxu0 %v2032
  %2092 = vmatprep.subr.mxu0 %v2037
  %2093 = vmatpush1.msra.mxu0 %v2036
  %2094 = vmatprep.subr.mxu0 0.0
  %2095 = vmatpush1.msra.mxu0 0.0
  %2096 = vmatprep.subr.mxu0 0.0
  %2097 = vmatpush1.msra.mxu0 0.0
  %2098 = vmatprep.subr.mxu0 0.0
  %2099 = vmatpush1.msra.mxu0 0.0
  %2100 = vmatprep.subr.mxu0 0.0
  %2101 = vmatpush1.msra.mxu0 0.0
  %2102 = vmatprep.subr.mxu0 0.0
  %2103 = vmatpush1.msra.mxu0 0.0
  %2104 = vmatprep.subr.mxu0 0.0
  %2105 = vmatpush1.msra.mxu0 0.0
  %2106 = vmatprep.subr.mxu0 0.0
  %2107 = vmatpush1.msra.mxu0 0.0
  %2108 = vmatprep.subr.mxu0 0.0
  %2109 = vmatpush1.msra.mxu0 0.0
  %2110 = vmatprep.subr.mxu0 0.0
  %2111 = vmatpush1.msra.mxu0 0.0
  %2112 = vmatprep.subr.mxu0 0.0
  %2113 = vmatpush1.msra.mxu0 0.0
  %2114 = vmatprep.subr.mxu0 0.0
  %2115 = vmatpush1.msra.mxu0 0.0
  %2116 = vmatprep.subr.mxu0 0.0
  %2117 = vmatpush1.msra.mxu0 0.0
  %2118 = vmatprep.subr.mxu0 0.0
  %2119 = vmatpush1.msra.mxu0 0.0
  %2120 = vmatprep.subr.mxu0 0.0
  %2121 = vmatpush1.msra.mxu0 0.0
  %2122 = vmatprep.subr.mxu0 0.0
  %2123 = vmatpush1.msra.mxu0 0.0
  %2124 = vmatprep.subr.mxu0 0.0
  %2125 = vmatpush1.msra.mxu0 0.0
  %2126 = vmatprep.mubr.f32.mxu0 0.0
  %2127 = vmatmul.mubr.f32.gmra.mrb[0].mxu0 %v1968
  %v2128 = vpop.f32.mrb[0].mxu0
  %v2129 = vadd.f32 %v2045, %v2128
  %v2130 = vpop.f32.mrb[0].mxu0
  %v2131 = vadd.f32 %v2049, %v2130
  %2132 = vmatprep.mubr.f32.mxu0 0.0
  %2133 = vmatmul.mubr.f32.gmra.mrb[0].mxu0 %v1969
  %v2134 = vpop.f32.mrb[0].mxu0
  %v2135 = vadd.f32 %v2045, %v2134
  %v2136 = vpop.f32.mrb[0].mxu0
  %v2137 = vadd.f32 %v2049, %v2136
  %2138 = vmatprep.mubr.f32.mxu0 0.0
  %2139 = vmatmul.mubr.f32.gmra.mrb[0].mxu0 %v1970
  %v2140 = vpop.f32.mrb[0].mxu0
  %v2141 = vadd.f32 %v2045, %v2140
  %v2142 = vpop.f32.mrb[0].mxu0
  %v2143 = vadd.f32 %v2049, %v2142
  %2144 = vmatprep.mubr.f32.mxu0 0.0
  %2145 = vmatmul.mubr.f32.gmra.mrb[0].mxu0 %v1971
  %v2146 = vpop.f32.mrb[0].mxu0
  %v2147 = vadd.f32 %v2045, %v2146
  %v2148 = vpop.f32.mrb[0].mxu0
  %v2149 = vadd.f32 %v2049, %v2148
  %2150 = vmatprep.mubr.f32.mxu0 0.0
  %2151 = vmatmul.mubr.f32.gmra.mrb[0].mxu0 %v1972
  %v2152 = vpop.f32.mrb[0].mxu0
  %v2153 = vadd.f32 %v2045, %v2152
  %v2154 = vpop.f32.mrb[0].mxu0
  %v2155 = vadd.f32 %v2049, %v2154
  %2156 = vmatprep.mubr.f32.mxu0 0.0
  %2157 = vmatmul.mubr.f32.gmra.mrb[0].mxu0 %v1973
  %v2158 = vpop.f32.mrb[0].mxu0
  %v2159 = vadd.f32 %v2045, %v2158
  %v2160 = vpop.f32.mrb[0].mxu0
  %v2161 = vadd.f32 %v2049, %v2160
  %2162 = vmatprep.mubr.f32.mxu0 0.0
  %2163 = vmatmul.mubr.f32.gmra.mrb[0].mxu0 %v1974
  %v2164 = vpop.f32.mrb[0].mxu0
  %v2165 = vadd.f32 %v2045, %v2164
  %v2166 = vpop.f32.mrb[0].mxu0
  %v2167 = vadd.f32 %v2049, %v2166
  %2168 = vmatprep.mubr.f32.mxu0 0.0
  %2169 = vmatmul.mubr.f32.gmra.mrb[0].mxu0 %v1975
  %v2170 = vpop.f32.mrb[0].mxu0
  %v2171 = vadd.f32 %v2045, %v2170
  %v2172 = vpop.f32.mrb[0].mxu0
  %v2173 = vadd.f32 %v2049, %v2172
  %2174 = vdwg.mxu0
  %2175 = vmatprep.subr.mxu0 %v1979
  %2176 = vmatpush1.msra.mxu0 %v1978
  %2177 = vmatprep.subr.mxu0 %v1983
  %2178 = vmatpush1.msra.mxu0 %v1982
  %2179 = vmatprep.subr.mxu0 %v1987
  %2180 = vmatpush1.msra.mxu0 %v1986
  %2181 = vmatprep.subr.mxu0 %v1991
  %2182 = vmatpush1.msra.mxu0 %v1990
  %2183 = vmatprep.subr.mxu0 %v1995
  %2184 = vmatpush1.msra.mxu0 %v1994
  %2185 = vmatprep.subr.mxu0 %v1999
  %2186 = vmatpush1.msra.mxu0 %v1998
  %2187 = vmatprep.subr.mxu0 %v2003
  %2188 = vmatpush1.msra.mxu0 %v2002
  %2189 = vmatprep.subr.mxu0 %v2007
  %2190 = vmatpush1.msra.mxu0 %v2006
  %2191 = vmatprep.subr.mxu0 %v2011
  %2192 = vmatpush1.msra.mxu0 %v2010
  %2193 = vmatprep.subr.mxu0 %v2015
  %2194 = vmatpush1.msra.mxu0 %v2014
  %2195 = vmatprep.subr.mxu0 %v2019
  %2196 = vmatpush1.msra.mxu0 %v2018
  %2197 = vmatprep.subr.mxu0 %v2023
  %2198 = vmatpush1.msra.mxu0 %v2022
  %2199 = vmatprep.subr.mxu0 %v2027
  %2200 = vmatpush1.msra.mxu0 %v2026
  %2201 = vmatprep.subr.mxu0 %v2031
  %2202 = vmatpush1.msra.mxu0 %v2030
  %2203 = vmatprep.subr.mxu0 %v2035
  %2204 = vmatpush1.msra.mxu0 %v2034
  %2205 = vmatprep.subr.mxu0 %v2039
  %2206 = vmatpush1.msra.mxu0 %v2038
  %2207 = vmatprep.subr.mxu0 0.0
  %2208 = vmatpush1.msra.mxu0 0.0
  %2209 = vmatprep.subr.mxu0 0.0
  %2210 = vmatpush1.msra.mxu0 0.0
  %2211 = vmatprep.subr.mxu0 0.0
  %2212 = vmatpush1.msra.mxu0 0.0
  %2213 = vmatprep.subr.mxu0 0.0
  %2214 = vmatpush1.msra.mxu0 0.0
  %2215 = vmatprep.subr.mxu0 0.0
  %2216 = vmatpush1.msra.mxu0 0.0
  %2217 = vmatprep.subr.mxu0 0.0
  %2218 = vmatpush1.msra.mxu0 0.0
  %2219 = vmatprep.subr.mxu0 0.0
  %2220 = vmatpush1.msra.mxu0 0.0
  %2221 = vmatprep.subr.mxu0 0.0
  %2222 = vmatpush1.msra.mxu0 0.0
  %2223 = vmatprep.subr.mxu0 0.0
  %2224 = vmatpush1.msra.mxu0 0.0
  %2225 = vmatprep.subr.mxu0 0.0
  %2226 = vmatpush1.msra.mxu0 0.0
  %2227 = vmatprep.subr.mxu0 0.0
  %2228 = vmatpush1.msra.mxu0 0.0
  %2229 = vmatprep.subr.mxu0 0.0
  %2230 = vmatpush1.msra.mxu0 0.0
  %2231 = vmatprep.subr.mxu0 0.0
  %2232 = vmatpush1.msra.mxu0 0.0
  %2233 = vmatprep.subr.mxu0 0.0
  %2234 = vmatpush1.msra.mxu0 0.0
  %2235 = vmatprep.subr.mxu0 0.0
  %2236 = vmatpush1.msra.mxu0 0.0
  %2237 = vmatprep.subr.mxu0 0.0
  %2238 = vmatpush1.msra.mxu0 0.0
  %2239 = vmatprep.mubr.f32.mxu0 0.0
  %2240 = vmatmul.mubr.f32.gmra.mrb[0].mxu0 %v1968
  %v2241 = vpop.f32.mrb[0].mxu0
  %v2242 = vadd.f32 %v2053, %v2241
  %v2243 = vpop.f32.mrb[0].mxu0
  %v2244 = vadd.f32 %v2057, %v2243
  %2245 = vmatprep.mubr.f32.mxu0 0.0
  %2246 = vmatmul.mubr.f32.gmra.mrb[0].mxu0 %v1969
  %v2247 = vpop.f32.mrb[0].mxu0
  %v2248 = vadd.f32 %v2053, %v2247
  %v2249 = vpop.f32.mrb[0].mxu0
  %v2250 = vadd.f32 %v2057, %v2249
  %2251 = vmatprep.mubr.f32.mxu0 0.0
  %2252 = vmatmul.mubr.f32.gmra.mrb[0].mxu0 %v1970
  %v2253 = vpop.f32.mrb[0].mxu0
  %v2254 = vadd.f32 %v2053, %v2253
  %v2255 = vpop.f32.mrb[0].mxu0
  %v2256 = vadd.f32 %v2057, %v2255
  %2257 = vmatprep.mubr.f32.mxu0 0.0
  %2258 = vmatmul.mubr.f32.gmra.mrb[0].mxu0 %v1971
  %v2259 = vpop.f32.mrb[0].mxu0
  %v2260 = vadd.f32 %v2053, %v2259
  %v2261 = vpop.f32.mrb[0].mxu0
  %v2262 = vadd.f32 %v2057, %v2261
  %2263 = vmatprep.mubr.f32.mxu0 0.0
  %2264 = vmatmul.mubr.f32.gmra.mrb[0].mxu0 %v1972
  %v2265 = vpop.f32.mrb[0].mxu0
  %v2266 = vadd.f32 %v2053, %v2265
  %v2267 = vpop.f32.mrb[0].mxu0
  %v2268 = vadd.f32 %v2057, %v2267
  %2269 = vmatprep.mubr.f32.mxu0 0.0
  %2270 = vmatmul.mubr.f32.gmra.mrb[0].mxu0 %v1973
  %v2271 = vpop.f32.mrb[0].mxu0
  %v2272 = vadd.f32 %v2053, %v2271
  %v2273 = vpop.f32.mrb[0].mxu0
  %v2274 = vadd.f32 %v2057, %v2273
  %2275 = vmatprep.mubr.f32.mxu0 0.0
  %2276 = vmatmul.mubr.f32.gmra.mrb[0].mxu0 %v1974
  %v2277 = vpop.f32.mrb[0].mxu0
  %v2278 = vadd.f32 %v2053, %v2277
  %v2279 = vpop.f32.mrb[0].mxu0
  %v2280 = vadd.f32 %v2057, %v2279
  %2281 = vmatprep.mubr.f32.mxu0 0.0
  %2282 = vmatmul.mubr.f32.gmra.mrb[0].mxu0 %v1975
  %v2283 = vpop.f32.mrb[0].mxu0
  %v2284 = vadd.f32 %v2053, %v2283
  %v2285 = vpop.f32.mrb[0].mxu0
  %v2286 = vadd.f32 %v2057, %v2285
  %2287 = vdwg.mxu0
  %2288 = vst [vmem:[#allocation2] sm:$0xff] %v2129
  %2289 = vst [vmem:[#allocation2 + $0x8] sm:$0xff] %v2131
  %2290 = vst [vmem:[#allocation2 + $0x10] sm:$0xff] %v2242
  %2291 = vst [vmem:[#allocation2 + $0x18] sm:$0xff] %v2244
  %2292 = vst [vmem:[#allocation2 + $0x20] sm:$0xff] %v2135
  %2293 = vst [vmem:[#allocation2 + $0x28] sm:$0xff] %v2137
  %2294 = vst [vmem:[#allocation2 + $0x30] sm:$0xff] %v2248
  %2295 = vst [vmem:[#allocation2 + $0x38] sm:$0xff] %v2250
  %2296 = vst [vmem:[#allocation2 + $0x40] sm:$0xff] %v2141
  %2297 = vst [vmem:[#allocation2 + $0x48] sm:$0xff] %v2143
  %2298 = vst [vmem:[#allocation2 + $0x50] sm:$0xff] %v2254
  %2299 = vst [vmem:[#allocation2 + $0x58] sm:$0xff] %v2256
  %2300 = vst [vmem:[#allocation2 + $0x60] sm:$0xff] %v2147
  %2301 = vst [vmem:[#allocation2 + $0x68] sm:$0xff] %v2149
  %2302 = vst [vmem:[#allocation2 + $0x70] sm:$0xff] %v2260
  %2303 = vst [vmem:[#allocation2 + $0x78] sm:$0xff] %v2262
  %2304 = vst [vmem:[#allocation2 + $0x80] sm:$0xff] %v2153
  %2305 = vst [vmem:[#allocation2 + $0x88] sm:$0xff] %v2155
  %2306 = vst [vmem:[#allocation2 + $0x90] sm:$0xff] %v2266
  %2307 = vst [vmem:[#allocation2 + $0x98] sm:$0xff] %v2268
  %2308 = vst [vmem:[#allocation2 + $0xa0] sm:$0xff] %v2159
  %2309 = vst [vmem:[#allocation2 + $0xa8] sm:$0xff] %v2161
  %2310 = vst [vmem:[#allocation2 + $0xb0] sm:$0xff] %v2272
  %2311 = vst [vmem:[#allocation2 + $0xb8] sm:$0xff] %v2274
  %2312 = vst [vmem:[#allocation2 + $0xc0] sm:$0xff] %v2165
  %2313 = vst [vmem:[#allocation2 + $0xc8] sm:$0xff] %v2167
  %2314 = vst [vmem:[#allocation2 + $0xd0] sm:$0xff] %v2278
  %2315 = vst [vmem:[#allocation2 + $0xd8] sm:$0xff] %v2280
  %2316 = vst [vmem:[#allocation2 + $0xe0] sm:$0xff] %v2171
  %2317 = vst [vmem:[#allocation2 + $0xe8] sm:$0xff] %v2173
  %2318 = vst [vmem:[#allocation2 + $0xf0] sm:$0xff] %v2284
  %2319 = vst [vmem:[#allocation2 + $0xf8] sm:$0xff] %v2286
  %v2320 = vld [vmem:[%s5] sm:$0xff]
  %v2321 = vld [vmem:[%s5 + $0x8] sm:$0xff]
  %v2322 = vld [vmem:[%s5 + $0x10] sm:$0xff]
  %v2323 = vld [vmem:[%s5 + $0x18] sm:$0xff]
  %v2324 = vld [vmem:[%s5 + $0x20] sm:$0xff]
  %v2325 = vld [vmem:[%s5 + $0x28] sm:$0xff]
  %v2326 = vld [vmem:[%s5 + $0x30] sm:$0xff]
  %v2327 = vld [vmem:[%s5 + $0x38] sm:$0xff]
  %v2328 = vld [vmem:[%s5 + $0x40] sm:$0xff]
  %v2329 = vld [vmem:[%s5 + $0x48] sm:$0xff]
  %v2330 = vld [vmem:[%s5 + $0x50] sm:$0xff]
  %v2331 = vld [vmem:[%s5 + $0x58] sm:$0xff]
  %v2332 = vld [vmem:[%s5 + $0x60] sm:$0xff]
  %v2333 = vld [vmem:[%s5 + $0x68] sm:$0xff]
  %v2334 = vld [vmem:[%s5 + $0x70] sm:$0xff]
  %v2335 = vld [vmem:[%s5 + $0x78] sm:$0xff]
  %v2336 = vld [vmem:[%s5 + $0x80] sm:$0xff]
  %v2337 = vld [vmem:[%s5 + $0x88] sm:$0xff]
  %v2338 = vld [vmem:[%s5 + $0x90] sm:$0xff]
  %v2339 = vld [vmem:[%s5 + $0x98] sm:$0xff]
  %v2340 = vld [vmem:[%s5 + $0xa0] sm:$0xff]
  %v2341 = vld [vmem:[%s5 + $0xa8] sm:$0xff]
  %v2342 = vld [vmem:[%s5 + $0xb0] sm:$0xff]
  %v2343 = vld [vmem:[%s5 + $0xb8] sm:$0xff]
  %v2344 = vld [vmem:[%s5 + $0xc0] sm:$0xff]
  %v2345 = vld [vmem:[%s5 + $0xc8] sm:$0xff]
  %v2346 = vld [vmem:[%s5 + $0xd0] sm:$0xff]
  %v2347 = vld [vmem:[%s5 + $0xd8] sm:$0xff]
  %v2348 = vld [vmem:[%s5 + $0xe0] sm:$0xff]
  %v2349 = vld [vmem:[%s5 + $0xe8] sm:$0xff]
  %v2350 = vld [vmem:[%s5 + $0xf0] sm:$0xff]
  %v2351 = vld [vmem:[%s5 + $0xf8] sm:$0xff]
  %v2352 = vld [vmem:[%s5 + $0x100] sm:$0xff]
  %v2353 = vld [vmem:[%s5 + $0x108] sm:$0xff]
  %v2354 = vld [vmem:[%s5 + $0x110] sm:$0xff]
  %v2355 = vld [vmem:[%s5 + $0x118] sm:$0xff]
  %v2356 = vld [vmem:[%s5 + $0x120] sm:$0xff]
  %v2357 = vld [vmem:[%s5 + $0x128] sm:$0xff]
  %v2358 = vld [vmem:[%s5 + $0x130] sm:$0xff]
  %v2359 = vld [vmem:[%s5 + $0x138] sm:$0xff]
  %v2360 = vld [vmem:[%s5 + $0x140] sm:$0xff]
  %v2361 = vld [vmem:[%s5 + $0x148] sm:$0xff]
  %v2362 = vld [vmem:[%s5 + $0x150] sm:$0xff]
  %v2363 = vld [vmem:[%s5 + $0x158] sm:$0xff]
  %v2364 = vld [vmem:[%s5 + $0x160] sm:$0xff]
  %v2365 = vld [vmem:[%s5 + $0x168] sm:$0xff]
  %v2366 = vld [vmem:[%s5 + $0x170] sm:$0xff]
  %v2367 = vld [vmem:[%s5 + $0x178] sm:$0xff]
  %v2368 = vld [vmem:[%s5 + $0x180] sm:$0xff]
  %v2369 = vld [vmem:[%s5 + $0x188] sm:$0xff]
  %v2370 = vld [vmem:[%s5 + $0x190] sm:$0xff]
  %v2371 = vld [vmem:[%s5 + $0x198] sm:$0xff]
  %v2372 = vld [vmem:[%s5 + $0x1a0] sm:$0xff]
  %v2373 = vld [vmem:[%s5 + $0x1a8] sm:$0xff]
  %v2374 = vld [vmem:[%s5 + $0x1b0] sm:$0xff]
  %v2375 = vld [vmem:[%s5 + $0x1b8] sm:$0xff]
  %v2376 = vld [vmem:[%s5 + $0x1c0] sm:$0xff]
  %v2377 = vld [vmem:[%s5 + $0x1c8] sm:$0xff]
  %v2378 = vld [vmem:[%s5 + $0x1d0] sm:$0xff]
  %v2379 = vld [vmem:[%s5 + $0x1d8] sm:$0xff]
  %v2380 = vld [vmem:[%s5 + $0x1e0] sm:$0xff]
  %v2381 = vld [vmem:[%s5 + $0x1e8] sm:$0xff]
  %v2382 = vld [vmem:[%s5 + $0x1f0] sm:$0xff]
  %v2383 = vld [vmem:[%s5 + $0x1f8] sm:$0xff]
  %s2384 = scalar_lea.vmem %s7, 8
  %v2385 = vld [vmem:[%s2384] sm:$0xff]
  %s2386 = scalar_lea.vmem %s8, 8
  %v2387 = vld [vmem:[%s2386] sm:$0xff]
  %v2388 = vld [vmem:[%s539] sm:$0xff]
  %v2389 = vld [vmem:[%s539 + $0x8] sm:$0xff]
  %v2390 = vld [vmem:[%s539 + $0x10] sm:$0xff]
  %v2391 = vld [vmem:[%s539 + $0x18] sm:$0xff]
  %2392 = vmatprep.subr.mxu0 %v2321
  %2393 = vmatpush1.msra.mxu0 %v2320
  %2394 = vmatprep.subr.mxu0 %v2325
  %2395 = vmatpush1.msra.mxu0 %v2324
  %2396 = vmatprep.subr.mxu0 %v2329
  %2397 = vmatpush1.msra.mxu0 %v2328
  %2398 = vmatprep.subr.mxu0 %v2333
  %2399 = vmatpush1.msra.mxu0 %v2332
  %2400 = vmatprep.subr.mxu0 %v2337
  %2401 = vmatpush1.msra.mxu0 %v2336
  %2402 = vmatprep.subr.mxu0 %v2341
  %2403 = vmatpush1.msra.mxu0 %v2340
  %2404 = vmatprep.subr.mxu0 %v2345
  %2405 = vmatpush1.msra.mxu0 %v2344
  %2406 = vmatprep.subr.mxu0 %v2349
  %2407 = vmatpush1.msra.mxu0 %v2348
  %2408 = vmatprep.subr.mxu0 %v2353
  %2409 = vmatpush1.msra.mxu0 %v2352
  %2410 = vmatprep.subr.mxu0 %v2357
  %2411 = vmatpush1.msra.mxu0 %v2356
  %2412 = vmatprep.subr.mxu0 %v2361
  %2413 = vmatpush1.msra.mxu0 %v2360
  %2414 = vmatprep.subr.mxu0 %v2365
  %2415 = vmatpush1.msra.mxu0 %v2364
  %2416 = vmatprep.subr.mxu0 %v2369
  %2417 = vmatpush1.msra.mxu0 %v2368
  %2418 = vmatprep.subr.mxu0 %v2373
  %2419 = vmatpush1.msra.mxu0 %v2372
  %2420 = vmatprep.subr.mxu0 %v2377
  %2421 = vmatpush1.msra.mxu0 %v2376
  %2422 = vmatprep.subr.mxu0 %v2381
  %2423 = vmatpush1.msra.mxu0 %v2380
  %2424 = vmatprep.subr.mxu0 0.0
  %2425 = vmatpush1.msra.mxu0 0.0
  %2426 = vmatprep.subr.mxu0 0.0
  %2427 = vmatpush1.msra.mxu0 0.0
  %2428 = vmatprep.subr.mxu0 0.0
  %2429 = vmatpush1.msra.mxu0 0.0
  %2430 = vmatprep.subr.mxu0 0.0
  %2431 = vmatpush1.msra.mxu0 0.0
  %2432 = vmatprep.subr.mxu0 0.0
  %2433 = vmatpush1.msra.mxu0 0.0
  %2434 = vmatprep.subr.mxu0 0.0
  %2435 = vmatpush1.msra.mxu0 0.0
  %2436 = vmatprep.subr.mxu0 0.0
  %2437 = vmatpush1.msra.mxu0 0.0
  %2438 = vmatprep.subr.mxu0 0.0
  %2439 = vmatpush1.msra.mxu0 0.0
  %2440 = vmatprep.subr.mxu0 0.0
  %2441 = vmatpush1.msra.mxu0 0.0
  %2442 = vmatprep.subr.mxu0 0.0
  %2443 = vmatpush1.msra.mxu0 0.0
  %2444 = vmatprep.subr.mxu0 0.0
  %2445 = vmatpush1.msra.mxu0 0.0
  %2446 = vmatprep.subr.mxu0 0.0
  %2447 = vmatpush1.msra.mxu0 0.0
  %2448 = vmatprep.subr.mxu0 0.0
  %2449 = vmatpush1.msra.mxu0 0.0
  %2450 = vmatprep.subr.mxu0 0.0
  %2451 = vmatpush1.msra.mxu0 0.0
  %2452 = vmatprep.subr.mxu0 0.0
  %2453 = vmatpush1.msra.mxu0 0.0
  %2454 = vmatprep.subr.mxu0 0.0
  %2455 = vmatpush1.msra.mxu0 0.0
  %2456 = vmatprep.mubr.f32.mxu0 0.0
  %2457 = vmatmul.mubr.f32.gmra.mrb[0].mxu0 %v2385
  %v2458 = vpop.f32.mrb[0].mxu0
  %v2459 = vadd.f32 0.0, %v2458
  %v2460 = vpop.f32.mrb[0].mxu0
  %v2461 = vadd.f32 0.0, %v2460
  %2462 = vdwg.mxu0
  %2463 = vmatprep.subr.mxu0 %v2323
  %2464 = vmatpush1.msra.mxu0 %v2322
  %2465 = vmatprep.subr.mxu0 %v2327
  %2466 = vmatpush1.msra.mxu0 %v2326
  %2467 = vmatprep.subr.mxu0 %v2331
  %2468 = vmatpush1.msra.mxu0 %v2330
  %2469 = vmatprep.subr.mxu0 %v2335
  %2470 = vmatpush1.msra.mxu0 %v2334
  %2471 = vmatprep.subr.mxu0 %v2339
  %2472 = vmatpush1.msra.mxu0 %v2338
  %2473 = vmatprep.subr.mxu0 %v2343
  %2474 = vmatpush1.msra.mxu0 %v2342
  %2475 = vmatprep.subr.mxu0 %v2347
  %2476 = vmatpush1.msra.mxu0 %v2346
  %2477 = vmatprep.subr.mxu0 %v2351
  %2478 = vmatpush1.msra.mxu0 %v2350
  %2479 = vmatprep.subr.mxu0 %v2355
  %2480 = vmatpush1.msra.mxu0 %v2354
  %2481 = vmatprep.subr.mxu0 %v2359
  %2482 = vmatpush1.msra.mxu0 %v2358
  %2483 = vmatprep.subr.mxu0 %v2363
  %2484 = vmatpush1.msra.mxu0 %v2362
  %2485 = vmatprep.subr.mxu0 %v2367
  %2486 = vmatpush1.msra.mxu0 %v2366
  %2487 = vmatprep.subr.mxu0 %v2371
  %2488 = vmatpush1.msra.mxu0 %v2370
  %2489 = vmatprep.subr.mxu0 %v2375
  %2490 = vmatpush1.msra.mxu0 %v2374
  %2491 = vmatprep.subr.mxu0 %v2379
  %2492 = vmatpush1.msra.mxu0 %v2378
  %2493 = vmatprep.subr.mxu0 %v2383
  %2494 = vmatpush1.msra.mxu0 %v2382
  %2495 = vmatprep.subr.mxu0 0.0
  %2496 = vmatpush1.msra.mxu0 0.0
  %2497 = vmatprep.subr.mxu0 0.0
  %2498 = vmatpush1.msra.mxu0 0.0
  %2499 = vmatprep.subr.mxu0 0.0
  %2500 = vmatpush1.msra.mxu0 0.0
  %2501 = vmatprep.subr.mxu0 0.0
  %2502 = vmatpush1.msra.mxu0 0.0
  %2503 = vmatprep.subr.mxu0 0.0
  %2504 = vmatpush1.msra.mxu0 0.0
  %2505 = vmatprep.subr.mxu0 0.0
  %2506 = vmatpush1.msra.mxu0 0.0
  %2507 = vmatprep.subr.mxu0 0.0
  %2508 = vmatpush1.msra.mxu0 0.0
  %2509 = vmatprep.subr.mxu0 0.0
  %2510 = vmatpush1.msra.mxu0 0.0
  %2511 = vmatprep.subr.mxu0 0.0
  %2512 = vmatpush1.msra.mxu0 0.0
  %2513 = vmatprep.subr.mxu0 0.0
  %2514 = vmatpush1.msra.mxu0 0.0
  %2515 = vmatprep.subr.mxu0 0.0
  %2516 = vmatpush1.msra.mxu0 0.0
  %2517 = vmatprep.subr.mxu0 0.0
  %2518 = vmatpush1.msra.mxu0 0.0
  %2519 = vmatprep.subr.mxu0 0.0
  %2520 = vmatpush1.msra.mxu0 0.0
  %2521 = vmatprep.subr.mxu0 0.0
  %2522 = vmatpush1.msra.mxu0 0.0
  %2523 = vmatprep.subr.mxu0 0.0
  %2524 = vmatpush1.msra.mxu0 0.0
  %2525 = vmatprep.subr.mxu0 0.0
  %2526 = vmatpush1.msra.mxu0 0.0
  %2527 = vmatprep.mubr.f32.mxu0 0.0
  %2528 = vmatmul.mubr.f32.gmra.mrb[0].mxu0 %v2385
  %v2529 = vpop.f32.mrb[0].mxu0
  %v2530 = vadd.f32 0.0, %v2529
  %v2531 = vpop.f32.mrb[0].mxu0
  %v2532 = vadd.f32 0.0, %v2531
  %2533 = vdwg.mxu0
  %v2534 = vadd.f32 %v2388, %v2459
  %v2535 = vadd.f32 %v2389, %v2461
  %v2536 = vadd.f32 %v2390, %v2530
  %v2537 = vadd.f32 %v2391, %v2532
  %v2538 = vxor.u32 %v2534, 2147483648
  %v2539 = vmul.f32 %v2538, 1.442695
  %v2540 = vpow.pop %v2539
  %v2541 = vadd.f32 %v2540, 1.0
  %v2542 = vrcp.pop %v2541
  %v2543 = vmul.f32 1.0, %v2542
  %v2544 = vxor.u32 %v2535, 2147483648
  %v2545 = vmul.f32 %v2544, 1.442695
  %v2546 = vpow.pop %v2545
  %v2547 = vadd.f32 %v2546, 1.0
  %v2548 = vrcp.pop %v2547
  %v2549 = vmul.f32 1.0, %v2548
  %v2550 = vtanh.pop %v2536
  %v2551 = vxor.u32 %v2537, 2147483648
  %v2552 = vmul.f32 %v2551, 1.442695
  %v2553 = vpow.pop %v2552
  %v2554 = vadd.f32 %v2553, 1.0
  %v2555 = vrcp.pop %v2554
  %v2556 = vmul.f32 1.0, %v2555
  %v2557 = vmul.f32 %v2549, %v2387
  %v2558 = vmul.f32 %v2543, %v2550
  %v2559 = vadd.f32 %v2557, %v2558
  %v2560 = vtanh.pop %v2559
  %v2561 = vmul.f32 %v2556, %v2560
  %v2562 = vld [vmem:[%s717] sm:$0xff]
  %v2563 = vld [vmem:[%s717 + $0x8] sm:$0xff]
  %v2564 = vld [vmem:[%s717 + $0x10] sm:$0xff]
  %v2565 = vld [vmem:[%s717 + $0x18] sm:$0xff]
  %2566 = vmatprep.subr.mxu0 %v2321
  %2567 = vmatpush1.msra.mxu0 %v2320
  %2568 = vmatprep.subr.mxu0 %v2325
  %2569 = vmatpush1.msra.mxu0 %v2324
  %2570 = vmatprep.subr.mxu0 %v2329
  %2571 = vmatpush1.msra.mxu0 %v2328
  %2572 = vmatprep.subr.mxu0 %v2333
  %2573 = vmatpush1.msra.mxu0 %v2332
  %2574 = vmatprep.subr.mxu0 %v2337
  %2575 = vmatpush1.msra.mxu0 %v2336
  %2576 = vmatprep.subr.mxu0 %v2341
  %2577 = vmatpush1.msra.mxu0 %v2340
  %2578 = vmatprep.subr.mxu0 %v2345
  %2579 = vmatpush1.msra.mxu0 %v2344
  %2580 = vmatprep.subr.mxu0 %v2349
  %2581 = vmatpush1.msra.mxu0 %v2348
  %2582 = vmatprep.subr.mxu0 %v2353
  %2583 = vmatpush1.msra.mxu0 %v2352
  %2584 = vmatprep.subr.mxu0 %v2357
  %2585 = vmatpush1.msra.mxu0 %v2356
  %2586 = vmatprep.subr.mxu0 %v2361
  %2587 = vmatpush1.msra.mxu0 %v2360
  %2588 = vmatprep.subr.mxu0 %v2365
  %2589 = vmatpush1.msra.mxu0 %v2364
  %2590 = vmatprep.subr.mxu0 %v2369
  %2591 = vmatpush1.msra.mxu0 %v2368
  %2592 = vmatprep.subr.mxu0 %v2373
  %2593 = vmatpush1.msra.mxu0 %v2372
  %2594 = vmatprep.subr.mxu0 %v2377
  %2595 = vmatpush1.msra.mxu0 %v2376
  %2596 = vmatprep.subr.mxu0 %v2381
  %2597 = vmatpush1.msra.mxu0 %v2380
  %2598 = vmatprep.subr.mxu0 0.0
  %2599 = vmatpush1.msra.mxu0 0.0
  %2600 = vmatprep.subr.mxu0 0.0
  %2601 = vmatpush1.msra.mxu0 0.0
  %2602 = vmatprep.subr.mxu0 0.0
  %2603 = vmatpush1.msra.mxu0 0.0
  %2604 = vmatprep.subr.mxu0 0.0
  %2605 = vmatpush1.msra.mxu0 0.0
  %2606 = vmatprep.subr.mxu0 0.0
  %2607 = vmatpush1.msra.mxu0 0.0
  %2608 = vmatprep.subr.mxu0 0.0
  %2609 = vmatpush1.msra.mxu0 0.0
  %2610 = vmatprep.subr.mxu0 0.0
  %2611 = vmatpush1.msra.mxu0 0.0
  %2612 = vmatprep.subr.mxu0 0.0
  %2613 = vmatpush1.msra.mxu0 0.0
  %2614 = vmatprep.subr.mxu0 0.0
  %2615 = vmatpush1.msra.mxu0 0.0
  %2616 = vmatprep.subr.mxu0 0.0
  %2617 = vmatpush1.msra.mxu0 0.0
  %2618 = vmatprep.subr.mxu0 0.0
  %2619 = vmatpush1.msra.mxu0 0.0
  %2620 = vmatprep.subr.mxu0 0.0
  %2621 = vmatpush1.msra.mxu0 0.0
  %2622 = vmatprep.subr.mxu0 0.0
  %2623 = vmatpush1.msra.mxu0 0.0
  %2624 = vmatprep.subr.mxu0 0.0
  %2625 = vmatpush1.msra.mxu0 0.0
  %2626 = vmatprep.subr.mxu0 0.0
  %2627 = vmatpush1.msra.mxu0 0.0
  %2628 = vmatprep.subr.mxu0 0.0
  %2629 = vmatpush1.msra.mxu0 0.0
  %2630 = vmatprep.mubr.f32.mxu0 0.0
  %2631 = vmatmul.mubr.f32.gmra.mrb[0].mxu0 %v2561
  %v2632 = vpop.f32.mrb[0].mxu0
  %v2633 = vadd.f32 0.0, %v2632
  %v2634 = vpop.f32.mrb[0].mxu0
  %v2635 = vadd.f32 0.0, %v2634
  %2636 = vdwg.mxu0
  %2637 = vmatprep.subr.mxu0 %v2323
  %2638 = vmatpush1.msra.mxu0 %v2322
  %2639 = vmatprep.subr.mxu0 %v2327
  %2640 = vmatpush1.msra.mxu0 %v2326
  %2641 = vmatprep.subr.mxu0 %v2331
  %2642 = vmatpush1.msra.mxu0 %v2330
  %2643 = vmatprep.subr.mxu0 %v2335
  %2644 = vmatpush1.msra.mxu0 %v2334
  %2645 = vmatprep.subr.mxu0 %v2339
  %2646 = vmatpush1.msra.mxu0 %v2338
  %2647 = vmatprep.subr.mxu0 %v2343
  %2648 = vmatpush1.msra.mxu0 %v2342
  %2649 = vmatprep.subr.mxu0 %v2347
  %2650 = vmatpush1.msra.mxu0 %v2346
  %2651 = vmatprep.subr.mxu0 %v2351
  %2652 = vmatpush1.msra.mxu0 %v2350
  %2653 = vmatprep.subr.mxu0 %v2355
  %2654 = vmatpush1.msra.mxu0 %v2354
  %2655 = vmatprep.subr.mxu0 %v2359
  %2656 = vmatpush1.msra.mxu0 %v2358
  %2657 = vmatprep.subr.mxu0 %v2363
  %2658 = vmatpush1.msra.mxu0 %v2362
  %2659 = vmatprep.subr.mxu0 %v2367
  %2660 = vmatpush1.msra.mxu0 %v2366
  %2661 = vmatprep.subr.mxu0 %v2371
  %2662 = vmatpush1.msra.mxu0 %v2370
  %2663 = vmatprep.subr.mxu0 %v2375
  %2664 = vmatpush1.msra.mxu0 %v2374
  %2665 = vmatprep.subr.mxu0 %v2379
  %2666 = vmatpush1.msra.mxu0 %v2378
  %2667 = vmatprep.subr.mxu0 %v2383
  %2668 = vmatpush1.msra.mxu0 %v2382
  %2669 = vmatprep.subr.mxu0 0.0
  %2670 = vmatpush1.msra.mxu0 0.0
  %2671 = vmatprep.subr.mxu0 0.0
  %2672 = vmatpush1.msra.mxu0 0.0
  %2673 = vmatprep.subr.mxu0 0.0
  %2674 = vmatpush1.msra.mxu0 0.0
  %2675 = vmatprep.subr.mxu0 0.0
  %2676 = vmatpush1.msra.mxu0 0.0
  %2677 = vmatprep.subr.mxu0 0.0
  %2678 = vmatpush1.msra.mxu0 0.0
  %2679 = vmatprep.subr.mxu0 0.0
  %2680 = vmatpush1.msra.mxu0 0.0
  %2681 = vmatprep.subr.mxu0 0.0
  %2682 = vmatpush1.msra.mxu0 0.0
  %2683 = vmatprep.subr.mxu0 0.0
  %2684 = vmatpush1.msra.mxu0 0.0
  %2685 = vmatprep.subr.mxu0 0.0
  %2686 = vmatpush1.msra.mxu0 0.0
  %2687 = vmatprep.subr.mxu0 0.0
  %2688 = vmatpush1.msra.mxu0 0.0
  %2689 = vmatprep.subr.mxu0 0.0
  %2690 = vmatpush1.msra.mxu0 0.0
  %2691 = vmatprep.subr.mxu0 0.0
  %2692 = vmatpush1.msra.mxu0 0.0
  %2693 = vmatprep.subr.mxu0 0.0
  %2694 = vmatpush1.msra.mxu0 0.0
  %2695 = vmatprep.subr.mxu0 0.0
  %2696 = vmatpush1.msra.mxu0 0.0
  %2697 = vmatprep.subr.mxu0 0.0
  %2698 = vmatpush1.msra.mxu0 0.0
  %2699 = vmatprep.subr.mxu0 0.0
  %2700 = vmatpush1.msra.mxu0 0.0
  %2701 = vmatprep.mubr.f32.mxu0 0.0
  %2702 = vmatmul.mubr.f32.gmra.mrb[0].mxu0 %v2561
  %v2703 = vpop.f32.mrb[0].mxu0
  %v2704 = vadd.f32 0.0, %v2703
  %v2705 = vpop.f32.mrb[0].mxu0
  %v2706 = vadd.f32 0.0, %v2705
  %2707 = vdwg.mxu0
  %v2708 = vadd.f32 %v2562, %v2633
  %v2709 = vadd.f32 %v2563, %v2635
  %v2710 = vadd.f32 %v2564, %v2704
  %v2711 = vadd.f32 %v2565, %v2706
  %v2712 = vxor.u32 %v2708, 2147483648
  %v2713 = vmul.f32 %v2712, 1.442695
  %v2714 = vpow.pop %v2713
  %v2715 = vadd.f32 %v2714, 1.0
  %v2716 = vrcp.pop %v2715
  %v2717 = vmul.f32 1.0, %v2716
  %v2718 = vxor.u32 %v2709, 2147483648
  %v2719 = vmul.f32 %v2718, 1.442695
  %v2720 = vpow.pop %v2719
  %v2721 = vadd.f32 %v2720, 1.0
  %v2722 = vrcp.pop %v2721
  %v2723 = vmul.f32 1.0, %v2722
  %v2724 = vtanh.pop %v2710
  %v2725 = vxor.u32 %v2711, 2147483648
  %v2726 = vmul.f32 %v2725, 1.442695
  %v2727 = vpow.pop %v2726
  %v2728 = vadd.f32 %v2727, 1.0
  %v2729 = vrcp.pop %v2728
  %v2730 = vmul.f32 1.0, %v2729
  %v2731 = vmul.f32 %v2723, %v2559
  %v2732 = vmul.f32 %v2717, %v2724
  %v2733 = vadd.f32 %v2731, %v2732
  %v2734 = vtanh.pop %v2733
  %v2735 = vmul.f32 %v2730, %v2734
  %v2736 = vld [vmem:[%s896] sm:$0xff]
  %v2737 = vld [vmem:[%s896 + $0x8] sm:$0xff]
  %v2738 = vld [vmem:[%s896 + $0x10] sm:$0xff]
  %v2739 = vld [vmem:[%s896 + $0x18] sm:$0xff]
  %2740 = vmatprep.subr.mxu0 %v2321
  %2741 = vmatpush1.msra.mxu0 %v2320
  %2742 = vmatprep.subr.mxu0 %v2325
  %2743 = vmatpush1.msra.mxu0 %v2324
  %2744 = vmatprep.subr.mxu0 %v2329
  %2745 = vmatpush1.msra.mxu0 %v2328
  %2746 = vmatprep.subr.mxu0 %v2333
  %2747 = vmatpush1.msra.mxu0 %v2332
  %2748 = vmatprep.subr.mxu0 %v2337
  %2749 = vmatpush1.msra.mxu0 %v2336
  %2750 = vmatprep.subr.mxu0 %v2341
  %2751 = vmatpush1.msra.mxu0 %v2340
  %2752 = vmatprep.subr.mxu0 %v2345
  %2753 = vmatpush1.msra.mxu0 %v2344
  %2754 = vmatprep.subr.mxu0 %v2349
  %2755 = vmatpush1.msra.mxu0 %v2348
  %2756 = vmatprep.subr.mxu0 %v2353
  %2757 = vmatpush1.msra.mxu0 %v2352
  %2758 = vmatprep.subr.mxu0 %v2357
  %2759 = vmatpush1.msra.mxu0 %v2356
  %2760 = vmatprep.subr.mxu0 %v2361
  %2761 = vmatpush1.msra.mxu0 %v2360
  %2762 = vmatprep.subr.mxu0 %v2365
  %2763 = vmatpush1.msra.mxu0 %v2364
  %2764 = vmatprep.subr.mxu0 %v2369
  %2765 = vmatpush1.msra.mxu0 %v2368
  %2766 = vmatprep.subr.mxu0 %v2373
  %2767 = vmatpush1.msra.mxu0 %v2372
  %2768 = vmatprep.subr.mxu0 %v2377
  %2769 = vmatpush1.msra.mxu0 %v2376
  %2770 = vmatprep.subr.mxu0 %v2381
  %2771 = vmatpush1.msra.mxu0 %v2380
  %2772 = vmatprep.subr.mxu0 0.0
  %2773 = vmatpush1.msra.mxu0 0.0
  %2774 = vmatprep.subr.mxu0 0.0
  %2775 = vmatpush1.msra.mxu0 0.0
  %2776 = vmatprep.subr.mxu0 0.0
  %2777 = vmatpush1.msra.mxu0 0.0
  %2778 = vmatprep.subr.mxu0 0.0
  %2779 = vmatpush1.msra.mxu0 0.0
  %2780 = vmatprep.subr.mxu0 0.0
  %2781 = vmatpush1.msra.mxu0 0.0
  %2782 = vmatprep.subr.mxu0 0.0
  %2783 = vmatpush1.msra.mxu0 0.0
  %2784 = vmatprep.subr.mxu0 0.0
  %2785 = vmatpush1.msra.mxu0 0.0
  %2786 = vmatprep.subr.mxu0 0.0
  %2787 = vmatpush1.msra.mxu0 0.0
  %2788 = vmatprep.subr.mxu0 0.0
  %2789 = vmatpush1.msra.mxu0 0.0
  %2790 = vmatprep.subr.mxu0 0.0
  %2791 = vmatpush1.msra.mxu0 0.0
  %2792 = vmatprep.subr.mxu0 0.0
  %2793 = vmatpush1.msra.mxu0 0.0
  %2794 = vmatprep.subr.mxu0 0.0
  %2795 = vmatpush1.msra.mxu0 0.0
  %2796 = vmatprep.subr.mxu0 0.0
  %2797 = vmatpush1.msra.mxu0 0.0
  %2798 = vmatprep.subr.mxu0 0.0
  %2799 = vmatpush1.msra.mxu0 0.0
  %2800 = vmatprep.subr.mxu0 0.0
  %2801 = vmatpush1.msra.mxu0 0.0
  %2802 = vmatprep.subr.mxu0 0.0
  %2803 = vmatpush1.msra.mxu0 0.0
  %2804 = vmatprep.mubr.f32.mxu0 0.0
  %2805 = vmatmul.mubr.f32.gmra.mrb[0].mxu0 %v2735
  %v2806 = vpop.f32.mrb[0].mxu0
  %v2807 = vadd.f32 0.0, %v2806
  %v2808 = vpop.f32.mrb[0].mxu0
  %v2809 = vadd.f32 0.0, %v2808
  %2810 = vdwg.mxu0
  %2811 = vmatprep.subr.mxu0 %v2323
  %2812 = vmatpush1.msra.mxu0 %v2322
  %2813 = vmatprep.subr.mxu0 %v2327
  %2814 = vmatpush1.msra.mxu0 %v2326
  %2815 = vmatprep.subr.mxu0 %v2331
  %2816 = vmatpush1.msra.mxu0 %v2330
  %2817 = vmatprep.subr.mxu0 %v2335
  %2818 = vmatpush1.msra.mxu0 %v2334
  %2819 = vmatprep.subr.mxu0 %v2339
  %2820 = vmatpush1.msra.mxu0 %v2338
  %2821 = vmatprep.subr.mxu0 %v2343
  %2822 = vmatpush1.msra.mxu0 %v2342
  %2823 = vmatprep.subr.mxu0 %v2347
  %2824 = vmatpush1.msra.mxu0 %v2346
  %2825 = vmatprep.subr.mxu0 %v2351
  %2826 = vmatpush1.msra.mxu0 %v2350
  %2827 = vmatprep.subr.mxu0 %v2355
  %2828 = vmatpush1.msra.mxu0 %v2354
  %2829 = vmatprep.subr.mxu0 %v2359
  %2830 = vmatpush1.msra.mxu0 %v2358
  %2831 = vmatprep.subr.mxu0 %v2363
  %2832 = vmatpush1.msra.mxu0 %v2362
  %2833 = vmatprep.subr.mxu0 %v2367
  %2834 = vmatpush1.msra.mxu0 %v2366
  %2835 = vmatprep.subr.mxu0 %v2371
  %2836 = vmatpush1.msra.mxu0 %v2370
  %2837 = vmatprep.subr.mxu0 %v2375
  %2838 = vmatpush1.msra.mxu0 %v2374
  %2839 = vmatprep.subr.mxu0 %v2379
  %2840 = vmatpush1.msra.mxu0 %v2378
  %2841 = vmatprep.subr.mxu0 %v2383
  %2842 = vmatpush1.msra.mxu0 %v2382
  %2843 = vmatprep.subr.mxu0 0.0
  %2844 = vmatpush1.msra.mxu0 0.0
  %2845 = vmatprep.subr.mxu0 0.0
  %2846 = vmatpush1.msra.mxu0 0.0
  %2847 = vmatprep.subr.mxu0 0.0
  %2848 = vmatpush1.msra.mxu0 0.0
  %2849 = vmatprep.subr.mxu0 0.0
  %2850 = vmatpush1.msra.mxu0 0.0
  %2851 = vmatprep.subr.mxu0 0.0
  %2852 = vmatpush1.msra.mxu0 0.0
  %2853 = vmatprep.subr.mxu0 0.0
  %2854 = vmatpush1.msra.mxu0 0.0
  %2855 = vmatprep.subr.mxu0 0.0
  %2856 = vmatpush1.msra.mxu0 0.0
  %2857 = vmatprep.subr.mxu0 0.0
  %2858 = vmatpush1.msra.mxu0 0.0
  %2859 = vmatprep.subr.mxu0 0.0
  %2860 = vmatpush1.msra.mxu0 0.0
  %2861 = vmatprep.subr.mxu0 0.0
  %2862 = vmatpush1.msra.mxu0 0.0
  %2863 = vmatprep.subr.mxu0 0.0
  %2864 = vmatpush1.msra.mxu0 0.0
  %2865 = vmatprep.subr.mxu0 0.0
  %2866 = vmatpush1.msra.mxu0 0.0
  %2867 = vmatprep.subr.mxu0 0.0
  %2868 = vmatpush1.msra.mxu0 0.0
  %2869 = vmatprep.subr.mxu0 0.0
  %2870 = vmatpush1.msra.mxu0 0.0
  %2871 = vmatprep.subr.mxu0 0.0
  %2872 = vmatpush1.msra.mxu0 0.0
  %2873 = vmatprep.subr.mxu0 0.0
  %2874 = vmatpush1.msra.mxu0 0.0
  %2875 = vmatprep.mubr.f32.mxu0 0.0
  %2876 = vmatmul.mubr.f32.gmra.mrb[0].mxu0 %v2735
  %v2877 = vpop.f32.mrb[0].mxu0
  %v2878 = vadd.f32 0.0, %v2877
  %v2879 = vpop.f32.mrb[0].mxu0
  %v2880 = vadd.f32 0.0, %v2879
  %2881 = vdwg.mxu0
  %v2882 = vadd.f32 %v2736, %v2807
  %v2883 = vadd.f32 %v2737, %v2809
  %v2884 = vadd.f32 %v2738, %v2878
  %v2885 = vadd.f32 %v2739, %v2880
  %v2886 = vxor.u32 %v2882, 2147483648
  %v2887 = vmul.f32 %v2886, 1.442695
  %v2888 = vpow.pop %v2887
  %v2889 = vadd.f32 %v2888, 1.0
  %v2890 = vrcp.pop %v2889
  %v2891 = vmul.f32 1.0, %v2890
  %v2892 = vxor.u32 %v2883, 2147483648
  %v2893 = vmul.f32 %v2892, 1.442695
  %v2894 = vpow.pop %v2893
  %v2895 = vadd.f32 %v2894, 1.0
  %v2896 = vrcp.pop %v2895
  %v2897 = vmul.f32 1.0, %v2896
  %v2898 = vtanh.pop %v2884
  %v2899 = vxor.u32 %v2885, 2147483648
  %v2900 = vmul.f32 %v2899, 1.442695
  %v2901 = vpow.pop %v2900
  %v2902 = vadd.f32 %v2901, 1.0
  %v2903 = vrcp.pop %v2902
  %v2904 = vmul.f32 1.0, %v2903
  %v2905 = vmul.f32 %v2897, %v2733
  %v2906 = vmul.f32 %v2891, %v2898
  %v2907 = vadd.f32 %v2905, %v2906
  %v2908 = vtanh.pop %v2907
  %v2909 = vmul.f32 %v2904, %v2908
  %v2910 = vld [vmem:[%s1075] sm:$0xff]
  %v2911 = vld [vmem:[%s1075 + $0x8] sm:$0xff]
  %v2912 = vld [vmem:[%s1075 + $0x10] sm:$0xff]
  %v2913 = vld [vmem:[%s1075 + $0x18] sm:$0xff]
  %2914 = vmatprep.subr.mxu0 %v2321
  %2915 = vmatpush1.msra.mxu0 %v2320
  %2916 = vmatprep.subr.mxu0 %v2325
  %2917 = vmatpush1.msra.mxu0 %v2324
  %2918 = vmatprep.subr.mxu0 %v2329
  %2919 = vmatpush1.msra.mxu0 %v2328
  %2920 = vmatprep.subr.mxu0 %v2333
  %2921 = vmatpush1.msra.mxu0 %v2332
  %2922 = vmatprep.subr.mxu0 %v2337
  %2923 = vmatpush1.msra.mxu0 %v2336
  %2924 = vmatprep.subr.mxu0 %v2341
  %2925 = vmatpush1.msra.mxu0 %v2340
  %2926 = vmatprep.subr.mxu0 %v2345
  %2927 = vmatpush1.msra.mxu0 %v2344
  %2928 = vmatprep.subr.mxu0 %v2349
  %2929 = vmatpush1.msra.mxu0 %v2348
  %2930 = vmatprep.subr.mxu0 %v2353
  %2931 = vmatpush1.msra.mxu0 %v2352
  %2932 = vmatprep.subr.mxu0 %v2357
  %2933 = vmatpush1.msra.mxu0 %v2356
  %2934 = vmatprep.subr.mxu0 %v2361
  %2935 = vmatpush1.msra.mxu0 %v2360
  %2936 = vmatprep.subr.mxu0 %v2365
  %2937 = vmatpush1.msra.mxu0 %v2364
  %2938 = vmatprep.subr.mxu0 %v2369
  %2939 = vmatpush1.msra.mxu0 %v2368
  %2940 = vmatprep.subr.mxu0 %v2373
  %2941 = vmatpush1.msra.mxu0 %v2372
  %2942 = vmatprep.subr.mxu0 %v2377
  %2943 = vmatpush1.msra.mxu0 %v2376
  %2944 = vmatprep.subr.mxu0 %v2381
  %2945 = vmatpush1.msra.mxu0 %v2380
  %2946 = vmatprep.subr.mxu0 0.0
  %2947 = vmatpush1.msra.mxu0 0.0
  %2948 = vmatprep.subr.mxu0 0.0
  %2949 = vmatpush1.msra.mxu0 0.0
  %2950 = vmatprep.subr.mxu0 0.0
  %2951 = vmatpush1.msra.mxu0 0.0
  %2952 = vmatprep.subr.mxu0 0.0
  %2953 = vmatpush1.msra.mxu0 0.0
  %2954 = vmatprep.subr.mxu0 0.0
  %2955 = vmatpush1.msra.mxu0 0.0
  %2956 = vmatprep.subr.mxu0 0.0
  %2957 = vmatpush1.msra.mxu0 0.0
  %2958 = vmatprep.subr.mxu0 0.0
  %2959 = vmatpush1.msra.mxu0 0.0
  %2960 = vmatprep.subr.mxu0 0.0
  %2961 = vmatpush1.msra.mxu0 0.0
  %2962 = vmatprep.subr.mxu0 0.0
  %2963 = vmatpush1.msra.mxu0 0.0
  %2964 = vmatprep.subr.mxu0 0.0
  %2965 = vmatpush1.msra.mxu0 0.0
  %2966 = vmatprep.subr.mxu0 0.0
  %2967 = vmatpush1.msra.mxu0 0.0
  %2968 = vmatprep.subr.mxu0 0.0
  %2969 = vmatpush1.msra.mxu0 0.0
  %2970 = vmatprep.subr.mxu0 0.0
  %2971 = vmatpush1.msra.mxu0 0.0
  %2972 = vmatprep.subr.mxu0 0.0
  %2973 = vmatpush1.msra.mxu0 0.0
  %2974 = vmatprep.subr.mxu0 0.0
  %2975 = vmatpush1.msra.mxu0 0.0
  %2976 = vmatprep.subr.mxu0 0.0
  %2977 = vmatpush1.msra.mxu0 0.0
  %2978 = vmatprep.mubr.f32.mxu0 0.0
  %2979 = vmatmul.mubr.f32.gmra.mrb[0].mxu0 %v2909
  %v2980 = vpop.f32.mrb[0].mxu0
  %v2981 = vadd.f32 0.0, %v2980
  %v2982 = vpop.f32.mrb[0].mxu0
  %v2983 = vadd.f32 0.0, %v2982
  %2984 = vdwg.mxu0
  %2985 = vmatprep.subr.mxu0 %v2323
  %2986 = vmatpush1.msra.mxu0 %v2322
  %2987 = vmatprep.subr.mxu0 %v2327
  %2988 = vmatpush1.msra.mxu0 %v2326
  %2989 = vmatprep.subr.mxu0 %v2331
  %2990 = vmatpush1.msra.mxu0 %v2330
  %2991 = vmatprep.subr.mxu0 %v2335
  %2992 = vmatpush1.msra.mxu0 %v2334
  %2993 = vmatprep.subr.mxu0 %v2339
  %2994 = vmatpush1.msra.mxu0 %v2338
  %2995 = vmatprep.subr.mxu0 %v2343
  %2996 = vmatpush1.msra.mxu0 %v2342
  %2997 = vmatprep.subr.mxu0 %v2347
  %2998 = vmatpush1.msra.mxu0 %v2346
  %2999 = vmatprep.subr.mxu0 %v2351
  %3000 = vmatpush1.msra.mxu0 %v2350
  %3001 = vmatprep.subr.mxu0 %v2355
  %3002 = vmatpush1.msra.mxu0 %v2354
  %3003 = vmatprep.subr.mxu0 %v2359
  %3004 = vmatpush1.msra.mxu0 %v2358
  %3005 = vmatprep.subr.mxu0 %v2363
  %3006 = vmatpush1.msra.mxu0 %v2362
  %3007 = vmatprep.subr.mxu0 %v2367
  %3008 = vmatpush1.msra.mxu0 %v2366
  %3009 = vmatprep.subr.mxu0 %v2371
  %3010 = vmatpush1.msra.mxu0 %v2370
  %3011 = vmatprep.subr.mxu0 %v2375
  %3012 = vmatpush1.msra.mxu0 %v2374
  %3013 = vmatprep.subr.mxu0 %v2379
  %3014 = vmatpush1.msra.mxu0 %v2378
  %3015 = vmatprep.subr.mxu0 %v2383
  %3016 = vmatpush1.msra.mxu0 %v2382
  %3017 = vmatprep.subr.mxu0 0.0
  %3018 = vmatpush1.msra.mxu0 0.0
  %3019 = vmatprep.subr.mxu0 0.0
  %3020 = vmatpush1.msra.mxu0 0.0
  %3021 = vmatprep.subr.mxu0 0.0
  %3022 = vmatpush1.msra.mxu0 0.0
  %3023 = vmatprep.subr.mxu0 0.0
  %3024 = vmatpush1.msra.mxu0 0.0
  %3025 = vmatprep.subr.mxu0 0.0
  %3026 = vmatpush1.msra.mxu0 0.0
  %3027 = vmatprep.subr.mxu0 0.0
  %3028 = vmatpush1.msra.mxu0 0.0
  %3029 = vmatprep.subr.mxu0 0.0
  %3030 = vmatpush1.msra.mxu0 0.0
  %3031 = vmatprep.subr.mxu0 0.0
  %3032 = vmatpush1.msra.mxu0 0.0
  %3033 = vmatprep.subr.mxu0 0.0
  %3034 = vmatpush1.msra.mxu0 0.0
  %3035 = vmatprep.subr.mxu0 0.0
  %3036 = vmatpush1.msra.mxu0 0.0
  %3037 = vmatprep.subr.mxu0 0.0
  %3038 = vmatpush1.msra.mxu0 0.0
  %3039 = vmatprep.subr.mxu0 0.0
  %3040 = vmatpush1.msra.mxu0 0.0
  %3041 = vmatprep.subr.mxu0 0.0
  %3042 = vmatpush1.msra.mxu0 0.0
  %3043 = vmatprep.subr.mxu0 0.0
  %3044 = vmatpush1.msra.mxu0 0.0
  %3045 = vmatprep.subr.mxu0 0.0
  %3046 = vmatpush1.msra.mxu0 0.0
  %3047 = vmatprep.subr.mxu0 0.0
  %3048 = vmatpush1.msra.mxu0 0.0
  %3049 = vmatprep.mubr.f32.mxu0 0.0
  %3050 = vmatmul.mubr.f32.gmra.mrb[0].mxu0 %v2909
  %v3051 = vpop.f32.mrb[0].mxu0
  %v3052 = vadd.f32 0.0, %v3051
  %v3053 = vpop.f32.mrb[0].mxu0
  %v3054 = vadd.f32 0.0, %v3053
  %3055 = vdwg.mxu0
  %v3056 = vadd.f32 %v2910, %v2981
  %v3057 = vadd.f32 %v2911, %v2983
  %v3058 = vadd.f32 %v2912, %v3052
  %v3059 = vadd.f32 %v2913, %v3054
  %v3060 = vxor.u32 %v3056, 2147483648
  %v3061 = vmul.f32 %v3060, 1.442695
  %v3062 = vpow.pop %v3061
  %v3063 = vadd.f32 %v3062, 1.0
  %v3064 = vrcp.pop %v3063
  %v3065 = vmul.f32 1.0, %v3064
  %v3066 = vxor.u32 %v3057, 2147483648
  %v3067 = vmul.f32 %v3066, 1.442695
  %v3068 = vpow.pop %v3067
  %v3069 = vadd.f32 %v3068, 1.0
  %v3070 = vrcp.pop %v3069
  %v3071 = vmul.f32 1.0, %v3070
  %v3072 = vtanh.pop %v3058
  %v3073 = vxor.u32 %v3059, 2147483648
  %v3074 = vmul.f32 %v3073, 1.442695
  %v3075 = vpow.pop %v3074
  %v3076 = vadd.f32 %v3075, 1.0
  %v3077 = vrcp.pop %v3076
  %v3078 = vmul.f32 1.0, %v3077
  %v3079 = vmul.f32 %v3071, %v2907
  %v3080 = vmul.f32 %v3065, %v3072
  %v3081 = vadd.f32 %v3079, %v3080
  %v3082 = vtanh.pop %v3081
  %v3083 = vmul.f32 %v3078, %v3082
  %v3084 = vld [vmem:[%s1254] sm:$0xff]
  %v3085 = vld [vmem:[%s1254 + $0x8] sm:$0xff]
  %v3086 = vld [vmem:[%s1254 + $0x10] sm:$0xff]
  %v3087 = vld [vmem:[%s1254 + $0x18] sm:$0xff]
  %3088 = vmatprep.subr.mxu0 %v2321
  %3089 = vmatpush1.msra.mxu0 %v2320
  %3090 = vmatprep.subr.mxu0 %v2325
  %3091 = vmatpush1.msra.mxu0 %v2324
  %3092 = vmatprep.subr.mxu0 %v2329
  %3093 = vmatpush1.msra.mxu0 %v2328
  %3094 = vmatprep.subr.mxu0 %v2333
  %3095 = vmatpush1.msra.mxu0 %v2332
  %3096 = vmatprep.subr.mxu0 %v2337
  %3097 = vmatpush1.msra.mxu0 %v2336
  %3098 = vmatprep.subr.mxu0 %v2341
  %3099 = vmatpush1.msra.mxu0 %v2340
  %3100 = vmatprep.subr.mxu0 %v2345
  %3101 = vmatpush1.msra.mxu0 %v2344
  %3102 = vmatprep.subr.mxu0 %v2349
  %3103 = vmatpush1.msra.mxu0 %v2348
  %3104 = vmatprep.subr.mxu0 %v2353
  %3105 = vmatpush1.msra.mxu0 %v2352
  %3106 = vmatprep.subr.mxu0 %v2357
  %3107 = vmatpush1.msra.mxu0 %v2356
  %3108 = vmatprep.subr.mxu0 %v2361
  %3109 = vmatpush1.msra.mxu0 %v2360
  %3110 = vmatprep.subr.mxu0 %v2365
  %3111 = vmatpush1.msra.mxu0 %v2364
  %3112 = vmatprep.subr.mxu0 %v2369
  %3113 = vmatpush1.msra.mxu0 %v2368
  %3114 = vmatprep.subr.mxu0 %v2373
  %3115 = vmatpush1.msra.mxu0 %v2372
  %3116 = vmatprep.subr.mxu0 %v2377
  %3117 = vmatpush1.msra.mxu0 %v2376
  %3118 = vmatprep.subr.mxu0 %v2381
  %3119 = vmatpush1.msra.mxu0 %v2380
  %3120 = vmatprep.subr.mxu0 0.0
  %3121 = vmatpush1.msra.mxu0 0.0
  %3122 = vmatprep.subr.mxu0 0.0
  %3123 = vmatpush1.msra.mxu0 0.0
  %3124 = vmatprep.subr.mxu0 0.0
  %3125 = vmatpush1.msra.mxu0 0.0
  %3126 = vmatprep.subr.mxu0 0.0
  %3127 = vmatpush1.msra.mxu0 0.0
  %3128 = vmatprep.subr.mxu0 0.0
  %3129 = vmatpush1.msra.mxu0 0.0
  %3130 = vmatprep.subr.mxu0 0.0
  %3131 = vmatpush1.msra.mxu0 0.0
  %3132 = vmatprep.subr.mxu0 0.0
  %3133 = vmatpush1.msra.mxu0 0.0
  %3134 = vmatprep.subr.mxu0 0.0
  %3135 = vmatpush1.msra.mxu0 0.0
  %3136 = vmatprep.subr.mxu0 0.0
  %3137 = vmatpush1.msra.mxu0 0.0
  %3138 = vmatprep.subr.mxu0 0.0
  %3139 = vmatpush1.msra.mxu0 0.0
  %3140 = vmatprep.subr.mxu0 0.0
  %3141 = vmatpush1.msra.mxu0 0.0
  %3142 = vmatprep.subr.mxu0 0.0
  %3143 = vmatpush1.msra.mxu0 0.0
  %3144 = vmatprep.subr.mxu0 0.0
  %3145 = vmatpush1.msra.mxu0 0.0
  %3146 = vmatprep.subr.mxu0 0.0
  %3147 = vmatpush1.msra.mxu0 0.0
  %3148 = vmatprep.subr.mxu0 0.0
  %3149 = vmatpush1.msra.mxu0 0.0
  %3150 = vmatprep.subr.mxu0 0.0
  %3151 = vmatpush1.msra.mxu0 0.0
  %3152 = vmatprep.mubr.f32.mxu0 0.0
  %3153 = vmatmul.mubr.f32.gmra.mrb[0].mxu0 %v3083
  %v3154 = vpop.f32.mrb[0].mxu0
  %v3155 = vadd.f32 0.0, %v3154
  %v3156 = vpop.f32.mrb[0].mxu0
  %v3157 = vadd.f32 0.0, %v3156
  %3158 = vdwg.mxu0
  %3159 = vmatprep.subr.mxu0 %v2323
  %3160 = vmatpush1.msra.mxu0 %v2322
  %3161 = vmatprep.subr.mxu0 %v2327
  %3162 = vmatpush1.msra.mxu0 %v2326
  %3163 = vmatprep.subr.mxu0 %v2331
  %3164 = vmatpush1.msra.mxu0 %v2330
  %3165 = vmatprep.subr.mxu0 %v2335
  %3166 = vmatpush1.msra.mxu0 %v2334
  %3167 = vmatprep.subr.mxu0 %v2339
  %3168 = vmatpush1.msra.mxu0 %v2338
  %3169 = vmatprep.subr.mxu0 %v2343
  %3170 = vmatpush1.msra.mxu0 %v2342
  %3171 = vmatprep.subr.mxu0 %v2347
  %3172 = vmatpush1.msra.mxu0 %v2346
  %3173 = vmatprep.subr.mxu0 %v2351
  %3174 = vmatpush1.msra.mxu0 %v2350
  %3175 = vmatprep.subr.mxu0 %v2355
  %3176 = vmatpush1.msra.mxu0 %v2354
  %3177 = vmatprep.subr.mxu0 %v2359
  %3178 = vmatpush1.msra.mxu0 %v2358
  %3179 = vmatprep.subr.mxu0 %v2363
  %3180 = vmatpush1.msra.mxu0 %v2362
  %3181 = vmatprep.subr.mxu0 %v2367
  %3182 = vmatpush1.msra.mxu0 %v2366
  %3183 = vmatprep.subr.mxu0 %v2371
  %3184 = vmatpush1.msra.mxu0 %v2370
  %3185 = vmatprep.subr.mxu0 %v2375
  %3186 = vmatpush1.msra.mxu0 %v2374
  %3187 = vmatprep.subr.mxu0 %v2379
  %3188 = vmatpush1.msra.mxu0 %v2378
  %3189 = vmatprep.subr.mxu0 %v2383
  %3190 = vmatpush1.msra.mxu0 %v2382
  %3191 = vmatprep.subr.mxu0 0.0
  %3192 = vmatpush1.msra.mxu0 0.0
  %3193 = vmatprep.subr.mxu0 0.0
  %3194 = vmatpush1.msra.mxu0 0.0
  %3195 = vmatprep.subr.mxu0 0.0
  %3196 = vmatpush1.msra.mxu0 0.0
  %3197 = vmatprep.subr.mxu0 0.0
  %3198 = vmatpush1.msra.mxu0 0.0
  %3199 = vmatprep.subr.mxu0 0.0
  %3200 = vmatpush1.msra.mxu0 0.0
  %3201 = vmatprep.subr.mxu0 0.0
  %3202 = vmatpush1.msra.mxu0 0.0
  %3203 = vmatprep.subr.mxu0 0.0
  %3204 = vmatpush1.msra.mxu0 0.0
  %3205 = vmatprep.subr.mxu0 0.0
  %3206 = vmatpush1.msra.mxu0 0.0
  %3207 = vmatprep.subr.mxu0 0.0
  %3208 = vmatpush1.msra.mxu0 0.0
  %3209 = vmatprep.subr.mxu0 0.0
  %3210 = vmatpush1.msra.mxu0 0.0
  %3211 = vmatprep.subr.mxu0 0.0
  %3212 = vmatpush1.msra.mxu0 0.0
  %3213 = vmatprep.subr.mxu0 0.0
  %3214 = vmatpush1.msra.mxu0 0.0
  %3215 = vmatprep.subr.mxu0 0.0
  %3216 = vmatpush1.msra.mxu0 0.0
  %3217 = vmatprep.subr.mxu0 0.0
  %3218 = vmatpush1.msra.mxu0 0.0
  %3219 = vmatprep.subr.mxu0 0.0
  %3220 = vmatpush1.msra.mxu0 0.0
  %3221 = vmatprep.subr.mxu0 0.0
  %3222 = vmatpush1.msra.mxu0 0.0
  %3223 = vmatprep.mubr.f32.mxu0 0.0
  %3224 = vmatmul.mubr.f32.gmra.mrb[0].mxu0 %v3083
  %v3225 = vpop.f32.mrb[0].mxu0
  %v3226 = vadd.f32 0.0, %v3225
  %v3227 = vpop.f32.mrb[0].mxu0
  %v3228 = vadd.f32 0.0, %v3227
  %3229 = vdwg.mxu0
  %v3230 = vadd.f32 %v3084, %v3155
  %v3231 = vadd.f32 %v3085, %v3157
  %v3232 = vadd.f32 %v3086, %v3226
  %v3233 = vadd.f32 %v3087, %v3228
  %v3234 = vxor.u32 %v3230, 2147483648
  %v3235 = vmul.f32 %v3234, 1.442695
  %v3236 = vpow.pop %v3235
  %v3237 = vadd.f32 %v3236, 1.0
  %v3238 = vrcp.pop %v3237
  %v3239 = vmul.f32 1.0, %v3238
  %v3240 = vxor.u32 %v3231, 2147483648
  %v3241 = vmul.f32 %v3240, 1.442695
  %v3242 = vpow.pop %v3241
  %v3243 = vadd.f32 %v3242, 1.0
  %v3244 = vrcp.pop %v3243
  %v3245 = vmul.f32 1.0, %v3244
  %v3246 = vtanh.pop %v3232
  %v3247 = vxor.u32 %v3233, 2147483648
  %v3248 = vmul.f32 %v3247, 1.442695
  %v3249 = vpow.pop %v3248
  %v3250 = vadd.f32 %v3249, 1.0
  %v3251 = vrcp.pop %v3250
  %v3252 = vmul.f32 1.0, %v3251
  %v3253 = vmul.f32 %v3245, %v3081
  %v3254 = vmul.f32 %v3239, %v3246
  %v3255 = vadd.f32 %v3253, %v3254
  %v3256 = vtanh.pop %v3255
  %v3257 = vmul.f32 %v3252, %v3256
  %v3258 = vld [vmem:[%s1433] sm:$0xff]
  %v3259 = vld [vmem:[%s1433 + $0x8] sm:$0xff]
  %v3260 = vld [vmem:[%s1433 + $0x10] sm:$0xff]
  %v3261 = vld [vmem:[%s1433 + $0x18] sm:$0xff]
  %3262 = vmatprep.subr.mxu0 %v2321
  %3263 = vmatpush1.msra.mxu0 %v2320
  %3264 = vmatprep.subr.mxu0 %v2325
  %3265 = vmatpush1.msra.mxu0 %v2324
  %3266 = vmatprep.subr.mxu0 %v2329
  %3267 = vmatpush1.msra.mxu0 %v2328
  %3268 = vmatprep.subr.mxu0 %v2333
  %3269 = vmatpush1.msra.mxu0 %v2332
  %3270 = vmatprep.subr.mxu0 %v2337
  %3271 = vmatpush1.msra.mxu0 %v2336
  %3272 = vmatprep.subr.mxu0 %v2341
  %3273 = vmatpush1.msra.mxu0 %v2340
  %3274 = vmatprep.subr.mxu0 %v2345
  %3275 = vmatpush1.msra.mxu0 %v2344
  %3276 = vmatprep.subr.mxu0 %v2349
  %3277 = vmatpush1.msra.mxu0 %v2348
  %3278 = vmatprep.subr.mxu0 %v2353
  %3279 = vmatpush1.msra.mxu0 %v2352
  %3280 = vmatprep.subr.mxu0 %v2357
  %3281 = vmatpush1.msra.mxu0 %v2356
  %3282 = vmatprep.subr.mxu0 %v2361
  %3283 = vmatpush1.msra.mxu0 %v2360
  %3284 = vmatprep.subr.mxu0 %v2365
  %3285 = vmatpush1.msra.mxu0 %v2364
  %3286 = vmatprep.subr.mxu0 %v2369
  %3287 = vmatpush1.msra.mxu0 %v2368
  %3288 = vmatprep.subr.mxu0 %v2373
  %3289 = vmatpush1.msra.mxu0 %v2372
  %3290 = vmatprep.subr.mxu0 %v2377
  %3291 = vmatpush1.msra.mxu0 %v2376
  %3292 = vmatprep.subr.mxu0 %v2381
  %3293 = vmatpush1.msra.mxu0 %v2380
  %3294 = vmatprep.subr.mxu0 0.0
  %3295 = vmatpush1.msra.mxu0 0.0
  %3296 = vmatprep.subr.mxu0 0.0
  %3297 = vmatpush1.msra.mxu0 0.0
  %3298 = vmatprep.subr.mxu0 0.0
  %3299 = vmatpush1.msra.mxu0 0.0
  %3300 = vmatprep.subr.mxu0 0.0
  %3301 = vmatpush1.msra.mxu0 0.0
  %3302 = vmatprep.subr.mxu0 0.0
  %3303 = vmatpush1.msra.mxu0 0.0
  %3304 = vmatprep.subr.mxu0 0.0
  %3305 = vmatpush1.msra.mxu0 0.0
  %3306 = vmatprep.subr.mxu0 0.0
  %3307 = vmatpush1.msra.mxu0 0.0
  %3308 = vmatprep.subr.mxu0 0.0
  %3309 = vmatpush1.msra.mxu0 0.0
  %3310 = vmatprep.subr.mxu0 0.0
  %3311 = vmatpush1.msra.mxu0 0.0
  %3312 = vmatprep.subr.mxu0 0.0
  %3313 = vmatpush1.msra.mxu0 0.0
  %3314 = vmatprep.subr.mxu0 0.0
  %3315 = vmatpush1.msra.mxu0 0.0
  %3316 = vmatprep.subr.mxu0 0.0
  %3317 = vmatpush1.msra.mxu0 0.0
  %3318 = vmatprep.subr.mxu0 0.0
  %3319 = vmatpush1.msra.mxu0 0.0
  %3320 = vmatprep.subr.mxu0 0.0
  %3321 = vmatpush1.msra.mxu0 0.0
  %3322 = vmatprep.subr.mxu0 0.0
  %3323 = vmatpush1.msra.mxu0 0.0
  %3324 = vmatprep.subr.mxu0 0.0
  %3325 = vmatpush1.msra.mxu0 0.0
  %3326 = vmatprep.mubr.f32.mxu0 0.0
  %3327 = vmatmul.mubr.f32.gmra.mrb[0].mxu0 %v3257
  %v3328 = vpop.f32.mrb[0].mxu0
  %v3329 = vadd.f32 0.0, %v3328
  %v3330 = vpop.f32.mrb[0].mxu0
  %v3331 = vadd.f32 0.0, %v3330
  %3332 = vdwg.mxu0
  %3333 = vmatprep.subr.mxu0 %v2323
  %3334 = vmatpush1.msra.mxu0 %v2322
  %3335 = vmatprep.subr.mxu0 %v2327
  %3336 = vmatpush1.msra.mxu0 %v2326
  %3337 = vmatprep.subr.mxu0 %v2331
  %3338 = vmatpush1.msra.mxu0 %v2330
  %3339 = vmatprep.subr.mxu0 %v2335
  %3340 = vmatpush1.msra.mxu0 %v2334
  %3341 = vmatprep.subr.mxu0 %v2339
  %3342 = vmatpush1.msra.mxu0 %v2338
  %3343 = vmatprep.subr.mxu0 %v2343
  %3344 = vmatpush1.msra.mxu0 %v2342
  %3345 = vmatprep.subr.mxu0 %v2347
  %3346 = vmatpush1.msra.mxu0 %v2346
  %3347 = vmatprep.subr.mxu0 %v2351
  %3348 = vmatpush1.msra.mxu0 %v2350
  %3349 = vmatprep.subr.mxu0 %v2355
  %3350 = vmatpush1.msra.mxu0 %v2354
  %3351 = vmatprep.subr.mxu0 %v2359
  %3352 = vmatpush1.msra.mxu0 %v2358
  %3353 = vmatprep.subr.mxu0 %v2363
  %3354 = vmatpush1.msra.mxu0 %v2362
  %3355 = vmatprep.subr.mxu0 %v2367
  %3356 = vmatpush1.msra.mxu0 %v2366
  %3357 = vmatprep.subr.mxu0 %v2371
  %3358 = vmatpush1.msra.mxu0 %v2370
  %3359 = vmatprep.subr.mxu0 %v2375
  %3360 = vmatpush1.msra.mxu0 %v2374
  %3361 = vmatprep.subr.mxu0 %v2379
  %3362 = vmatpush1.msra.mxu0 %v2378
  %3363 = vmatprep.subr.mxu0 %v2383
  %3364 = vmatpush1.msra.mxu0 %v2382
  %3365 = vmatprep.subr.mxu0 0.0
  %3366 = vmatpush1.msra.mxu0 0.0
  %3367 = vmatprep.subr.mxu0 0.0
  %3368 = vmatpush1.msra.mxu0 0.0
  %3369 = vmatprep.subr.mxu0 0.0
  %3370 = vmatpush1.msra.mxu0 0.0
  %3371 = vmatprep.subr.mxu0 0.0
  %3372 = vmatpush1.msra.mxu0 0.0
  %3373 = vmatprep.subr.mxu0 0.0
  %3374 = vmatpush1.msra.mxu0 0.0
  %3375 = vmatprep.subr.mxu0 0.0
  %3376 = vmatpush1.msra.mxu0 0.0
  %3377 = vmatprep.subr.mxu0 0.0
  %3378 = vmatpush1.msra.mxu0 0.0
  %3379 = vmatprep.subr.mxu0 0.0
  %3380 = vmatpush1.msra.mxu0 0.0
  %3381 = vmatprep.subr.mxu0 0.0
  %3382 = vmatpush1.msra.mxu0 0.0
  %3383 = vmatprep.subr.mxu0 0.0
  %3384 = vmatpush1.msra.mxu0 0.0
  %3385 = vmatprep.subr.mxu0 0.0
  %3386 = vmatpush1.msra.mxu0 0.0
  %3387 = vmatprep.subr.mxu0 0.0
  %3388 = vmatpush1.msra.mxu0 0.0
  %3389 = vmatprep.subr.mxu0 0.0
  %3390 = vmatpush1.msra.mxu0 0.0
  %3391 = vmatprep.subr.mxu0 0.0
  %3392 = vmatpush1.msra.mxu0 0.0
  %3393 = vmatprep.subr.mxu0 0.0
  %3394 = vmatpush1.msra.mxu0 0.0
  %3395 = vmatprep.subr.mxu0 0.0
  %3396 = vmatpush1.msra.mxu0 0.0
  %3397 = vmatprep.mubr.f32.mxu0 0.0
  %3398 = vmatmul.mubr.f32.gmra.mrb[0].mxu0 %v3257
  %v3399 = vpop.f32.mrb[0].mxu0
  %v3400 = vadd.f32 0.0, %v3399
  %v3401 = vpop.f32.mrb[0].mxu0
  %v3402 = vadd.f32 0.0, %v3401
  %3403 = vdwg.mxu0
  %v3404 = vadd.f32 %v3258, %v3329
  %v3405 = vadd.f32 %v3259, %v3331
  %v3406 = vadd.f32 %v3260, %v3400
  %v3407 = vadd.f32 %v3261, %v3402
  %v3408 = vxor.u32 %v3404, 2147483648
  %v3409 = vmul.f32 %v3408, 1.442695
  %v3410 = vpow.pop %v3409
  %v3411 = vadd.f32 %v3410, 1.0
  %v3412 = vrcp.pop %v3411
  %v3413 = vmul.f32 1.0, %v3412
  %v3414 = vxor.u32 %v3405, 2147483648
  %v3415 = vmul.f32 %v3414, 1.442695
  %v3416 = vpow.pop %v3415
  %v3417 = vadd.f32 %v3416, 1.0
  %v3418 = vrcp.pop %v3417
  %v3419 = vmul.f32 1.0, %v3418
  %v3420 = vtanh.pop %v3406
  %v3421 = vxor.u32 %v3407, 2147483648
  %v3422 = vmul.f32 %v3421, 1.442695
  %v3423 = vpow.pop %v3422
  %v3424 = vadd.f32 %v3423, 1.0
  %v3425 = vrcp.pop %v3424
  %v3426 = vmul.f32 1.0, %v3425
  %v3427 = vmul.f32 %v3419, %v3255
  %v3428 = vmul.f32 %v3413, %v3420
  %v3429 = vadd.f32 %v3427, %v3428
  %v3430 = vtanh.pop %v3429
  %v3431 = vmul.f32 %v3426, %v3430
  %v3432 = vld [vmem:[%s1612] sm:$0xff]
  %v3433 = vld [vmem:[%s1612 + $0x8] sm:$0xff]
  %v3434 = vld [vmem:[%s1612 + $0x10] sm:$0xff]
  %v3435 = vld [vmem:[%s1612 + $0x18] sm:$0xff]
  %3436 = vmatprep.subr.mxu0 %v2321
  %3437 = vmatpush1.msra.mxu0 %v2320
  %3438 = vmatprep.subr.mxu0 %v2325
  %3439 = vmatpush1.msra.mxu0 %v2324
  %3440 = vmatprep.subr.mxu0 %v2329
  %3441 = vmatpush1.msra.mxu0 %v2328
  %3442 = vmatprep.subr.mxu0 %v2333
  %3443 = vmatpush1.msra.mxu0 %v2332
  %3444 = vmatprep.subr.mxu0 %v2337
  %3445 = vmatpush1.msra.mxu0 %v2336
  %3446 = vmatprep.subr.mxu0 %v2341
  %3447 = vmatpush1.msra.mxu0 %v2340
  %3448 = vmatprep.subr.mxu0 %v2345
  %3449 = vmatpush1.msra.mxu0 %v2344
  %3450 = vmatprep.subr.mxu0 %v2349
  %3451 = vmatpush1.msra.mxu0 %v2348
  %3452 = vmatprep.subr.mxu0 %v2353
  %3453 = vmatpush1.msra.mxu0 %v2352
  %3454 = vmatprep.subr.mxu0 %v2357
  %3455 = vmatpush1.msra.mxu0 %v2356
  %3456 = vmatprep.subr.mxu0 %v2361
  %3457 = vmatpush1.msra.mxu0 %v2360
  %3458 = vmatprep.subr.mxu0 %v2365
  %3459 = vmatpush1.msra.mxu0 %v2364
  %3460 = vmatprep.subr.mxu0 %v2369
  %3461 = vmatpush1.msra.mxu0 %v2368
  %3462 = vmatprep.subr.mxu0 %v2373
  %3463 = vmatpush1.msra.mxu0 %v2372
  %3464 = vmatprep.subr.mxu0 %v2377
  %3465 = vmatpush1.msra.mxu0 %v2376
  %3466 = vmatprep.subr.mxu0 %v2381
  %3467 = vmatpush1.msra.mxu0 %v2380
  %3468 = vmatprep.subr.mxu0 0.0
  %3469 = vmatpush1.msra.mxu0 0.0
  %3470 = vmatprep.subr.mxu0 0.0
  %3471 = vmatpush1.msra.mxu0 0.0
  %3472 = vmatprep.subr.mxu0 0.0
  %3473 = vmatpush1.msra.mxu0 0.0
  %3474 = vmatprep.subr.mxu0 0.0
  %3475 = vmatpush1.msra.mxu0 0.0
  %3476 = vmatprep.subr.mxu0 0.0
  %3477 = vmatpush1.msra.mxu0 0.0
  %3478 = vmatprep.subr.mxu0 0.0
  %3479 = vmatpush1.msra.mxu0 0.0
  %3480 = vmatprep.subr.mxu0 0.0
  %3481 = vmatpush1.msra.mxu0 0.0
  %3482 = vmatprep.subr.mxu0 0.0
  %3483 = vmatpush1.msra.mxu0 0.0
  %3484 = vmatprep.subr.mxu0 0.0
  %3485 = vmatpush1.msra.mxu0 0.0
  %3486 = vmatprep.subr.mxu0 0.0
  %3487 = vmatpush1.msra.mxu0 0.0
  %3488 = vmatprep.subr.mxu0 0.0
  %3489 = vmatpush1.msra.mxu0 0.0
  %3490 = vmatprep.subr.mxu0 0.0
  %3491 = vmatpush1.msra.mxu0 0.0
  %3492 = vmatprep.subr.mxu0 0.0
  %3493 = vmatpush1.msra.mxu0 0.0
  %3494 = vmatprep.subr.mxu0 0.0
  %3495 = vmatpush1.msra.mxu0 0.0
  %3496 = vmatprep.subr.mxu0 0.0
  %3497 = vmatpush1.msra.mxu0 0.0
  %3498 = vmatprep.subr.mxu0 0.0
  %3499 = vmatpush1.msra.mxu0 0.0
  %3500 = vmatprep.mubr.f32.mxu0 0.0
  %3501 = vmatmul.mubr.f32.gmra.mrb[0].mxu0 %v3431
  %v3502 = vpop.f32.mrb[0].mxu0
  %v3503 = vadd.f32 0.0, %v3502
  %v3504 = vpop.f32.mrb[0].mxu0
  %v3505 = vadd.f32 0.0, %v3504
  %3506 = vdwg.mxu0
  %3507 = vmatprep.subr.mxu0 %v2323
  %3508 = vmatpush1.msra.mxu0 %v2322
  %3509 = vmatprep.subr.mxu0 %v2327
  %3510 = vmatpush1.msra.mxu0 %v2326
  %3511 = vmatprep.subr.mxu0 %v2331
  %3512 = vmatpush1.msra.mxu0 %v2330
  %3513 = vmatprep.subr.mxu0 %v2335
  %3514 = vmatpush1.msra.mxu0 %v2334
  %3515 = vmatprep.subr.mxu0 %v2339
  %3516 = vmatpush1.msra.mxu0 %v2338
  %3517 = vmatprep.subr.mxu0 %v2343
  %3518 = vmatpush1.msra.mxu0 %v2342
  %3519 = vmatprep.subr.mxu0 %v2347
  %3520 = vmatpush1.msra.mxu0 %v2346
  %3521 = vmatprep.subr.mxu0 %v2351
  %3522 = vmatpush1.msra.mxu0 %v2350
  %3523 = vmatprep.subr.mxu0 %v2355
  %3524 = vmatpush1.msra.mxu0 %v2354
  %3525 = vmatprep.subr.mxu0 %v2359
  %3526 = vmatpush1.msra.mxu0 %v2358
  %3527 = vmatprep.subr.mxu0 %v2363
  %3528 = vmatpush1.msra.mxu0 %v2362
  %3529 = vmatprep.subr.mxu0 %v2367
  %3530 = vmatpush1.msra.mxu0 %v2366
  %3531 = vmatprep.subr.mxu0 %v2371
  %3532 = vmatpush1.msra.mxu0 %v2370
  %3533 = vmatprep.subr.mxu0 %v2375
  %3534 = vmatpush1.msra.mxu0 %v2374
  %3535 = vmatprep.subr.mxu0 %v2379
  %3536 = vmatpush1.msra.mxu0 %v2378
  %3537 = vmatprep.subr.mxu0 %v2383
  %3538 = vmatpush1.msra.mxu0 %v2382
  %3539 = vmatprep.subr.mxu0 0.0
  %3540 = vmatpush1.msra.mxu0 0.0
  %3541 = vmatprep.subr.mxu0 0.0
  %3542 = vmatpush1.msra.mxu0 0.0
  %3543 = vmatprep.subr.mxu0 0.0
  %3544 = vmatpush1.msra.mxu0 0.0
  %3545 = vmatprep.subr.mxu0 0.0
  %3546 = vmatpush1.msra.mxu0 0.0
  %3547 = vmatprep.subr.mxu0 0.0
  %3548 = vmatpush1.msra.mxu0 0.0
  %3549 = vmatprep.subr.mxu0 0.0
  %3550 = vmatpush1.msra.mxu0 0.0
  %3551 = vmatprep.subr.mxu0 0.0
  %3552 = vmatpush1.msra.mxu0 0.0
  %3553 = vmatprep.subr.mxu0 0.0
  %3554 = vmatpush1.msra.mxu0 0.0
  %3555 = vmatprep.subr.mxu0 0.0
  %3556 = vmatpush1.msra.mxu0 0.0
  %3557 = vmatprep.subr.mxu0 0.0
  %3558 = vmatpush1.msra.mxu0 0.0
  %3559 = vmatprep.subr.mxu0 0.0
  %3560 = vmatpush1.msra.mxu0 0.0
  %3561 = vmatprep.subr.mxu0 0.0
  %3562 = vmatpush1.msra.mxu0 0.0
  %3563 = vmatprep.subr.mxu0 0.0
  %3564 = vmatpush1.msra.mxu0 0.0
  %3565 = vmatprep.subr.mxu0 0.0
  %3566 = vmatpush1.msra.mxu0 0.0
  %3567 = vmatprep.subr.mxu0 0.0
  %3568 = vmatpush1.msra.mxu0 0.0
  %3569 = vmatprep.subr.mxu0 0.0
  %3570 = vmatpush1.msra.mxu0 0.0
  %3571 = vmatprep.mubr.f32.mxu0 0.0
  %3572 = vmatmul.mubr.f32.gmra.mrb[0].mxu0 %v3431
  %v3573 = vpop.f32.mrb[0].mxu0
  %v3574 = vadd.f32 0.0, %v3573
  %v3575 = vpop.f32.mrb[0].mxu0
  %v3576 = vadd.f32 0.0, %v3575
  %3577 = vdwg.mxu0
  %v3578 = vadd.f32 %v3432, %v3503
  %v3579 = vadd.f32 %v3433, %v3505
  %v3580 = vadd.f32 %v3434, %v3574
  %v3581 = vadd.f32 %v3435, %v3576
  %v3582 = vxor.u32 %v3578, 2147483648
  %v3583 = vmul.f32 %v3582, 1.442695
  %v3584 = vpow.pop %v3583
  %v3585 = vadd.f32 %v3584, 1.0
  %v3586 = vrcp.pop %v3585
  %v3587 = vmul.f32 1.0, %v3586
  %v3588 = vxor.u32 %v3579, 2147483648
  %v3589 = vmul.f32 %v3588, 1.442695
  %v3590 = vpow.pop %v3589
  %v3591 = vadd.f32 %v3590, 1.0
  %v3592 = vrcp.pop %v3591
  %v3593 = vmul.f32 1.0, %v3592
  %v3594 = vtanh.pop %v3580
  %v3595 = vxor.u32 %v3581, 2147483648
  %v3596 = vmul.f32 %v3595, 1.442695
  %v3597 = vpow.pop %v3596
  %v3598 = vadd.f32 %v3597, 1.0
  %v3599 = vrcp.pop %v3598
  %v3600 = vmul.f32 1.0, %v3599
  %v3601 = vmul.f32 %v3593, %v3429
  %v3602 = vmul.f32 %v3587, %v3594
  %v3603 = vadd.f32 %v3601, %v3602
  %v3604 = vtanh.pop %v3603
  %v3605 = vmul.f32 %v3600, %v3604
  %v3606 = vld [vmem:[%s1791] sm:$0xff]
  %v3607 = vld [vmem:[%s1791 + $0x8] sm:$0xff]
  %v3608 = vld [vmem:[%s1791 + $0x10] sm:$0xff]
  %v3609 = vld [vmem:[%s1791 + $0x18] sm:$0xff]
  %3610 = vmatprep.subr.mxu0 %v2321
  %3611 = vmatpush1.msra.mxu0 %v2320
  %3612 = vmatprep.subr.mxu0 %v2325
  %3613 = vmatpush1.msra.mxu0 %v2324
  %3614 = vmatprep.subr.mxu0 %v2329
  %3615 = vmatpush1.msra.mxu0 %v2328
  %3616 = vmatprep.subr.mxu0 %v2333
  %3617 = vmatpush1.msra.mxu0 %v2332
  %3618 = vmatprep.subr.mxu0 %v2337
  %3619 = vmatpush1.msra.mxu0 %v2336
  %3620 = vmatprep.subr.mxu0 %v2341
  %3621 = vmatpush1.msra.mxu0 %v2340
  %3622 = vmatprep.subr.mxu0 %v2345
  %3623 = vmatpush1.msra.mxu0 %v2344
  %3624 = vmatprep.subr.mxu0 %v2349
  %3625 = vmatpush1.msra.mxu0 %v2348
  %3626 = vmatprep.subr.mxu0 %v2353
  %3627 = vmatpush1.msra.mxu0 %v2352
  %3628 = vmatprep.subr.mxu0 %v2357
  %3629 = vmatpush1.msra.mxu0 %v2356
  %3630 = vmatprep.subr.mxu0 %v2361
  %3631 = vmatpush1.msra.mxu0 %v2360
  %3632 = vmatprep.subr.mxu0 %v2365
  %3633 = vmatpush1.msra.mxu0 %v2364
  %3634 = vmatprep.subr.mxu0 %v2369
  %3635 = vmatpush1.msra.mxu0 %v2368
  %3636 = vmatprep.subr.mxu0 %v2373
  %3637 = vmatpush1.msra.mxu0 %v2372
  %3638 = vmatprep.subr.mxu0 %v2377
  %3639 = vmatpush1.msra.mxu0 %v2376
  %3640 = vmatprep.subr.mxu0 %v2381
  %3641 = vmatpush1.msra.mxu0 %v2380
  %3642 = vmatprep.subr.mxu0 0.0
  %3643 = vmatpush1.msra.mxu0 0.0
  %3644 = vmatprep.subr.mxu0 0.0
  %3645 = vmatpush1.msra.mxu0 0.0
  %3646 = vmatprep.subr.mxu0 0.0
  %3647 = vmatpush1.msra.mxu0 0.0
  %3648 = vmatprep.subr.mxu0 0.0
  %3649 = vmatpush1.msra.mxu0 0.0
  %3650 = vmatprep.subr.mxu0 0.0
  %3651 = vmatpush1.msra.mxu0 0.0
  %3652 = vmatprep.subr.mxu0 0.0
  %3653 = vmatpush1.msra.mxu0 0.0
  %3654 = vmatprep.subr.mxu0 0.0
  %3655 = vmatpush1.msra.mxu0 0.0
  %3656 = vmatprep.subr.mxu0 0.0
  %3657 = vmatpush1.msra.mxu0 0.0
  %3658 = vmatprep.subr.mxu0 0.0
  %3659 = vmatpush1.msra.mxu0 0.0
  %3660 = vmatprep.subr.mxu0 0.0
  %3661 = vmatpush1.msra.mxu0 0.0
  %3662 = vmatprep.subr.mxu0 0.0
  %3663 = vmatpush1.msra.mxu0 0.0
  %3664 = vmatprep.subr.mxu0 0.0
  %3665 = vmatpush1.msra.mxu0 0.0
  %3666 = vmatprep.subr.mxu0 0.0
  %3667 = vmatpush1.msra.mxu0 0.0
  %3668 = vmatprep.subr.mxu0 0.0
  %3669 = vmatpush1.msra.mxu0 0.0
  %3670 = vmatprep.subr.mxu0 0.0
  %3671 = vmatpush1.msra.mxu0 0.0
  %3672 = vmatprep.subr.mxu0 0.0
  %3673 = vmatpush1.msra.mxu0 0.0
  %3674 = vmatprep.mubr.f32.mxu0 0.0
  %3675 = vmatmul.mubr.f32.gmra.mrb[0].mxu0 %v3605
  %v3676 = vpop.f32.mrb[0].mxu0
  %v3677 = vadd.f32 0.0, %v3676
  %v3678 = vpop.f32.mrb[0].mxu0
  %v3679 = vadd.f32 0.0, %v3678
  %3680 = vdwg.mxu0
  %3681 = vmatprep.subr.mxu0 %v2323
  %3682 = vmatpush1.msra.mxu0 %v2322
  %3683 = vmatprep.subr.mxu0 %v2327
  %3684 = vmatpush1.msra.mxu0 %v2326
  %3685 = vmatprep.subr.mxu0 %v2331
  %3686 = vmatpush1.msra.mxu0 %v2330
  %3687 = vmatprep.subr.mxu0 %v2335
  %3688 = vmatpush1.msra.mxu0 %v2334
  %3689 = vmatprep.subr.mxu0 %v2339
  %3690 = vmatpush1.msra.mxu0 %v2338
  %3691 = vmatprep.subr.mxu0 %v2343
  %3692 = vmatpush1.msra.mxu0 %v2342
  %3693 = vmatprep.subr.mxu0 %v2347
  %3694 = vmatpush1.msra.mxu0 %v2346
  %3695 = vmatprep.subr.mxu0 %v2351
  %3696 = vmatpush1.msra.mxu0 %v2350
  %3697 = vmatprep.subr.mxu0 %v2355
  %3698 = vmatpush1.msra.mxu0 %v2354
  %3699 = vmatprep.subr.mxu0 %v2359
  %3700 = vmatpush1.msra.mxu0 %v2358
  %3701 = vmatprep.subr.mxu0 %v2363
  %3702 = vmatpush1.msra.mxu0 %v2362
  %3703 = vmatprep.subr.mxu0 %v2367
  %3704 = vmatpush1.msra.mxu0 %v2366
  %3705 = vmatprep.subr.mxu0 %v2371
  %3706 = vmatpush1.msra.mxu0 %v2370
  %3707 = vmatprep.subr.mxu0 %v2375
  %3708 = vmatpush1.msra.mxu0 %v2374
  %3709 = vmatprep.subr.mxu0 %v2379
  %3710 = vmatpush1.msra.mxu0 %v2378
  %3711 = vmatprep.subr.mxu0 %v2383
  %3712 = vmatpush1.msra.mxu0 %v2382
  %3713 = vmatprep.subr.mxu0 0.0
  %3714 = vmatpush1.msra.mxu0 0.0
  %3715 = vmatprep.subr.mxu0 0.0
  %3716 = vmatpush1.msra.mxu0 0.0
  %3717 = vmatprep.subr.mxu0 0.0
  %3718 = vmatpush1.msra.mxu0 0.0
  %3719 = vmatprep.subr.mxu0 0.0
  %3720 = vmatpush1.msra.mxu0 0.0
  %3721 = vmatprep.subr.mxu0 0.0
  %3722 = vmatpush1.msra.mxu0 0.0
  %3723 = vmatprep.subr.mxu0 0.0
  %3724 = vmatpush1.msra.mxu0 0.0
  %3725 = vmatprep.subr.mxu0 0.0
  %3726 = vmatpush1.msra.mxu0 0.0
  %3727 = vmatprep.subr.mxu0 0.0
  %3728 = vmatpush1.msra.mxu0 0.0
  %3729 = vmatprep.subr.mxu0 0.0
  %3730 = vmatpush1.msra.mxu0 0.0
  %3731 = vmatprep.subr.mxu0 0.0
  %3732 = vmatpush1.msra.mxu0 0.0
  %3733 = vmatprep.subr.mxu0 0.0
  %3734 = vmatpush1.msra.mxu0 0.0
  %3735 = vmatprep.subr.mxu0 0.0
  %3736 = vmatpush1.msra.mxu0 0.0
  %3737 = vmatprep.subr.mxu0 0.0
  %3738 = vmatpush1.msra.mxu0 0.0
  %3739 = vmatprep.subr.mxu0 0.0
  %3740 = vmatpush1.msra.mxu0 0.0
  %3741 = vmatprep.subr.mxu0 0.0
  %3742 = vmatpush1.msra.mxu0 0.0
  %3743 = vmatprep.subr.mxu0 0.0
  %3744 = vmatpush1.msra.mxu0 0.0
  %3745 = vmatprep.mubr.f32.mxu0 0.0
  %3746 = vmatmul.mubr.f32.gmra.mrb[0].mxu0 %v3605
  %v3747 = vpop.f32.mrb[0].mxu0
  %v3748 = vadd.f32 0.0, %v3747
  %v3749 = vpop.f32.mrb[0].mxu0
  %v3750 = vadd.f32 0.0, %v3749
  %3751 = vdwg.mxu0
  %v3752 = vadd.f32 %v3606, %v3677
  %v3753 = vadd.f32 %v3607, %v3679
  %v3754 = vadd.f32 %v3608, %v3748
  %v3755 = vadd.f32 %v3609, %v3750
  %v3756 = vxor.u32 %v3752, 2147483648
  %v3757 = vmul.f32 %v3756, 1.442695
  %v3758 = vpow.pop %v3757
  %v3759 = vadd.f32 %v3758, 1.0
  %v3760 = vrcp.pop %v3759
  %v3761 = vmul.f32 1.0, %v3760
  %v3762 = vxor.u32 %v3753, 2147483648
  %v3763 = vmul.f32 %v3762, 1.442695
  %v3764 = vpow.pop %v3763
  %v3765 = vadd.f32 %v3764, 1.0
  %v3766 = vrcp.pop %v3765
  %v3767 = vmul.f32 1.0, %v3766
  %v3768 = vtanh.pop %v3754
  %v3769 = vxor.u32 %v3755, 2147483648
  %v3770 = vmul.f32 %v3769, 1.442695
  %v3771 = vpow.pop %v3770
  %v3772 = vadd.f32 %v3771, 1.0
  %v3773 = vrcp.pop %v3772
  %v3774 = vmul.f32 1.0, %v3773
  %v3775 = vmul.f32 %v3767, %v3603
  %v3776 = vmul.f32 %v3761, %v3768
  %v3777 = vadd.f32 %v3775, %v3776
  %v3778 = vtanh.pop %v3777
  %v3779 = vmul.f32 %v3774, %v3778
  %v3780 = vld [vmem:[%s9] sm:$0xff]
  %v3781 = vld [vmem:[%s9 + $0x8] sm:$0xff]
  %v3782 = vld [vmem:[%s9 + $0x10] sm:$0xff]
  %v3783 = vld [vmem:[%s9 + $0x18] sm:$0xff]
  %v3784 = vld [vmem:[%s9 + $0x20] sm:$0xff]
  %v3785 = vld [vmem:[%s9 + $0x28] sm:$0xff]
  %v3786 = vld [vmem:[%s9 + $0x30] sm:$0xff]
  %v3787 = vld [vmem:[%s9 + $0x38] sm:$0xff]
  %v3788 = vld [vmem:[%s9 + $0x40] sm:$0xff]
  %v3789 = vld [vmem:[%s9 + $0x48] sm:$0xff]
  %v3790 = vld [vmem:[%s9 + $0x50] sm:$0xff]
  %v3791 = vld [vmem:[%s9 + $0x58] sm:$0xff]
  %v3792 = vld [vmem:[%s9 + $0x60] sm:$0xff]
  %v3793 = vld [vmem:[%s9 + $0x68] sm:$0xff]
  %v3794 = vld [vmem:[%s9 + $0x70] sm:$0xff]
  %v3795 = vld [vmem:[%s9 + $0x78] sm:$0xff]
  %v3796 = vld [vmem:[%s10] sm:$0x1]
  %v3798 = vlaneseq
  %v3799 = vshrl.u32 %v3798, 7
  %v3800 = vsub.s32 0, %v3799
  %v3801 = vrot.slane %v3796, %v3800
  %3803 = vmatprep.subr.mxu0 0.0
  %3804 = vmatpush1.msra.mxu0 %v3780
  %3805 = vmatprep.subr.mxu0 0.0
  %3806 = vmatpush1.msra.mxu0 %v3781
  %3807 = vmatprep.subr.mxu0 0.0
  %3808 = vmatpush1.msra.mxu0 %v3782
  %3809 = vmatprep.subr.mxu0 0.0
  %3810 = vmatpush1.msra.mxu0 %v3783
  %3811 = vmatprep.subr.mxu0 0.0
  %3812 = vmatpush1.msra.mxu0 %v3784
  %3813 = vmatprep.subr.mxu0 0.0
  %3814 = vmatpush1.msra.mxu0 %v3785
  %3815 = vmatprep.subr.mxu0 0.0
  %3816 = vmatpush1.msra.mxu0 %v3786
  %3817 = vmatprep.subr.mxu0 0.0
  %3818 = vmatpush1.msra.mxu0 %v3787
  %3819 = vmatprep.subr.mxu0 0.0
  %3820 = vmatpush1.msra.mxu0 %v3788
  %3821 = vmatprep.subr.mxu0 0.0
  %3822 = vmatpush1.msra.mxu0 %v3789
  %3823 = vmatprep.subr.mxu0 0.0
  %3824 = vmatpush1.msra.mxu0 %v3790
  %3825 = vmatprep.subr.mxu0 0.0
  %3826 = vmatpush1.msra.mxu0 %v3791
  %3827 = vmatprep.subr.mxu0 0.0
  %3828 = vmatpush1.msra.mxu0 %v3792
  %3829 = vmatprep.subr.mxu0 0.0
  %3830 = vmatpush1.msra.mxu0 %v3793
  %3831 = vmatprep.subr.mxu0 0.0
  %3832 = vmatpush1.msra.mxu0 %v3794
  %3833 = vmatprep.subr.mxu0 0.0
  %3834 = vmatpush1.msra.mxu0 %v3795
  %3835 = vmatprep.subr.mxu0 0.0
  %3836 = vmatpush1.msra.mxu0 0.0
  %3837 = vmatprep.subr.mxu0 0.0
  %3838 = vmatpush1.msra.mxu0 0.0
  %3839 = vmatprep.subr.mxu0 0.0
  %3840 = vmatpush1.msra.mxu0 0.0
  %3841 = vmatprep.subr.mxu0 0.0
  %3842 = vmatpush1.msra.mxu0 0.0
  %3843 = vmatprep.subr.mxu0 0.0
  %3844 = vmatpush1.msra.mxu0 0.0
  %3845 = vmatprep.subr.mxu0 0.0
  %3846 = vmatpush1.msra.mxu0 0.0
  %3847 = vmatprep.subr.mxu0 0.0
  %3848 = vmatpush1.msra.mxu0 0.0
  %3849 = vmatprep.subr.mxu0 0.0
  %3850 = vmatpush1.msra.mxu0 0.0
  %3851 = vmatprep.subr.mxu0 0.0
  %3852 = vmatpush1.msra.mxu0 0.0
  %3853 = vmatprep.subr.mxu0 0.0
  %3854 = vmatpush1.msra.mxu0 0.0
  %3855 = vmatprep.subr.mxu0 0.0
  %3856 = vmatpush1.msra.mxu0 0.0
  %3857 = vmatprep.subr.mxu0 0.0
  %3858 = vmatpush1.msra.mxu0 0.0
  %3859 = vmatprep.subr.mxu0 0.0
  %3860 = vmatpush1.msra.mxu0 0.0
  %3861 = vmatprep.subr.mxu0 0.0
  %3862 = vmatpush1.msra.mxu0 0.0
  %3863 = vmatprep.subr.mxu0 0.0
  %3864 = vmatpush1.msra.mxu0 0.0
  %3865 = vmatprep.subr.mxu0 0.0
  %3866 = vmatpush1.msra.mxu0 0.0
  %3867 = vmatprep.mubr.f32.mxu0 0.0
  %3868 = vmatmul.mubr.f32.gmra.mrb[0].mxu0 %v3779
  %v3869 = vpop.f32.mrb[0].mxu0
  %v3870 = vadd.f32 %v3801, %v3869
  %v3871 = vpop.f32.mrb[0].mxu0
  %3872 = vdwg.mxu0
  %v3873 = vld [vmem:[%s11] sm:$0xff]
  %v3874 = vld [vmem:[%s11 + $0x8] sm:$0xff]
  %v3875 = vld [vmem:[%s11 + $0x10] sm:$0xff]
  %v3876 = vld [vmem:[%s11 + $0x18] sm:$0xff]
  %v3877 = vld [vmem:[%s11 + $0x20] sm:$0xff]
  %v3878 = vld [vmem:[%s11 + $0x28] sm:$0xff]
  %v3879 = vld [vmem:[%s11 + $0x30] sm:$0xff]
  %v3880 = vld [vmem:[%s11 + $0x38] sm:$0xff]
  %v3881 = vld [vmem:[%s11 + $0x40] sm:$0xff]
  %v3882 = vld [vmem:[%s11 + $0x48] sm:$0xff]
  %v3883 = vld [vmem:[%s11 + $0x50] sm:$0xff]
  %v3884 = vld [vmem:[%s11 + $0x58] sm:$0xff]
  %v3885 = vld [vmem:[%s11 + $0x60] sm:$0xff]
  %v3886 = vld [vmem:[%s11 + $0x68] sm:$0xff]
  %v3887 = vld [vmem:[%s11 + $0x70] sm:$0xff]
  %v3888 = vld [vmem:[%s11 + $0x78] sm:$0xff]
  %v3889 = vld [vmem:[%s12] sm:$0x1]
  %v3891 = vlaneseq
  %v3892 = vshrl.u32 %v3891, 7
  %v3893 = vsub.s32 0, %v3892
  %v3894 = vrot.slane %v3889, %v3893
  %3896 = vmatprep.subr.mxu0 0.0
  %3897 = vmatpush1.msra.mxu0 %v3873
  %3898 = vmatprep.subr.mxu0 0.0
  %3899 = vmatpush1.msra.mxu0 %v3874
  %3900 = vmatprep.subr.mxu0 0.0
  %3901 = vmatpush1.msra.mxu0 %v3875
  %3902 = vmatprep.subr.mxu0 0.0
  %3903 = vmatpush1.msra.mxu0 %v3876
  %3904 = vmatprep.subr.mxu0 0.0
  %3905 = vmatpush1.msra.mxu0 %v3877
  %3906 = vmatprep.subr.mxu0 0.0
  %3907 = vmatpush1.msra.mxu0 %v3878
  %3908 = vmatprep.subr.mxu0 0.0
  %3909 = vmatpush1.msra.mxu0 %v3879
  %3910 = vmatprep.subr.mxu0 0.0
  %3911 = vmatpush1.msra.mxu0 %v3880
  %3912 = vmatprep.subr.mxu0 0.0
  %3913 = vmatpush1.msra.mxu0 %v3881
  %3914 = vmatprep.subr.mxu0 0.0
  %3915 = vmatpush1.msra.mxu0 %v3882
  %3916 = vmatprep.subr.mxu0 0.0
  %3917 = vmatpush1.msra.mxu0 %v3883
  %3918 = vmatprep.subr.mxu0 0.0
  %3919 = vmatpush1.msra.mxu0 %v3884
  %3920 = vmatprep.subr.mxu0 0.0
  %3921 = vmatpush1.msra.mxu0 %v3885
  %3922 = vmatprep.subr.mxu0 0.0
  %3923 = vmatpush1.msra.mxu0 %v3886
  %3924 = vmatprep.subr.mxu0 0.0
  %3925 = vmatpush1.msra.mxu0 %v3887
  %3926 = vmatprep.subr.mxu0 0.0
  %3927 = vmatpush1.msra.mxu0 %v3888
  %3928 = vmatprep.subr.mxu0 0.0
  %3929 = vmatpush1.msra.mxu0 0.0
  %3930 = vmatprep.subr.mxu0 0.0
  %3931 = vmatpush1.msra.mxu0 0.0
  %3932 = vmatprep.subr.mxu0 0.0
  %3933 = vmatpush1.msra.mxu0 0.0
  %3934 = vmatprep.subr.mxu0 0.0
  %3935 = vmatpush1.msra.mxu0 0.0
  %3936 = vmatprep.subr.mxu0 0.0
  %3937 = vmatpush1.msra.mxu0 0.0
  %3938 = vmatprep.subr.mxu0 0.0
  %3939 = vmatpush1.msra.mxu0 0.0
  %3940 = vmatprep.subr.mxu0 0.0
  %3941 = vmatpush1.msra.mxu0 0.0
  %3942 = vmatprep.subr.mxu0 0.0
  %3943 = vmatpush1.msra.mxu0 0.0
  %3944 = vmatprep.subr.mxu0 0.0
  %3945 = vmatpush1.msra.mxu0 0.0
  %3946 = vmatprep.subr.mxu0 0.0
  %3947 = vmatpush1.msra.mxu0 0.0
  %3948 = vmatprep.subr.mxu0 0.0
  %3949 = vmatpush1.msra.mxu0 0.0
  %3950 = vmatprep.subr.mxu0 0.0
  %3951 = vmatpush1.msra.mxu0 0.0
  %3952 = vmatprep.subr.mxu0 0.0
  %3953 = vmatpush1.msra.mxu0 0.0
  %3954 = vmatprep.subr.mxu0 0.0
  %3955 = vmatpush1.msra.mxu0 0.0
  %3956 = vmatprep.subr.mxu0 0.0
  %3957 = vmatpush1.msra.mxu0 0.0
  %3958 = vmatprep.subr.mxu0 0.0
  %3959 = vmatpush1.msra.mxu0 0.0
  %3960 = vmatprep.mubr.f32.mxu0 0.0
  %3961 = vmatmul.mubr.f32.gmra.mrb[0].mxu0 %v3870
  %v3962 = vpop.f32.mrb[0].mxu0
  %v3963 = vadd.f32 %v3894, %v3962
  %v3964 = vpop.f32.mrb[0].mxu0
  %3965 = vdwg.mxu0
  %vm3966 = vcmask 15360
  %v3967 = vsel %vm3966, %v3963, -inf
  %3968 = vmax.xlane.f32.xlu0 %v3967
  %v3969 = vpop.xlane.xlu0 %3968
  %v3970 = vsub.f32 %v3963, %v3969
  %v3971 = vmul.f32 %v3970, 1.442695
  %v3972 = vpow.pop %v3971
  %v3973 = vsel %vm3966, %v3972, 0.0
  %3974 = vadd.xlane.f32.xlu0 %v3973
  %v3975 = vpop.xlane.xlu0 %3974
  %v3976 = vrcp.pop %v3975
  %v3977 = vmul.f32 %v3972, %v3976
  %3978 = vst.msk [vmem:[%s13] sm:$0xff] %vm3966, %v3977
  %3979 = vst [vmem:[%s14] sm:$0xff] %v1965
  %s3980 = scalar_lea.vmem %s14, 8
  %3981 = vst [vmem:[%s3980] sm:$0xff] %v3779
  %3982 = vst [vmem:[%s15] sm:$0xff] %v1963
  %s3983 = scalar_lea.vmem %s15, 8
  %3984 = vst [vmem:[%s3983] sm:$0xff] %v3777
  // Predicated region
  $region54: #{my_lstm_forward.1} parent=0 // pred_check
    _
  $region55: #{my_lstm_forward.1} parent=0 // pred_check_branch
    %3986 = sbr.rel (0) target = $region57
  $region56: #{my_lstm_forward.1} parent=0 // pred_region
    _
  $region57: #{my_lstm_forward.1} parent=0 // pred_fallthru
    _
  // Predicated region
  $region58: #{my_lstm_forward.1} parent=0 // pred_check
    _
  $region59: #{my_lstm_forward.1} parent=0 // pred_check_branch
    %3988 = sbr.rel (0) target = $region61
  $region60: #{my_lstm_forward.1} parent=0 // pred_region
    _
  $region61: #{my_lstm_forward.1} parent=0 // pred_fallthru
    _
  // Predicated region
  $region62: #{my_lstm_forward.1} parent=0 // pred_check
    _
  $region63: #{my_lstm_forward.1} parent=0 // pred_check_branch
    %3990 = sbr.rel (0) target = $region65
  $region64: #{my_lstm_forward.1} parent=0 // pred_region
    _
  $region65: #{my_lstm_forward.1} parent=0 // pred_fallthru
    _
  // Predicated region
  $region66: #{my_lstm_forward.1} parent=0 // pred_check
    _
  $region67: #{my_lstm_forward.1} parent=0 // pred_check_branch
    %3992 = sbr.rel (0) target = $region69
  $region68: #{my_lstm_forward.1} parent=0 // pred_region
    _
  $region69: #{my_lstm_forward.1} parent=0 // pred_fallthru
    _
  // Predicated region
  $region70: #{my_lstm_forward.1} parent=0 // pred_check
    _
  $region71: #{my_lstm_forward.1} parent=0 // pred_check_branch
    %3994 = sbr.rel (0) target = $region73
  $region72: #{my_lstm_forward.1} parent=0 // pred_region
    _
  $region73: #{my_lstm_forward.1} parent=0 // pred_fallthru
    _
  // Predicated region
  $region74: #{my_lstm_forward.1} parent=0 // pred_check
    _
  $region75: #{my_lstm_forward.1} parent=0 // pred_check_branch
    %3996 = sbr.rel (0) target = $region77
  $region76: #{my_lstm_forward.1} parent=0 // pred_region
    _
  $region77: #{my_lstm_forward.1} parent=0 // pred_fallthru
    _

</llo_original>
